<compile_context>
chip_gen: v5e
topology: v5e:2x2
jax: 0.10.0
libtpu: 0.0.40
codegen_flags: <defaults>
</compile_context>

<pallas_src>
import jax
import jax.numpy as jnp
from jax import lax
from jax.experimental import pallas as pl
from jax.experimental.pallas import tpu as pltpu

INF = 1e8

# ---- FCOSTarget __init__ config (synthetic, deterministic) ----
STRIDES = (8, 16)
REGRESS_RANGES = ((-1.0, 64.0), (64.0, INF))
CLS_OUT_CHANNELS = 4
BACKGROUND_LABEL = 4
CENTER_SAMPLE_RADIUS = 1.5
NORM_ON_BBOX = True
CENTER_SAMPLING = True
# use_iou_replace_ctrness = False, task_batch_list = None


# ----------------------------------------------------------------------------
# Pallas kernel: FCOSTarget._get_target_single for ALL images, one P-tile/step.
# ----------------------------------------------------------------------------
def _fcos_assign_kernel(ptc_ref, gts_ref, out_ref):
    """ptc_ref (8, TP): rows [x, y, rr_lo, rr_hi, stride*radius, 1/stride, 0, 0]
    gts_ref (B, G, 8): cols [x1, y1, x2, y2, label, 0, 0, 0]
    out_ref (B, 6, TP): rows [l, t, r, b, label, label_weight]."""
    B, G, _ = gts_ref.shape
    TP = ptc_ref.shape[1]

    xs = ptc_ref[0:1, :].reshape(1, 1, TP)       # point x
    ys = ptc_ref[1:2, :].reshape(1, 1, TP)       # point y
    rr_lo = ptc_ref[2:3, :].reshape(1, 1, TP)    # regress range low
    rr_hi = ptc_ref[3:4, :].reshape(1, 1, TP)    # regress range high
    strad = ptc_ref[4:5, :].reshape(1, 1, TP)    # stride * center_sample_radius
    inv_s = ptc_ref[5:6, :].reshape(1, 1, TP)    # 1/stride (1.0 if no norm)

    gts = gts_ref[...]                            # (B, G, 8), tiny, resident

    def eval_gt(g):
        # per-GT scalars, broadcast against the point lanes
        x1 = gts[:, g:g + 1, 0:1]                 # (B, 1, 1)
        y1 = gts[:, g:g + 1, 1:2]
        x2 = gts[:, g:g + 1, 2:3]
        y2 = gts[:, g:g + 1, 3:4]
        lab = gts[:, g:g + 1, 4:5]                # float label (-1 = ignore)
        area = (x2 - x1) * (y2 - y1)              # (B, 1, 1)

        left = xs - x1                            # (B, 1, TP)
        top = ys - y1
        right = x2 - xs
        bottom = y2 - ys
        bt_min = jnp.minimum(jnp.minimum(left, right), jnp.minimum(top, bottom))
        max_rd = jnp.maximum(jnp.maximum(left, right), jnp.maximum(top, bottom))

        if CENTER_SAMPLING:
            cx = (x1 + x2) * 0.5
            cy = (y1 + y2) * 0.5
            xmin = cx - strad
            ymin = cy - strad
            xmax = cx + strad
            ymax = cy + strad
            cg_x1 = jnp.where(xmin > x1, xmin, x1)
            cg_y1 = jnp.where(ymin > y1, ymin, y1)
            cg_x2 = jnp.where(xmax > x2, x2, xmax)
            cg_y2 = jnp.where(ymax > y2, y2, ymax)
            inside_gt = jnp.minimum(jnp.minimum(xs - cg_x1, cg_x2 - xs),
                                    jnp.minimum(ys - cg_y1, cg_y2 - ys)) > 0.0
        else:
            inside_gt = bt_min > 0.0

        inside_rr = (max_rd >= rr_lo) & (max_rd <= rr_hi)
        m_area = jnp.where(inside_gt & inside_rr, area, INF)      # (B, 1, TP)
        # ignore boxes = GTs whose label < 0 (FCOSTarget._get_ignore_bboxes)
        ign = (bt_min > 0.0) & (lab < 0.0)                         # (B, 1, TP)
        return m_area, x1, y1, x2, y2, lab, ign

    # g = 0 initialises the running state; torch's areas.min(dim=1) keeps the FIRST
    # minimum index (including the all-INF case -> index 0), which the strict '<'
    # below reproduces exactly.
    min_area, sx1, sy1, sx2, sy2, slab, any_ign = eval_gt(0)
    any_pos = gts[:, 0:1, 4:5] != -1.0                             # (B, 1, 1)
    for g in range(1, G):                                          # streamed over G
        m_area, x1, y1, x2, y2, lab, ign = eval_gt(g)
        better = m_area < min_area                                 # first argmin wins
        min_area = jnp.where(better, m_area, min_area)
        sx1 = jnp.where(better, x1, sx1)
        sy1 = jnp.where(better, y1, sy1)
        sx2 = jnp.where(better, x2, sx2)
        sy2 = jnp.where(better, y2, sy2)
        slab = jnp.where(better, lab, slab)
        any_ign = any_ign | ign
        any_pos = any_pos | (lab != -1.0)

    bt_l = xs - sx1
    bt_t = ys - sy1
    bt_r = sx2 - xs
    bt_b = sy2 - ys

    lbl = jnp.where(min_area == INF, float(BACKGROUND_LABEL), slab)
    lw = jnp.where(any_ign, 0.0, 1.0)

    # "no positive gt" early-return branch of _get_target_single
    pos = any_pos                                                  # (B, 1, 1) bool
    lbl = jnp.where(pos, lbl, float(BACKGROUND_LABEL))
    lw = jnp.where(pos, lw, 0.0)
    bt_l = jnp.where(pos, bt_l, 0.0) * inv_s                       # NORM_ON_BBOX fused
    bt_t = jnp.where(pos, bt_t, 0.0) * inv_s
    bt_r = jnp.where(pos, bt_r, 0.0) * inv_s
    bt_b = jnp.where(pos, bt_b, 0.0) * inv_s

    # lane-dense per-row stores (no concatenate temp, no zero pad rows)
    out_ref[:, 0:1, :] = bt_l
    out_ref[:, 1:2, :] = bt_t
    out_ref[:, 2:3, :] = bt_r
    out_ref[:, 3:4, :] = bt_b
    out_ref[:, 4:5, :] = lbl
    out_ref[:, 5:6, :] = lw


def _round_up(x, m):
    return (x + m - 1) // m * m


def _vmem_capacity_bytes():
    """Generation-aware VMEM capacity (v5e/v6e: 128 MiB, v7x: 64 MiB per TC)."""
    try:
        cap = getattr(pltpu.get_tpu_info(), "vmem_capacity_bytes", None)
        if cap:
            return int(cap)
    except Exception:
        pass
    return 64 * 1024 * 1024   # conservative: smallest per-TC VMEM (v7x)


def _choose_tile_p(P, B, G, vmem_cap_bytes):
    """Pick TILE_P (multiple of 128), padded P, and a consistent VMEM limit.

    Per-lane f32 live estimate for one grid step of the streaming-over-G kernel:
      8 packed point-constant rows + ~28*B (B,1,TILE_P) running/temp values
      + double-buffered I/O blocks 2*(8 + 6*B) rows.
    """
    per_lane_bytes = (8 + 28 * B + 2 * (8 + 6 * B)) * 4
    fixed_bytes = 2 * B * G * 8 * 4 + (2 << 20)        # gt block (2x buffered) + slack
    budget = vmem_cap_bytes // 2 - fixed_bytes         # use at most half of VMEM for data
    tile = max(128, (budget // per_lane_bytes) // 128 * 128)
    tile = min(tile, 2048)                             # diminishing returns past ~2k lanes

    p128 = _round_up(P, 128)
    tile = min(tile, p128)                             # never exceed the (padded) data
    if p128 >= 256:                                    # keep >= 2 grid steps so the
        tile = min(tile, max(128, (p128 // 2) // 128 * 128))  # parallel axis can split
                                                       # across v7x's 2 TensorCores
    p_pad = _round_up(P, tile)                         # pad P to the chosen tile (no
                                                       # degenerate 128-tile fallback)
    used = per_lane_bytes * tile + fixed_bytes
    vmem_limit = min(max(used, 32 << 20), vmem_cap_bytes * 3 // 4)
    return tile, p_pad, int(vmem_limit)


def fcos_target_assign(points, regress_ranges_pts, stride_radius_pts,
                       inv_stride_pts, gt_bboxes, gt_labels):
    """points (P,2) f32; rr (P,2) f32; stride_radius (P,) f32; inv_stride (P,) f32;
    gt_bboxes (B,G,4) f32; gt_labels (B,G) i32  ->
    labels (B,P) i32, bbox_targets (B,4,P) f32 channel-major (already /stride if
    NORM_ON_BBOX), label_weights (B,P) f32."""
    B, G, _ = gt_bboxes.shape
    P = points.shape[0]
    TILE_P, P_pad, vmem_limit = _choose_tile_p(P, B, G, _vmem_capacity_bytes())

    pts = jnp.asarray(points, jnp.float32)
    rr = jnp.asarray(regress_ranges_pts, jnp.float32)
    ptc = jnp.stack([
        pts[:, 0], pts[:, 1], rr[:, 0], rr[:, 1],
        jnp.asarray(stride_radius_pts, jnp.float32),
        jnp.asarray(inv_stride_pts, jnp.float32),
        jnp.zeros((P,), jnp.float32), jnp.zeros((P,), jnp.float32),
    ], axis=0)                                                   # (8, P)
    ptc = jnp.pad(ptc, ((0, 0), (0, P_pad - P)))                 # lane-dense pad

    gtl_f = jnp.asarray(gt_labels, jnp.float32)[..., None]       # (B, G, 1)
    gts = jnp.concatenate(
        [jnp.asarray(gt_bboxes, jnp.float32), gtl_f,
         jnp.zeros((B, G, 3), jnp.float32)], axis=-1)            # (B, G, 8)

    out = pl.pallas_call(
        _fcos_assign_kernel,
        grid=(P_pad // TILE_P,),
        in_specs=[
            pl.BlockSpec((8, TILE_P), lambda p: (0, p)),
            pl.BlockSpec((B, G, 8), lambda p: (0, 0, 0)),
        ],
        out_specs=pl.BlockSpec((B, 6, TILE_P), lambda p: (0, 0, p)),
        out_shape=jax.ShapeDtypeStruct((B, 6, P_pad), jnp.float32),
        compiler_params=pltpu.CompilerParams(
            dimension_semantics=("parallel",),
            vmem_limit_bytes=vmem_limit),
    )(ptc, gts)

    labels = out[:, 4, :P].astype(jnp.int32)                     # (B, P)
    label_weights = out[:, 5, :P]                                # (B, P)
    bbox_targets_c = out[:, 0:4, :P]                             # (B, 4, P), no transpose
    return labels, bbox_targets_c, label_weights


# ----------------------------------------------------------------------------
# Plain-JAX glue mirroring the torch forward()
# ----------------------------------------------------------------------------
def get_points_jax(feat_sizes, strides, dtype=jnp.float32):
    mlvl = []
    for (h, w), s in zip(feat_sizes, strides):
        ys, xs = jnp.meshgrid(jnp.arange(h, dtype=dtype),
                              jnp.arange(w, dtype=dtype), indexing="ij")
        pts = jnp.stack([xs.reshape(-1) * s, ys.reshape(-1) * s], axis=-1) + s // 2
        mlvl.append(pts)
    return mlvl


def distance2bbox_jax(points, distance):
    x1 = points[..., 0] - distance[..., 0]
    y1 = points[..., 1] - distance[..., 1]
    x2 = points[..., 0] + distance[..., 2]
    y2 = points[..., 1] + distance[..., 3]
    return jnp.stack([x1, y1, x2, y2], axis=-1)


def _centerness_from_targets(pos_bbox_targets):
    lr = pos_bbox_targets[:, jnp.array([0, 2])]
    tb = pos_bbox_targets[:, jnp.array([1, 3])]
    c = (lr.min(axis=-1) / lr.max(axis=-1)) * (tb.min(axis=-1) / tb.max(axis=-1))
    return jnp.sqrt(c)


def fcos_target_forward(label, pred):
    cls_scores, bbox_preds, centernesses = pred
    C = CLS_OUT_CHANNELS
    flatten_cls_scores = jnp.concatenate(
        [jnp.transpose(s, (0, 2, 3, 1)).reshape(-1, C) for s in cls_scores], axis=0)
    flatten_bbox_preds = jnp.concatenate(
        [jnp.transpose(b, (0, 2, 3, 1)).reshape(-1, 4) for b in bbox_preds], axis=0)
    flatten_centerness = jnp.concatenate(
        [jnp.transpose(c, (0, 2, 3, 1)).reshape(-1) for c in centernesses], axis=0)

    gt_bboxes = label["gt_bboxes"]    # (B, G, 4)
    gt_classes = label["gt_classes"]  # (B, G), -1 means ignore
    B = gt_bboxes.shape[0]

    feat_sizes = [tuple(s.shape[-2:]) for s in cls_scores]
    mlvl_points = get_points_jax(feat_sizes, STRIDES)
    num_points = [int(p.shape[0]) for p in mlvl_points]
    concat_points = jnp.concatenate(mlvl_points, axis=0)
    concat_rr = jnp.concatenate(
        [jnp.broadcast_to(jnp.asarray(REGRESS_RANGES[i], jnp.float32),
                          (num_points[i], 2)) for i in range(len(mlvl_points))], axis=0)
    stride_radius = jnp.concatenate(
        [jnp.full((num_points[i],), STRIDES[i] * CENTER_SAMPLE_RADIUS, jnp.float32)
         for i in range(len(mlvl_points))])
    inv_stride = jnp.concatenate(
        [jnp.full((num_points[i],),
                  (1.0 / STRIDES[i]) if NORM_ON_BBOX else 1.0, jnp.float32)
         for i in range(len(mlvl_points))])

    # hot path: all-image target assignment in one Pallas kernel
    labels_bp, bbox_b4p, weights_bp = fcos_target_assign(
        concat_points, concat_rr, stride_radius, inv_stride, gt_bboxes, gt_classes)

    # level-major, image-major flat ordering (matches torch split/cat); bbox targets
    # stay channel-major (B,4,P) and are gathered directly at the positive indices.
    starts = [0]
    for n in num_points:
        starts.append(starts[-1] + n)
    lvl_labels, lvl_weights, flat_b_parts, flat_p_parts = [], [], [], []
    for i in range(len(num_points)):
        s, e = starts[i], starts[i + 1]
        lvl_labels.append(labels_bp[:, s:e].reshape(-1))
        lvl_weights.append(weights_bp[:, s:e].reshape(-1))
        flat_b_parts.append(jnp.repeat(jnp.arange(B, dtype=jnp.int32), e - s))
        flat_p_parts.append(jnp.tile(jnp.arange(s, e, dtype=jnp.int32), B))
    flatten_labels = jnp.concatenate(lvl_labels)
    flatten_label_weights = jnp.concatenate(lvl_weights)
    flat_b = jnp.concatenate(flat_b_parts)     # image index of each flat slot
    flat_p = jnp.concatenate(flat_p_parts)     # concat-point index of each flat slot

    pos_mask = ((flatten_labels >= 0)
                & (flatten_labels != BACKGROUND_LABEL)
                & (flatten_label_weights > 0))
    # TODO(synk): dynamic-shape nonzero/gather kept in eager JAX — the torch
    # reference returns data-dependent shapes (num_pos), so one host sync is
    # unavoidable without changing output semantics.
    pos_inds = jnp.nonzero(pos_mask)[0]
    num_pos = int(pos_inds.shape[0])
    cls_avg_factor = max(num_pos, 1.0)
    if num_pos == 0:
        pos_inds = jnp.zeros((1,), dtype=jnp.int32)
    pos_b = flat_b[pos_inds]
    pos_p = flat_p[pos_inds]
    pos_bbox_targets = bbox_b4p[pos_b, :, pos_p]                 # (num_pos, 4)
    pos_points = concat_points[pos_p]                            # (num_pos, 2)
    pos_decoded_targets = distance2bbox_jax(pos_points, pos_bbox_targets)
    points_per_strides = [h * w for (h, w) in feat_sizes]
    valid_classes_list = None  # task_batch_list is None

    pos_bbox_preds = flatten_bbox_preds[pos_inds]
    eps = 1e-5
    pos_decoded_bbox_preds = distance2bbox_jax(pos_points,
                                               jax.nn.relu(pos_bbox_preds) + eps)
    pos_centerness = flatten_centerness[pos_inds]
    if num_pos == 0:
        pos_centerness_targets = jnp.array([0.0], jnp.float32)
        centerness_weight = jnp.array([0.0], jnp.float32)
        bbox_weight = jnp.array([0.0], jnp.float32)
        bbox_avg_factor = None
    else:
        centerness_weight = None
        pos_centerness_targets = _centerness_from_targets(pos_bbox_targets)
        bbox_weight = pos_centerness_targets
        bbox_avg_factor = pos_centerness_targets.sum()

    cls_target = {"pred": flatten_cls_scores, "target": flatten_labels,
                  "weight": flatten_label_weights, "avg_factor": cls_avg_factor,
                  "points_per_strides": points_per_strides,
                  "valid_classes_list": valid_classes_list}
    giou_target = {"pred": pos_decoded_bbox_preds, "target": pos_decoded_targets,
                   "weight": bbox_weight, "avg_factor": bbox_avg_factor}
    centerness_target = {"pred": pos_centerness, "target": pos_centerness_targets,
                         "weight": centerness_weight}
    return cls_target, giou_target, centerness_target


if __name__ == "__main__":
    B, C, G = 2, CLS_OUT_CHANNELS, 8
    key = jax.random.PRNGKey(0)
    k = jax.random.split(key, 10)

    # GT boxes inside a 128x128 image; one ignore (-1 label) box per image
    xy = jax.random.uniform(k[0], (B, G, 2), minval=0.0, maxval=80.0)
    wh = jax.random.uniform(k[1], (B, G, 2), minval=8.0, maxval=48.0)
    gt_bboxes = jnp.concatenate([xy, xy + wh], axis=-1)
    gt_classes = jax.random.randint(k[2], (B, G), 0, CLS_OUT_CHANNELS)
    gt_classes = gt_classes.at[:, -1].set(-1)

    # Predictions (NCHW): two FPN levels, strides 8 and 16
    cls_scores = [jax.random.normal(k[3], (B, C, 16, 16), jnp.float32),
                  jax.random.normal(k[4], (B, C, 8, 8), jnp.float32)]
    bbox_preds = [jax.random.normal(k[5], (B, 4, 16, 16), jnp.float32),
                  jax.random.normal(k[6], (B, 4, 8, 8), jnp.float32)]
    centernesses = [jax.random.normal(k[7], (B, 1, 16, 16), jnp.float32),
                    jax.random.normal(k[8], (B, 1, 8, 8), jnp.float32)]

    label = {"gt_bboxes": gt_bboxes, "gt_classes": gt_classes}
    cls_t, giou_t, ctr_t = fcos_target_forward(
        label, (cls_scores, bbox_preds, centernesses))

    jax.block_until_ready(cls_t["target"])
    jax.block_until_ready(cls_t["weight"])
    jax.block_until_ready(giou_t["pred"])
    jax.block_until_ready(giou_t["target"])
    jax.block_until_ready(ctr_t["target"])
    print("KERNEL_OK")
</pallas_src>

<mosaic_0001>
module attributes {stable_mosaic.version = 11 : i64} {
  func.func @_fcos_assign_kernel(%arg0: i32, %arg1: memref<8x128xf32, #tpu.memory_space<vmem>>, %arg2: memref<2x8x8xf32, #tpu.memory_space<vmem>>, %arg3: memref<2x6x128xf32, #tpu.memory_space<vmem>>) attributes {dimension_semantics = [#tpu.dimension_semantics<parallel>], iteration_bounds = array<i64: 3>, scalar_prefetch = 0 : i64, scratch_operands = 0 : i64, tpu.core_type = #tpu.core_type<tc>, window_params = [{transform_indices = @transform_0, window_bounds = array<i64: 8, 128>}, {pipeline_mode = #tpu.pipeline_mode<synchronous>, transform_indices = @transform_1, window_bounds = array<i64: 2, 8, 8>}, {transform_indices = @transform_2, window_bounds = array<i64: 2, 6, 128>}]} {
    %c0 = arith.constant 0 : index
    %c0_0 = arith.constant 0 : index
    %0 = vector.load %arg1[%c0, %c0_0] : memref<8x128xf32, #tpu.memory_space<vmem>>, vector<1x128xf32>
    %1 = vector.shape_cast %0 : vector<1x128xf32> to vector<1x1x128xf32>
    %c1 = arith.constant 1 : index
    %c0_1 = arith.constant 0 : index
    %2 = vector.load %arg1[%c1, %c0_1] : memref<8x128xf32, #tpu.memory_space<vmem>>, vector<1x128xf32>
    %3 = vector.shape_cast %2 : vector<1x128xf32> to vector<1x1x128xf32>
    %c2 = arith.constant 2 : index
    %c0_2 = arith.constant 0 : index
    %4 = vector.load %arg1[%c2, %c0_2] : memref<8x128xf32, #tpu.memory_space<vmem>>, vector<1x128xf32>
    %5 = vector.shape_cast %4 : vector<1x128xf32> to vector<1x1x128xf32>
    %c3 = arith.constant 3 : index
    %c0_3 = arith.constant 0 : index
    %6 = vector.load %arg1[%c3, %c0_3] : memref<8x128xf32, #tpu.memory_space<vmem>>, vector<1x128xf32>
    %7 = vector.shape_cast %6 : vector<1x128xf32> to vector<1x1x128xf32>
    %c4 = arith.constant 4 : index
    %c0_4 = arith.constant 0 : index
    %8 = vector.load %arg1[%c4, %c0_4] : memref<8x128xf32, #tpu.memory_space<vmem>>, vector<1x128xf32>
    %9 = vector.shape_cast %8 : vector<1x128xf32> to vector<1x1x128xf32>
    %c5 = arith.constant 5 : index
    %c0_5 = arith.constant 0 : index
    %10 = vector.load %arg1[%c5, %c0_5] : memref<8x128xf32, #tpu.memory_space<vmem>>, vector<1x128xf32>
    %11 = vector.shape_cast %10 : vector<1x128xf32> to vector<1x1x128xf32>
    %c0_6 = arith.constant 0 : index
    %c0_7 = arith.constant 0 : index
    %c0_8 = arith.constant 0 : index
    %12 = vector.load %arg2[%c0_6, %c0_7, %c0_8] : memref<2x8x8xf32, #tpu.memory_space<vmem>>, vector<2x8x8xf32>
    %13 = vector.extract_strided_slice %12 {offsets = [0, 0, 0], sizes = [2, 1, 1], strides = [1, 1, 1]} : vector<2x8x8xf32> to vector<2x1x1xf32>
    %14 = vector.extract_strided_slice %12 {offsets = [0, 0, 1], sizes = [2, 1, 1], strides = [1, 1, 1]} : vector<2x8x8xf32> to vector<2x1x1xf32>
    %15 = vector.extract_strided_slice %12 {offsets = [0, 0, 2], sizes = [2, 1, 1], strides = [1, 1, 1]} : vector<2x8x8xf32> to vector<2x1x1xf32>
    %16 = vector.extract_strided_slice %12 {offsets = [0, 0, 3], sizes = [2, 1, 1], strides = [1, 1, 1]} : vector<2x8x8xf32> to vector<2x1x1xf32>
    %17 = vector.extract_strided_slice %12 {offsets = [0, 0, 4], sizes = [2, 1, 1], strides = [1, 1, 1]} : vector<2x8x8xf32> to vector<2x1x1xf32>
    %18 = arith.subf %15, %13 : vector<2x1x1xf32>
    %19 = arith.subf %16, %14 : vector<2x1x1xf32>
    %20 = arith.mulf %18, %19 : vector<2x1x1xf32>
    %21 = vector.broadcast %1 : vector<1x1x128xf32> to vector<2x1x128xf32>
    %22 = vector.broadcast %13 : vector<2x1x1xf32> to vector<2x1x128xf32>
    %23 = arith.subf %21, %22 : vector<2x1x128xf32>
    %24 = vector.broadcast %3 : vector<1x1x128xf32> to vector<2x1x128xf32>
    %25 = vector.broadcast %14 : vector<2x1x1xf32> to vector<2x1x128xf32>
    %26 = arith.subf %24, %25 : vector<2x1x128xf32>
    %27 = vector.broadcast %15 : vector<2x1x1xf32> to vector<2x1x128xf32>
    %28 = vector.broadcast %1 : vector<1x1x128xf32> to vector<2x1x128xf32>
    %29 = arith.subf %27, %28 : vector<2x1x128xf32>
    %30 = vector.broadcast %16 : vector<2x1x1xf32> to vector<2x1x128xf32>
    %31 = vector.broadcast %3 : vector<1x1x128xf32> to vector<2x1x128xf32>
    %32 = arith.subf %30, %31 : vector<2x1x128xf32>
    %33 = arith.minimumf %23, %29 : vector<2x1x128xf32>
    %34 = arith.minimumf %26, %32 : vector<2x1x128xf32>
    %35 = arith.minimumf %33, %34 : vector<2x1x128xf32>
    %36 = arith.maximumf %23, %29 : vector<2x1x128xf32>
    %37 = arith.maximumf %26, %32 : vector<2x1x128xf32>
    %38 = arith.maximumf %36, %37 : vector<2x1x128xf32>
    %39 = arith.addf %13, %15 : vector<2x1x1xf32>
    %cst = arith.constant 5.000000e-01 : f32
    %40 = vector.broadcast %cst : f32 to vector<2x1x1xf32>
    %41 = arith.mulf %39, %40 : vector<2x1x1xf32>
    %42 = arith.addf %14, %16 : vector<2x1x1xf32>
    %cst_9 = arith.constant 5.000000e-01 : f32
    %43 = vector.broadcast %cst_9 : f32 to vector<2x1x1xf32>
    %44 = arith.mulf %42, %43 : vector<2x1x1xf32>
    %45 = vector.broadcast %41 : vector<2x1x1xf32> to vector<2x1x128xf32>
    %46 = vector.broadcast %9 : vector<1x1x128xf32> to vector<2x1x128xf32>
    %47 = arith.subf %45, %46 : vector<2x1x128xf32>
    %48 = vector.broadcast %44 : vector<2x1x1xf32> to vector<2x1x128xf32>
    %49 = vector.broadcast %9 : vector<1x1x128xf32> to vector<2x1x128xf32>
    %50 = arith.subf %48, %49 : vector<2x1x128xf32>
    %51 = vector.broadcast %41 : vector<2x1x1xf32> to vector<2x1x128xf32>
    %52 = vector.broadcast %9 : vector<1x1x128xf32> to vector<2x1x128xf32>
    %53 = arith.addf %51, %52 : vector<2x1x128xf32>
    %54 = vector.broadcast %44 : vector<2x1x1xf32> to vector<2x1x128xf32>
    %55 = vector.broadcast %9 : vector<1x1x128xf32> to vector<2x1x128xf32>
    %56 = arith.addf %54, %55 : vector<2x1x128xf32>
    %57 = vector.broadcast %13 : vector<2x1x1xf32> to vector<2x1x128xf32>
    %58 = arith.cmpf ogt, %47, %57 : vector<2x1x128xf32>
    %59 = vector.shape_cast %13 : vector<2x1x1xf32> to vector<2x1x1xf32>
    %60 = vector.broadcast %59 : vector<2x1x1xf32> to vector<2x1x128xf32>
    %61 = arith.select %58, %47, %60 : vector<2x1x128xi1>, vector<2x1x128xf32>
    %62 = vector.broadcast %14 : vector<2x1x1xf32> to vector<2x1x128xf32>
    %63 = arith.cmpf ogt, %50, %62 : vector<2x1x128xf32>
    %64 = vector.shape_cast %14 : vector<2x1x1xf32> to vector<2x1x1xf32>
    %65 = vector.broadcast %64 : vector<2x1x1xf32> to vector<2x1x128xf32>
    %66 = arith.select %63, %50, %65 : vector<2x1x128xi1>, vector<2x1x128xf32>
    %67 = vector.broadcast %15 : vector<2x1x1xf32> to vector<2x1x128xf32>
    %68 = arith.cmpf ogt, %53, %67 : vector<2x1x128xf32>
    %69 = vector.shape_cast %15 : vector<2x1x1xf32> to vector<2x1x1xf32>
    %70 = vector.broadcast %69 : vector<2x1x1xf32> to vector<2x1x128xf32>
    %71 = arith.select %68, %70, %53 : vector<2x1x128xi1>, vector<2x1x128xf32>
    %72 = vector.broadcast %16 : vector<2x1x1xf32> to vector<2x1x128xf32>
    %73 = arith.cmpf ogt, %56, %72 : vector<2x1x128xf32>
    %74 = vector.shape_cast %16 : vector<2x1x1xf32> to vector<2x1x1xf32>
    %75 = vector.broadcast %74 : vector<2x1x1xf32> to vector<2x1x128xf32>
    %76 = arith.select %73, %75, %56 : vector<2x1x128xi1>, vector<2x1x128xf32>
    %77 = vector.broadcast %1 : vector<1x1x128xf32> to vector<2x1x128xf32>
    %78 = arith.subf %77, %61 : vector<2x1x128xf32>
    %79 = vector.broadcast %1 : vector<1x1x128xf32> to vector<2x1x128xf32>
    %80 = arith.subf %71, %79 : vector<2x1x128xf32>
    %81 = arith.minimumf %78, %80 : vector<2x1x128xf32>
    %82 = vector.broadcast %3 : vector<1x1x128xf32> to vector<2x1x128xf32>
    %83 = arith.subf %82, %66 : vector<2x1x128xf32>
    %84 = vector.broadcast %3 : vector<1x1x128xf32> to vector<2x1x128xf32>
    %85 = arith.subf %76, %84 : vector<2x1x128xf32>
    %86 = arith.minimumf %83, %85 : vector<2x1x128xf32>
    %87 = arith.minimumf %81, %86 : vector<2x1x128xf32>
    %cst_10 = arith.constant 0.000000e+00 : f32
    %88 = vector.broadcast %cst_10 : f32 to vector<2x1x128xf32>
    %89 = arith.cmpf ogt, %87, %88 : vector<2x1x128xf32>
    %90 = vector.broadcast %5 : vector<1x1x128xf32> to vector<2x1x128xf32>
    %91 = arith.cmpf oge, %38, %90 : vector<2x1x128xf32>
    %92 = vector.broadcast %7 : vector<1x1x128xf32> to vector<2x1x128xf32>
    %93 = arith.cmpf ole, %38, %92 : vector<2x1x128xf32>
    %94 = arith.andi %91, %93 : vector<2x1x128xi1>
    %95 = arith.andi %89, %94 : vector<2x1x128xi1>
    %cst_11 = arith.constant 1.000000e+08 : f32
    %96 = vector.shape_cast %20 : vector<2x1x1xf32> to vector<2x1x1xf32>
    %97 = vector.broadcast %96 : vector<2x1x1xf32> to vector<2x1x128xf32>
    %98 = vector.broadcast %cst_11 : f32 to vector<2x1x128xf32>
    %99 = arith.select %95, %97, %98 : vector<2x1x128xi1>, vector<2x1x128xf32>
    %cst_12 = arith.constant 0.000000e+00 : f32
    %100 = vector.broadcast %cst_12 : f32 to vector<2x1x128xf32>
    %101 = arith.cmpf ogt, %35, %100 : vector<2x1x128xf32>
    %cst_13 = arith.constant 0.000000e+00 : f32
    %102 = vector.broadcast %cst_13 : f32 to vector<2x1x1xf32>
    %103 = arith.cmpf olt, %17, %102 : vector<2x1x1xf32>
    %104 = vector.broadcast %103 : vector<2x1x1xi1> to vector<2x1x128xi1>
    %105 = arith.andi %101, %104 : vector<2x1x128xi1>
    %106 = vector.extract_strided_slice %12 {offsets = [0, 0, 4], sizes = [2, 1, 1], strides = [1, 1, 1]} : vector<2x8x8xf32> to vector<2x1x1xf32>
    %cst_14 = arith.constant -1.000000e+00 : f32
    %107 = vector.broadcast %cst_14 : f32 to vector<2x1x1xf32>
    %108 = arith.cmpf one, %106, %107 : vector<2x1x1xf32>
    %109 = vector.extract_strided_slice %12 {offsets = [0, 1, 0], sizes = [2, 1, 1], strides = [1, 1, 1]} : vector<2x8x8xf32> to vector<2x1x1xf32>
    %110 = vector.extract_strided_slice %12 {offsets = [0, 1, 1], sizes = [2, 1, 1], strides = [1, 1, 1]} : vector<2x8x8xf32> to vector<2x1x1xf32>
    %111 = vector.extract_strided_slice %12 {offsets = [0, 1, 2], sizes = [2, 1, 1], strides = [1, 1, 1]} : vector<2x8x8xf32> to vector<2x1x1xf32>
    %112 = vector.extract_strided_slice %12 {offsets = [0, 1, 3], sizes = [2, 1, 1], strides = [1, 1, 1]} : vector<2x8x8xf32> to vector<2x1x1xf32>
    %113 = vector.extract_strided_slice %12 {offsets = [0, 1, 4], sizes = [2, 1, 1], strides = [1, 1, 1]} : vector<2x8x8xf32> to vector<2x1x1xf32>
    %114 = arith.subf %111, %109 : vector<2x1x1xf32>
    %115 = arith.subf %112, %110 : vector<2x1x1xf32>
    %116 = arith.mulf %114, %115 : vector<2x1x1xf32>
    %117 = vector.broadcast %1 : vector<1x1x128xf32> to vector<2x1x128xf32>
    %118 = vector.broadcast %109 : vector<2x1x1xf32> to vector<2x1x128xf32>
    %119 = arith.subf %117, %118 : vector<2x1x128xf32>
    %120 = vector.broadcast %3 : vector<1x1x128xf32> to vector<2x1x128xf32>
    %121 = vector.broadcast %110 : vector<2x1x1xf32> to vector<2x1x128xf32>
    %122 = arith.subf %120, %121 : vector<2x1x128xf32>
    %123 = vector.broadcast %111 : vector<2x1x1xf32> to vector<2x1x128xf32>
    %124 = vector.broadcast %1 : vector<1x1x128xf32> to vector<2x1x128xf32>
    %125 = arith.subf %123, %124 : vector<2x1x128xf32>
    %126 = vector.broadcast %112 : vector<2x1x1xf32> to vector<2x1x128xf32>
    %127 = vector.broadcast %3 : vector<1x1x128xf32> to vector<2x1x128xf32>
    %128 = arith.subf %126, %127 : vector<2x1x128xf32>
    %129 = arith.minimumf %119, %125 : vector<2x1x128xf32>
    %130 = arith.minimumf %122, %128 : vector<2x1x128xf32>
    %131 = arith.minimumf %129, %130 : vector<2x1x128xf32>
    %132 = arith.maximumf %119, %125 : vector<2x1x128xf32>
    %133 = arith.maximumf %122, %128 : vector<2x1x128xf32>
    %134 = arith.maximumf %132, %133 : vector<2x1x128xf32>
    %135 = arith.addf %109, %111 : vector<2x1x1xf32>
    %cst_15 = arith.constant 5.000000e-01 : f32
    %136 = vector.broadcast %cst_15 : f32 to vector<2x1x1xf32>
    %137 = arith.mulf %135, %136 : vector<2x1x1xf32>
    %138 = arith.addf %110, %112 : vector<2x1x1xf32>
    %cst_16 = arith.constant 5.000000e-01 : f32
    %139 = vector.broadcast %cst_16 : f32 to vector<2x1x1xf32>
    %140 = arith.mulf %138, %139 : vector<2x1x1xf32>
    %141 = vector.broadcast %137 : vector<2x1x1xf32> to vector<2x1x128xf32>
    %142 = vector.broadcast %9 : vector<1x1x128xf32> to vector<2x1x128xf32>
    %143 = arith.subf %141, %142 : vector<2x1x128xf32>
    %144 = vector.broadcast %140 : vector<2x1x1xf32> to vector<2x1x128xf32>
    %145 = vector.broadcast %9 : vector<1x1x128xf32> to vector<2x1x128xf32>
    %146 = arith.subf %144, %145 : vector<2x1x128xf32>
    %147 = vector.broadcast %137 : vector<2x1x1xf32> to vector<2x1x128xf32>
    %148 = vector.broadcast %9 : vector<1x1x128xf32> to vector<2x1x128xf32>
    %149 = arith.addf %147, %148 : vector<2x1x128xf32>
    %150 = vector.broadcast %140 : vector<2x1x1xf32> to vector<2x1x128xf32>
    %151 = vector.broadcast %9 : vector<1x1x128xf32> to vector<2x1x128xf32>
    %152 = arith.addf %150, %151 : vector<2x1x128xf32>
    %153 = vector.broadcast %109 : vector<2x1x1xf32> to vector<2x1x128xf32>
    %154 = arith.cmpf ogt, %143, %153 : vector<2x1x128xf32>
    %155 = vector.shape_cast %109 : vector<2x1x1xf32> to vector<2x1x1xf32>
    %156 = vector.broadcast %155 : vector<2x1x1xf32> to vector<2x1x128xf32>
    %157 = arith.select %154, %143, %156 : vector<2x1x128xi1>, vector<2x1x128xf32>
    %158 = vector.broadcast %110 : vector<2x1x1xf32> to vector<2x1x128xf32>
    %159 = arith.cmpf ogt, %146, %158 : vector<2x1x128xf32>
    %160 = vector.shape_cast %110 : vector<2x1x1xf32> to vector<2x1x1xf32>
    %161 = vector.broadcast %160 : vector<2x1x1xf32> to vector<2x1x128xf32>
    %162 = arith.select %159, %146, %161 : vector<2x1x128xi1>, vector<2x1x128xf32>
    %163 = vector.broadcast %111 : vector<2x1x1xf32> to vector<2x1x128xf32>
    %164 = arith.cmpf ogt, %149, %163 : vector<2x1x128xf32>
    %165 = vector.shape_cast %111 : vector<2x1x1xf32> to vector<2x1x1xf32>
    %166 = vector.broadcast %165 : vector<2x1x1xf32> to vector<2x1x128xf32>
    %167 = arith.select %164, %166, %149 : vector<2x1x128xi1>, vector<2x1x128xf32>
    %168 = vector.broadcast %112 : vector<2x1x1xf32> to vector<2x1x128xf32>
    %169 = arith.cmpf ogt, %152, %168 : vector<2x1x128xf32>
    %170 = vector.shape_cast %112 : vector<2x1x1xf32> to vector<2x1x1xf32>
    %171 = vector.broadcast %170 : vector<2x1x1xf32> to vector<2x1x128xf32>
    %172 = arith.select %169, %171, %152 : vector<2x1x128xi1>, vector<2x1x128xf32>
    %173 = vector.broadcast %1 : vector<1x1x128xf32> to vector<2x1x128xf32>
    %174 = arith.subf %173, %157 : vector<2x1x128xf32>
    %175 = vector.broadcast %1 : vector<1x1x128xf32> to vector<2x1x128xf32>
    %176 = arith.subf %167, %175 : vector<2x1x128xf32>
    %177 = arith.minimumf %174, %176 : vector<2x1x128xf32>
    %178 = vector.broadcast %3 : vector<1x1x128xf32> to vector<2x1x128xf32>
    %179 = arith.subf %178, %162 : vector<2x1x128xf32>
    %180 = vector.broadcast %3 : vector<1x1x128xf32> to vector<2x1x128xf32>
    %181 = arith.subf %172, %180 : vector<2x1x128xf32>
    %182 = arith.minimumf %179, %181 : vector<2x1x128xf32>
    %183 = arith.minimumf %177, %182 : vector<2x1x128xf32>
    %cst_17 = arith.constant 0.000000e+00 : f32
    %184 = vector.broadcast %cst_17 : f32 to vector<2x1x128xf32>
    %185 = arith.cmpf ogt, %183, %184 : vector<2x1x128xf32>
    %186 = vector.broadcast %5 : vector<1x1x128xf32> to vector<2x1x128xf32>
    %187 = arith.cmpf oge, %134, %186 : vector<2x1x128xf32>
    %188 = vector.broadcast %7 : vector<1x1x128xf32> to vector<2x1x128xf32>
    %189 = arith.cmpf ole, %134, %188 : vector<2x1x128xf32>
    %190 = arith.andi %187, %189 : vector<2x1x128xi1>
    %191 = arith.andi %185, %190 : vector<2x1x128xi1>
    %cst_18 = arith.constant 1.000000e+08 : f32
    %192 = vector.shape_cast %116 : vector<2x1x1xf32> to vector<2x1x1xf32>
    %193 = vector.broadcast %192 : vector<2x1x1xf32> to vector<2x1x128xf32>
    %194 = vector.broadcast %cst_18 : f32 to vector<2x1x128xf32>
    %195 = arith.select %191, %193, %194 : vector<2x1x128xi1>, vector<2x1x128xf32>
    %cst_19 = arith.constant 0.000000e+00 : f32
    %196 = vector.broadcast %cst_19 : f32 to vector<2x1x128xf32>
    %197 = arith.cmpf ogt, %131, %196 : vector<2x1x128xf32>
    %cst_20 = arith.constant 0.000000e+00 : f32
    %198 = vector.broadcast %cst_20 : f32 to vector<2x1x1xf32>
    %199 = arith.cmpf olt, %113, %198 : vector<2x1x1xf32>
    %200 = vector.broadcast %199 : vector<2x1x1xi1> to vector<2x1x128xi1>
    %201 = arith.andi %197, %200 : vector<2x1x128xi1>
    %202 = arith.cmpf olt, %195, %99 : vector<2x1x128xf32>
    %203 = arith.select %202, %195, %99 : vector<2x1x128xi1>, vector<2x1x128xf32>
    %204 = vector.shape_cast %109 : vector<2x1x1xf32> to vector<2x1x1xf32>
    %205 = vector.broadcast %204 : vector<2x1x1xf32> to vector<2x1x128xf32>
    %206 = vector.shape_cast %13 : vector<2x1x1xf32> to vector<2x1x1xf32>
    %207 = vector.broadcast %206 : vector<2x1x1xf32> to vector<2x1x128xf32>
    %208 = arith.select %202, %205, %207 : vector<2x1x128xi1>, vector<2x1x128xf32>
    %209 = vector.shape_cast %110 : vector<2x1x1xf32> to vector<2x1x1xf32>
    %210 = vector.broadcast %209 : vector<2x1x1xf32> to vector<2x1x128xf32>
    %211 = vector.shape_cast %14 : vector<2x1x1xf32> to vector<2x1x1xf32>
    %212 = vector.broadcast %211 : vector<2x1x1xf32> to vector<2x1x128xf32>
    %213 = arith.select %202, %210, %212 : vector<2x1x128xi1>, vector<2x1x128xf32>
    %214 = vector.shape_cast %111 : vector<2x1x1xf32> to vector<2x1x1xf32>
    %215 = vector.broadcast %214 : vector<2x1x1xf32> to vector<2x1x128xf32>
    %216 = vector.shape_cast %15 : vector<2x1x1xf32> to vector<2x1x1xf32>
    %217 = vector.broadcast %216 : vector<2x1x1xf32> to vector<2x1x128xf32>
    %218 = arith.select %202, %215, %217 : vector<2x1x128xi1>, vector<2x1x128xf32>
    %219 = vector.shape_cast %112 : vector<2x1x1xf32> to vector<2x1x1xf32>
    %220 = vector.broadcast %219 : vector<2x1x1xf32> to vector<2x1x128xf32>
    %221 = vector.shape_cast %16 : vector<2x1x1xf32> to vector<2x1x1xf32>
    %222 = vector.broadcast %221 : vector<2x1x1xf32> to vector<2x1x128xf32>
    %223 = arith.select %202, %220, %222 : vector<2x1x128xi1>, vector<2x1x128xf32>
    %224 = vector.shape_cast %113 : vector<2x1x1xf32> to vector<2x1x1xf32>
    %225 = vector.broadcast %224 : vector<2x1x1xf32> to vector<2x1x128xf32>
    %226 = vector.shape_cast %17 : vector<2x1x1xf32> to vector<2x1x1xf32>
    %227 = vector.broadcast %226 : vector<2x1x1xf32> to vector<2x1x128xf32>
    %228 = arith.select %202, %225, %227 : vector<2x1x128xi1>, vector<2x1x128xf32>
    %229 = arith.ori %105, %201 : vector<2x1x128xi1>
    %cst_21 = arith.constant -1.000000e+00 : f32
    %230 = vector.broadcast %cst_21 : f32 to vector<2x1x1xf32>
    %231 = arith.cmpf one, %113, %230 : vector<2x1x1xf32>
    %232 = arith.ori %108, %231 : vector<2x1x1xi1>
    %233 = vector.extract_strided_slice %12 {offsets = [0, 2, 0], sizes = [2, 1, 1], strides = [1, 1, 1]} : vector<2x8x8xf32> to vector<2x1x1xf32>
    %234 = vector.extract_strided_slice %12 {offsets = [0, 2, 1], sizes = [2, 1, 1], strides = [1, 1, 1]} : vector<2x8x8xf32> to vector<2x1x1xf32>
    %235 = vector.extract_strided_slice %12 {offsets = [0, 2, 2], sizes = [2, 1, 1], strides = [1, 1, 1]} : vector<2x8x8xf32> to vector<2x1x1xf32>
    %236 = vector.extract_strided_slice %12 {offsets = [0, 2, 3], sizes = [2, 1, 1], strides = [1, 1, 1]} : vector<2x8x8xf32> to vector<2x1x1xf32>
    %237 = vector.extract_strided_slice %12 {offsets = [0, 2, 4], sizes = [2, 1, 1], strides = [1, 1, 1]} : vector<2x8x8xf32> to vector<2x1x1xf32>
    %238 = arith.subf %235, %233 : vector<2x1x1xf32>
    %239 = arith.subf %236, %234 : vector<2x1x1xf32>
    %240 = arith.mulf %238, %239 : vector<2x1x1xf32>
    %241 = vector.broadcast %1 : vector<1x1x128xf32> to vector<2x1x128xf32>
    %242 = vector.broadcast %233 : vector<2x1x1xf32> to vector<2x1x128xf32>
    %243 = arith.subf %241, %242 : vector<2x1x128xf32>
    %244 = vector.broadcast %3 : vector<1x1x128xf32> to vector<2x1x128xf32>
    %245 = vector.broadcast %234 : vector<2x1x1xf32> to vector<2x1x128xf32>
    %246 = arith.subf %244, %245 : vector<2x1x128xf32>
    %247 = vector.broadcast %235 : vector<2x1x1xf32> to vector<2x1x128xf32>
    %248 = vector.broadcast %1 : vector<1x1x128xf32> to vector<2x1x128xf32>
    %249 = arith.subf %247, %248 : vector<2x1x128xf32>
    %250 = vector.broadcast %236 : vector<2x1x1xf32> to vector<2x1x128xf32>
    %251 = vector.broadcast %3 : vector<1x1x128xf32> to vector<2x1x128xf32>
    %252 = arith.subf %250, %251 : vector<2x1x128xf32>
    %253 = arith.minimumf %243, %249 : vector<2x1x128xf32>
    %254 = arith.minimumf %246, %252 : vector<2x1x128xf32>
    %255 = arith.minimumf %253, %254 : vector<2x1x128xf32>
    %256 = arith.maximumf %243, %249 : vector<2x1x128xf32>
    %257 = arith.maximumf %246, %252 : vector<2x1x128xf32>
    %258 = arith.maximumf %256, %257 : vector<2x1x128xf32>
    %259 = arith.addf %233, %235 : vector<2x1x1xf32>
    %cst_22 = arith.constant 5.000000e-01 : f32
    %260 = vector.broadcast %cst_22 : f32 to vector<2x1x1xf32>
    %261 = arith.mulf %259, %260 : vector<2x1x1xf32>
    %262 = arith.addf %234, %236 : vector<2x1x1xf32>
    %cst_23 = arith.constant 5.000000e-01 : f32
    %263 = vector.broadcast %cst_23 : f32 to vector<2x1x1xf32>
    %264 = arith.mulf %262, %263 : vector<2x1x1xf32>
    %265 = vector.broadcast %261 : vector<2x1x1xf32> to vector<2x1x128xf32>
    %266 = vector.broadcast %9 : vector<1x1x128xf32> to vector<2x1x128xf32>
    %267 = arith.subf %265, %266 : vector<2x1x128xf32>
    %268 = vector.broadcast %264 : vector<2x1x1xf32> to vector<2x1x128xf32>
    %269 = vector.broadcast %9 : vector<1x1x128xf32> to vector<2x1x128xf32>
    %270 = arith.subf %268, %269 : vector<2x1x128xf32>
    %271 = vector.broadcast %261 : vector<2x1x1xf32> to vector<2x1x128xf32>
    %272 = vector.broadcast %9 : vector<1x1x128xf32> to vector<2x1x128xf32>
    %273 = arith.addf %271, %272 : vector<2x1x128xf32>
    %274 = vector.broadcast %264 : vector<2x1x1xf32> to vector<2x1x128xf32>
    %275 = vector.broadcast %9 : vector<1x1x128xf32> to vector<2x1x128xf32>
    %276 = arith.addf %274, %275 : vector<2x1x128xf32>
    %277 = vector.broadcast %233 : vector<2x1x1xf32> to vector<2x1x128xf32>
    %278 = arith.cmpf ogt, %267, %277 : vector<2x1x128xf32>
    %279 = vector.shape_cast %233 : vector<2x1x1xf32> to vector<2x1x1xf32>
    %280 = vector.broadcast %279 : vector<2x1x1xf32> to vector<2x1x128xf32>
    %281 = arith.select %278, %267, %280 : vector<2x1x128xi1>, vector<2x1x128xf32>
    %282 = vector.broadcast %234 : vector<2x1x1xf32> to vector<2x1x128xf32>
    %283 = arith.cmpf ogt, %270, %282 : vector<2x1x128xf32>
    %284 = vector.shape_cast %234 : vector<2x1x1xf32> to vector<2x1x1xf32>
    %285 = vector.broadcast %284 : vector<2x1x1xf32> to vector<2x1x128xf32>
    %286 = arith.select %283, %270, %285 : vector<2x1x128xi1>, vector<2x1x128xf32>
    %287 = vector.broadcast %235 : vector<2x1x1xf32> to vector<2x1x128xf32>
    %288 = arith.cmpf ogt, %273, %287 : vector<2x1x128xf32>
    %289 = vector.shape_cast %235 : vector<2x1x1xf32> to vector<2x1x1xf32>
    %290 = vector.broadcast %289 : vector<2x1x1xf32> to vector<2x1x128xf32>
    %291 = arith.select %288, %290, %273 : vector<2x1x128xi1>, vector<2x1x128xf32>
    %292 = vector.broadcast %236 : vector<2x1x1xf32> to vector<2x1x128xf32>
    %293 = arith.cmpf ogt, %276, %292 : vector<2x1x128xf32>
    %294 = vector.shape_cast %236 : vector<2x1x1xf32> to vector<2x1x1xf32>
    %295 = vector.broadcast %294 : vector<2x1x1xf32> to vector<2x1x128xf32>
    %296 = arith.select %293, %295, %276 : vector<2x1x128xi1>, vector<2x1x128xf32>
    %297 = vector.broadcast %1 : vector<1x1x128xf32> to vector<2x1x128xf32>
    %298 = arith.subf %297, %281 : vector<2x1x128xf32>
    %299 = vector.broadcast %1 : vector<1x1x128xf32> to vector<2x1x128xf32>
    %300 = arith.subf %291, %299 : vector<2x1x128xf32>
    %301 = arith.minimumf %298, %300 : vector<2x1x128xf32>
    %302 = vector.broadcast %3 : vector<1x1x128xf32> to vector<2x1x128xf32>
    %303 = arith.subf %302, %286 : vector<2x1x128xf32>
    %304 = vector.broadcast %3 : vector<1x1x128xf32> to vector<2x1x128xf32>
    %305 = arith.subf %296, %304 : vector<2x1x128xf32>
    %306 = arith.minimumf %303, %305 : vector<2x1x128xf32>
    %307 = arith.minimumf %301, %306 : vector<2x1x128xf32>
    %cst_24 = arith.constant 0.000000e+00 : f32
    %308 = vector.broadcast %cst_24 : f32 to vector<2x1x128xf32>
    %309 = arith.cmpf ogt, %307, %308 : vector<2x1x128xf32>
    %310 = vector.broadcast %5 : vector<1x1x128xf32> to vector<2x1x128xf32>
    %311 = arith.cmpf oge, %258, %310 : vector<2x1x128xf32>
    %312 = vector.broadcast %7 : vector<1x1x128xf32> to vector<2x1x128xf32>
    %313 = arith.cmpf ole, %258, %312 : vector<2x1x128xf32>
    %314 = arith.andi %311, %313 : vector<2x1x128xi1>
    %315 = arith.andi %309, %314 : vector<2x1x128xi1>
    %cst_25 = arith.constant 1.000000e+08 : f32
    %316 = vector.shape_cast %240 : vector<2x1x1xf32> to vector<2x1x1xf32>
    %317 = vector.broadcast %316 : vector<2x1x1xf32> to vector<2x1x128xf32>
    %318 = vector.broadcast %cst_25 : f32 to vector<2x1x128xf32>
    %319 = arith.select %315, %317, %318 : vector<2x1x128xi1>, vector<2x1x128xf32>
    %cst_26 = arith.constant 0.000000e+00 : f32
    %320 = vector.broadcast %cst_26 : f32 to vector<2x1x128xf32>
    %321 = arith.cmpf ogt, %255, %320 : vector<2x1x128xf32>
    %cst_27 = arith.constant 0.000000e+00 : f32
    %322 = vector.broadcast %cst_27 : f32 to vector<2x1x1xf32>
    %323 = arith.cmpf olt, %237, %322 : vector<2x1x1xf32>
    %324 = vector.broadcast %323 : vector<2x1x1xi1> to vector<2x1x128xi1>
    %325 = arith.andi %321, %324 : vector<2x1x128xi1>
    %326 = arith.cmpf olt, %319, %203 : vector<2x1x128xf32>
    %327 = arith.select %326, %319, %203 : vector<2x1x128xi1>, vector<2x1x128xf32>
    %328 = vector.shape_cast %233 : vector<2x1x1xf32> to vector<2x1x1xf32>
    %329 = vector.broadcast %328 : vector<2x1x1xf32> to vector<2x1x128xf32>
    %330 = arith.select %326, %329, %208 : vector<2x1x128xi1>, vector<2x1x128xf32>
    %331 = vector.shape_cast %234 : vector<2x1x1xf32> to vector<2x1x1xf32>
    %332 = vector.broadcast %331 : vector<2x1x1xf32> to vector<2x1x128xf32>
    %333 = arith.select %326, %332, %213 : vector<2x1x128xi1>, vector<2x1x128xf32>
    %334 = vector.shape_cast %235 : vector<2x1x1xf32> to vector<2x1x1xf32>
    %335 = vector.broadcast %334 : vector<2x1x1xf32> to vector<2x1x128xf32>
    %336 = arith.select %326, %335, %218 : vector<2x1x128xi1>, vector<2x1x128xf32>
    %337 = vector.shape_cast %236 : vector<2x1x1xf32> to vector<2x1x1xf32>
    %338 = vector.broadcast %337 : vector<2x1x1xf32> to vector<2x1x128xf32>
    %339 = arith.select %326, %338, %223 : vector<2x1x128xi1>, vector<2x1x128xf32>
    %340 = vector.shape_cast %237 : vector<2x1x1xf32> to vector<2x1x1xf32>
    %341 = vector.broadcast %340 : vector<2x1x1xf32> to vector<2x1x128xf32>
    %342 = arith.select %326, %341, %228 : vector<2x1x128xi1>, vector<2x1x128xf32>
    %343 = arith.ori %229, %325 : vector<2x1x128xi1>
    %cst_28 = arith.constant -1.000000e+00 : f32
    %344 = vector.broadcast %cst_28 : f32 to vector<2x1x1xf32>
    %345 = arith.cmpf one, %237, %344 : vector<2x1x1xf32>
    %346 = arith.ori %232, %345 : vector<2x1x1xi1>
    %347 = vector.extract_strided_slice %12 {offsets = [0, 3, 0], sizes = [2, 1, 1], strides = [1, 1, 1]} : vector<2x8x8xf32> to vector<2x1x1xf32>
    %348 = vector.extract_strided_slice %12 {offsets = [0, 3, 1], sizes = [2, 1, 1], strides = [1, 1, 1]} : vector<2x8x8xf32> to vector<2x1x1xf32>
    %349 = vector.extract_strided_slice %12 {offsets = [0, 3, 2], sizes = [2, 1, 1], strides = [1, 1, 1]} : vector<2x8x8xf32> to vector<2x1x1xf32>
    %350 = vector.extract_strided_slice %12 {offsets = [0, 3, 3], sizes = [2, 1, 1], strides = [1, 1, 1]} : vector<2x8x8xf32> to vector<2x1x1xf32>
    %351 = vector.extract_strided_slice %12 {offsets = [0, 3, 4], sizes = [2, 1, 1], strides = [1, 1, 1]} : vector<2x8x8xf32> to vector<2x1x1xf32>
    %352 = arith.subf %349, %347 : vector<2x1x1xf32>
    %353 = arith.subf %350, %348 : vector<2x1x1xf32>
    %354 = arith.mulf %352, %353 : vector<2x1x1xf32>
    %355 = vector.broadcast %1 : vector<1x1x128xf32> to vector<2x1x128xf32>
    %356 = vector.broadcast %347 : vector<2x1x1xf32> to vector<2x1x128xf32>
    %357 = arith.subf %355, %356 : vector<2x1x128xf32>
    %358 = vector.broadcast %3 : vector<1x1x128xf32> to vector<2x1x128xf32>
    %359 = vector.broadcast %348 : vector<2x1x1xf32> to vector<2x1x128xf32>
    %360 = arith.subf %358, %359 : vector<2x1x128xf32>
    %361 = vector.broadcast %349 : vector<2x1x1xf32> to vector<2x1x128xf32>
    %362 = vector.broadcast %1 : vector<1x1x128xf32> to vector<2x1x128xf32>
    %363 = arith.subf %361, %362 : vector<2x1x128xf32>
    %364 = vector.broadcast %350 : vector<2x1x1xf32> to vector<2x1x128xf32>
    %365 = vector.broadcast %3 : vector<1x1x128xf32> to vector<2x1x128xf32>
    %366 = arith.subf %364, %365 : vector<2x1x128xf32>
    %367 = arith.minimumf %357, %363 : vector<2x1x128xf32>
    %368 = arith.minimumf %360, %366 : vector<2x1x128xf32>
    %369 = arith.minimumf %367, %368 : vector<2x1x128xf32>
    %370 = arith.maximumf %357, %363 : vector<2x1x128xf32>
    %371 = arith.maximumf %360, %366 : vector<2x1x128xf32>
    %372 = arith.maximumf %370, %371 : vector<2x1x128xf32>
    %373 = arith.addf %347, %349 : vector<2x1x1xf32>
    %cst_29 = arith.constant 5.000000e-01 : f32
    %374 = vector.broadcast %cst_29 : f32 to vector<2x1x1xf32>
    %375 = arith.mulf %373, %374 : vector<2x1x1xf32>
    %376 = arith.addf %348, %350 : vector<2x1x1xf32>
    %cst_30 = arith.constant 5.000000e-01 : f32
    %377 = vector.broadcast %cst_30 : f32 to vector<2x1x1xf32>
    %378 = arith.mulf %376, %377 : vector<2x1x1xf32>
    %379 = vector.broadcast %375 : vector<2x1x1xf32> to vector<2x1x128xf32>
    %380 = vector.broadcast %9 : vector<1x1x128xf32> to vector<2x1x128xf32>
    %381 = arith.subf %379, %380 : vector<2x1x128xf32>
    %382 = vector.broadcast %378 : vector<2x1x1xf32> to vector<2x1x128xf32>
    %383 = vector.broadcast %9 : vector<1x1x128xf32> to vector<2x1x128xf32>
    %384 = arith.subf %382, %383 : vector<2x1x128xf32>
    %385 = vector.broadcast %375 : vector<2x1x1xf32> to vector<2x1x128xf32>
    %386 = vector.broadcast %9 : vector<1x1x128xf32> to vector<2x1x128xf32>
    %387 = arith.addf %385, %386 : vector<2x1x128xf32>
    %388 = vector.broadcast %378 : vector<2x1x1xf32> to vector<2x1x128xf32>
    %389 = vector.broadcast %9 : vector<1x1x128xf32> to vector<2x1x128xf32>
    %390 = arith.addf %388, %389 : vector<2x1x128xf32>
    %391 = vector.broadcast %347 : vector<2x1x1xf32> to vector<2x1x128xf32>
    %392 = arith.cmpf ogt, %381, %391 : vector<2x1x128xf32>
    %393 = vector.shape_cast %347 : vector<2x1x1xf32> to vector<2x1x1xf32>
    %394 = vector.broadcast %393 : vector<2x1x1xf32> to vector<2x1x128xf32>
    %395 = arith.select %392, %381, %394 : vector<2x1x128xi1>, vector<2x1x128xf32>
    %396 = vector.broadcast %348 : vector<2x1x1xf32> to vector<2x1x128xf32>
    %397 = arith.cmpf ogt, %384, %396 : vector<2x1x128xf32>
    %398 = vector.shape_cast %348 : vector<2x1x1xf32> to vector<2x1x1xf32>
    %399 = vector.broadcast %398 : vector<2x1x1xf32> to vector<2x1x128xf32>
    %400 = arith.select %397, %384, %399 : vector<2x1x128xi1>, vector<2x1x128xf32>
    %401 = vector.broadcast %349 : vector<2x1x1xf32> to vector<2x1x128xf32>
    %402 = arith.cmpf ogt, %387, %401 : vector<2x1x128xf32>
    %403 = vector.shape_cast %349 : vector<2x1x1xf32> to vector<2x1x1xf32>
    %404 = vector.broadcast %403 : vector<2x1x1xf32> to vector<2x1x128xf32>
    %405 = arith.select %402, %404, %387 : vector<2x1x128xi1>, vector<2x1x128xf32>
    %406 = vector.broadcast %350 : vector<2x1x1xf32> to vector<2x1x128xf32>
    %407 = arith.cmpf ogt, %390, %406 : vector<2x1x128xf32>
    %408 = vector.shape_cast %350 : vector<2x1x1xf32> to vector<2x1x1xf32>
    %409 = vector.broadcast %408 : vector<2x1x1xf32> to vector<2x1x128xf32>
    %410 = arith.select %407, %409, %390 : vector<2x1x128xi1>, vector<2x1x128xf32>
    %411 = vector.broadcast %1 : vector<1x1x128xf32> to vector<2x1x128xf32>
    %412 = arith.subf %411, %395 : vector<2x1x128xf32>
    %413 = vector.broadcast %1 : vector<1x1x128xf32> to vector<2x1x128xf32>
    %414 = arith.subf %405, %413 : vector<2x1x128xf32>
    %415 = arith.minimumf %412, %414 : vector<2x1x128xf32>
    %416 = vector.broadcast %3 : vector<1x1x128xf32> to vector<2x1x128xf32>
    %417 = arith.subf %416, %400 : vector<2x1x128xf32>
    %418 = vector.broadcast %3 : vector<1x1x128xf32> to vector<2x1x128xf32>
    %419 = arith.subf %410, %418 : vector<2x1x128xf32>
    %420 = arith.minimumf %417, %419 : vector<2x1x128xf32>
    %421 = arith.minimumf %415, %420 : vector<2x1x128xf32>
    %cst_31 = arith.constant 0.000000e+00 : f32
    %422 = vector.broadcast %cst_31 : f32 to vector<2x1x128xf32>
    %423 = arith.cmpf ogt, %421, %422 : vector<2x1x128xf32>
    %424 = vector.broadcast %5 : vector<1x1x128xf32> to vector<2x1x128xf32>
    %425 = arith.cmpf oge, %372, %424 : vector<2x1x128xf32>
    %426 = vector.broadcast %7 : vector<1x1x128xf32> to vector<2x1x128xf32>
    %427 = arith.cmpf ole, %372, %426 : vector<2x1x128xf32>
    %428 = arith.andi %425, %427 : vector<2x1x128xi1>
    %429 = arith.andi %423, %428 : vector<2x1x128xi1>
    %cst_32 = arith.constant 1.000000e+08 : f32
    %430 = vector.shape_cast %354 : vector<2x1x1xf32> to vector<2x1x1xf32>
    %431 = vector.broadcast %430 : vector<2x1x1xf32> to vector<2x1x128xf32>
    %432 = vector.broadcast %cst_32 : f32 to vector<2x1x128xf32>
    %433 = arith.select %429, %431, %432 : vector<2x1x128xi1>, vector<2x1x128xf32>
    %cst_33 = arith.constant 0.000000e+00 : f32
    %434 = vector.broadcast %cst_33 : f32 to vector<2x1x128xf32>
    %435 = arith.cmpf ogt, %369, %434 : vector<2x1x128xf32>
    %cst_34 = arith.constant 0.000000e+00 : f32
    %436 = vector.broadcast %cst_34 : f32 to vector<2x1x1xf32>
    %437 = arith.cmpf olt, %351, %436 : vector<2x1x1xf32>
    %438 = vector.broadcast %437 : vector<2x1x1xi1> to vector<2x1x128xi1>
    %439 = arith.andi %435, %438 : vector<2x1x128xi1>
    %440 = arith.cmpf olt, %433, %327 : vector<2x1x128xf32>
    %441 = arith.select %440, %433, %327 : vector<2x1x128xi1>, vector<2x1x128xf32>
    %442 = vector.shape_cast %347 : vector<2x1x1xf32> to vector<2x1x1xf32>
    %443 = vector.broadcast %442 : vector<2x1x1xf32> to vector<2x1x128xf32>
    %444 = arith.select %440, %443, %330 : vector<2x1x128xi1>, vector<2x1x128xf32>
    %445 = vector.shape_cast %348 : vector<2x1x1xf32> to vector<2x1x1xf32>
    %446 = vector.broadcast %445 : vector<2x1x1xf32> to vector<2x1x128xf32>
    %447 = arith.select %440, %446, %333 : vector<2x1x128xi1>, vector<2x1x128xf32>
    %448 = vector.shape_cast %349 : vector<2x1x1xf32> to vector<2x1x1xf32>
    %449 = vector.broadcast %448 : vector<2x1x1xf32> to vector<2x1x128xf32>
    %450 = arith.select %440, %449, %336 : vector<2x1x128xi1>, vector<2x1x128xf32>
    %451 = vector.shape_cast %350 : vector<2x1x1xf32> to vector<2x1x1xf32>
    %452 = vector.broadcast %451 : vector<2x1x1xf32> to vector<2x1x128xf32>
    %453 = arith.select %440, %452, %339 : vector<2x1x128xi1>, vector<2x1x128xf32>
    %454 = vector.shape_cast %351 : vector<2x1x1xf32> to vector<2x1x1xf32>
    %455 = vector.broadcast %454 : vector<2x1x1xf32> to vector<2x1x128xf32>
    %456 = arith.select %440, %455, %342 : vector<2x1x128xi1>, vector<2x1x128xf32>
    %457 = arith.ori %343, %439 : vector<2x1x128xi1>
    %cst_35 = arith.constant -1.000000e+00 : f32
    %458 = vector.broadcast %cst_35 : f32 to vector<2x1x1xf32>
    %459 = arith.cmpf one, %351, %458 : vector<2x1x1xf32>
    %460 = arith.ori %346, %459 : vector<2x1x1xi1>
    %461 = vector.extract_strided_slice %12 {offsets = [0, 4, 0], sizes = [2, 1, 1], strides = [1, 1, 1]} : vector<2x8x8xf32> to vector<2x1x1xf32>
    %462 = vector.extract_strided_slice %12 {offsets = [0, 4, 1], sizes = [2, 1, 1], strides = [1, 1, 1]} : vector<2x8x8xf32> to vector<2x1x1xf32>
    %463 = vector.extract_strided_slice %12 {offsets = [0, 4, 2], sizes = [2, 1, 1], strides = [1, 1, 1]} : vector<2x8x8xf32> to vector<2x1x1xf32>
    %464 = vector.extract_strided_slice %12 {offsets = [0, 4, 3], sizes = [2, 1, 1], strides = [1, 1, 1]} : vector<2x8x8xf32> to vector<2x1x1xf32>
    %465 = vector.extract_strided_slice %12 {offsets = [0, 4, 4], sizes = [2, 1, 1], strides = [1, 1, 1]} : vector<2x8x8xf32> to vector<2x1x1xf32>
    %466 = arith.subf %463, %461 : vector<2x1x1xf32>
    %467 = arith.subf %464, %462 : vector<2x1x1xf32>
    %468 = arith.mulf %466, %467 : vector<2x1x1xf32>
    %469 = vector.broadcast %1 : vector<1x1x128xf32> to vector<2x1x128xf32>
    %470 = vector.broadcast %461 : vector<2x1x1xf32> to vector<2x1x128xf32>
    %471 = arith.subf %469, %470 : vector<2x1x128xf32>
    %472 = vector.broadcast %3 : vector<1x1x128xf32> to vector<2x1x128xf32>
    %473 = vector.broadcast %462 : vector<2x1x1xf32> to vector<2x1x128xf32>
    %474 = arith.subf %472, %473 : vector<2x1x128xf32>
    %475 = vector.broadcast %463 : vector<2x1x1xf32> to vector<2x1x128xf32>
    %476 = vector.broadcast %1 : vector<1x1x128xf32> to vector<2x1x128xf32>
    %477 = arith.subf %475, %476 : vector<2x1x128xf32>
    %478 = vector.broadcast %464 : vector<2x1x1xf32> to vector<2x1x128xf32>
    %479 = vector.broadcast %3 : vector<1x1x128xf32> to vector<2x1x128xf32>
    %480 = arith.subf %478, %479 : vector<2x1x128xf32>
    %481 = arith.minimumf %471, %477 : vector<2x1x128xf32>
    %482 = arith.minimumf %474, %480 : vector<2x1x128xf32>
    %483 = arith.minimumf %481, %482 : vector<2x1x128xf32>
    %484 = arith.maximumf %471, %477 : vector<2x1x128xf32>
    %485 = arith.maximumf %474, %480 : vector<2x1x128xf32>
    %486 = arith.maximumf %484, %485 : vector<2x1x128xf32>
    %487 = arith.addf %461, %463 : vector<2x1x1xf32>
    %cst_36 = arith.constant 5.000000e-01 : f32
    %488 = vector.broadcast %cst_36 : f32 to vector<2x1x1xf32>
    %489 = arith.mulf %487, %488 : vector<2x1x1xf32>
    %490 = arith.addf %462, %464 : vector<2x1x1xf32>
    %cst_37 = arith.constant 5.000000e-01 : f32
    %491 = vector.broadcast %cst_37 : f32 to vector<2x1x1xf32>
    %492 = arith.mulf %490, %491 : vector<2x1x1xf32>
    %493 = vector.broadcast %489 : vector<2x1x1xf32> to vector<2x1x128xf32>
    %494 = vector.broadcast %9 : vector<1x1x128xf32> to vector<2x1x128xf32>
    %495 = arith.subf %493, %494 : vector<2x1x128xf32>
    %496 = vector.broadcast %492 : vector<2x1x1xf32> to vector<2x1x128xf32>
    %497 = vector.broadcast %9 : vector<1x1x128xf32> to vector<2x1x128xf32>
    %498 = arith.subf %496, %497 : vector<2x1x128xf32>
    %499 = vector.broadcast %489 : vector<2x1x1xf32> to vector<2x1x128xf32>
    %500 = vector.broadcast %9 : vector<1x1x128xf32> to vector<2x1x128xf32>
    %501 = arith.addf %499, %500 : vector<2x1x128xf32>
    %502 = vector.broadcast %492 : vector<2x1x1xf32> to vector<2x1x128xf32>
    %503 = vector.broadcast %9 : vector<1x1x128xf32> to vector<2x1x128xf32>
    %504 = arith.addf %502, %503 : vector<2x1x128xf32>
    %505 = vector.broadcast %461 : vector<2x1x1xf32> to vector<2x1x128xf32>
    %506 = arith.cmpf ogt, %495, %505 : vector<2x1x128xf32>
    %507 = vector.shape_cast %461 : vector<2x1x1xf32> to vector<2x1x1xf32>
    %508 = vector.broadcast %507 : vector<2x1x1xf32> to vector<2x1x128xf32>
    %509 = arith.select %506, %495, %508 : vector<2x1x128xi1>, vector<2x1x128xf32>
    %510 = vector.broadcast %462 : vector<2x1x1xf32> to vector<2x1x128xf32>
    %511 = arith.cmpf ogt, %498, %510 : vector<2x1x128xf32>
    %512 = vector.shape_cast %462 : vector<2x1x1xf32> to vector<2x1x1xf32>
    %513 = vector.broadcast %512 : vector<2x1x1xf32> to vector<2x1x128xf32>
    %514 = arith.select %511, %498, %513 : vector<2x1x128xi1>, vector<2x1x128xf32>
    %515 = vector.broadcast %463 : vector<2x1x1xf32> to vector<2x1x128xf32>
    %516 = arith.cmpf ogt, %501, %515 : vector<2x1x128xf32>
    %517 = vector.shape_cast %463 : vector<2x1x1xf32> to vector<2x1x1xf32>
    %518 = vector.broadcast %517 : vector<2x1x1xf32> to vector<2x1x128xf32>
    %519 = arith.select %516, %518, %501 : vector<2x1x128xi1>, vector<2x1x128xf32>
    %520 = vector.broadcast %464 : vector<2x1x1xf32> to vector<2x1x128xf32>
    %521 = arith.cmpf ogt, %504, %520 : vector<2x1x128xf32>
    %522 = vector.shape_cast %464 : vector<2x1x1xf32> to vector<2x1x1xf32>
    %523 = vector.broadcast %522 : vector<2x1x1xf32> to vector<2x1x128xf32>
    %524 = arith.select %521, %523, %504 : vector<2x1x128xi1>, vector<2x1x128xf32>
    %525 = vector.broadcast %1 : vector<1x1x128xf32> to vector<2x1x128xf32>
    %526 = arith.subf %525, %509 : vector<2x1x128xf32>
    %527 = vector.broadcast %1 : vector<1x1x128xf32> to vector<2x1x128xf32>
    %528 = arith.subf %519, %527 : vector<2x1x128xf32>
    %529 = arith.minimumf %526, %528 : vector<2x1x128xf32>
    %530 = vector.broadcast %3 : vector<1x1x128xf32> to vector<2x1x128xf32>
    %531 = arith.subf %530, %514 : vector<2x1x128xf32>
    %532 = vector.broadcast %3 : vector<1x1x128xf32> to vector<2x1x128xf32>
    %533 = arith.subf %524, %532 : vector<2x1x128xf32>
    %534 = arith.minimumf %531, %533 : vector<2x1x128xf32>
    %535 = arith.minimumf %529, %534 : vector<2x1x128xf32>
    %cst_38 = arith.constant 0.000000e+00 : f32
    %536 = vector.broadcast %cst_38 : f32 to vector<2x1x128xf32>
    %537 = arith.cmpf ogt, %535, %536 : vector<2x1x128xf32>
    %538 = vector.broadcast %5 : vector<1x1x128xf32> to vector<2x1x128xf32>
    %539 = arith.cmpf oge, %486, %538 : vector<2x1x128xf32>
    %540 = vector.broadcast %7 : vector<1x1x128xf32> to vector<2x1x128xf32>
    %541 = arith.cmpf ole, %486, %540 : vector<2x1x128xf32>
    %542 = arith.andi %539, %541 : vector<2x1x128xi1>
    %543 = arith.andi %537, %542 : vector<2x1x128xi1>
    %cst_39 = arith.constant 1.000000e+08 : f32
    %544 = vector.shape_cast %468 : vector<2x1x1xf32> to vector<2x1x1xf32>
    %545 = vector.broadcast %544 : vector<2x1x1xf32> to vector<2x1x128xf32>
    %546 = vector.broadcast %cst_39 : f32 to vector<2x1x128xf32>
    %547 = arith.select %543, %545, %546 : vector<2x1x128xi1>, vector<2x1x128xf32>
    %cst_40 = arith.constant 0.000000e+00 : f32
    %548 = vector.broadcast %cst_40 : f32 to vector<2x1x128xf32>
    %549 = arith.cmpf ogt, %483, %548 : vector<2x1x128xf32>
    %cst_41 = arith.constant 0.000000e+00 : f32
    %550 = vector.broadcast %cst_41 : f32 to vector<2x1x1xf32>
    %551 = arith.cmpf olt, %465, %550 : vector<2x1x1xf32>
    %552 = vector.broadcast %551 : vector<2x1x1xi1> to vector<2x1x128xi1>
    %553 = arith.andi %549, %552 : vector<2x1x128xi1>
    %554 = arith.cmpf olt, %547, %441 : vector<2x1x128xf32>
    %555 = arith.select %554, %547, %441 : vector<2x1x128xi1>, vector<2x1x128xf32>
    %556 = vector.shape_cast %461 : vector<2x1x1xf32> to vector<2x1x1xf32>
    %557 = vector.broadcast %556 : vector<2x1x1xf32> to vector<2x1x128xf32>
    %558 = arith.select %554, %557, %444 : vector<2x1x128xi1>, vector<2x1x128xf32>
    %559 = vector.shape_cast %462 : vector<2x1x1xf32> to vector<2x1x1xf32>
    %560 = vector.broadcast %559 : vector<2x1x1xf32> to vector<2x1x128xf32>
    %561 = arith.select %554, %560, %447 : vector<2x1x128xi1>, vector<2x1x128xf32>
    %562 = vector.shape_cast %463 : vector<2x1x1xf32> to vector<2x1x1xf32>
    %563 = vector.broadcast %562 : vector<2x1x1xf32> to vector<2x1x128xf32>
    %564 = arith.select %554, %563, %450 : vector<2x1x128xi1>, vector<2x1x128xf32>
    %565 = vector.shape_cast %464 : vector<2x1x1xf32> to vector<2x1x1xf32>
    %566 = vector.broadcast %565 : vector<2x1x1xf32> to vector<2x1x128xf32>
    %567 = arith.select %554, %566, %453 : vector<2x1x128xi1>, vector<2x1x128xf32>
    %568 = vector.shape_cast %465 : vector<2x1x1xf32> to vector<2x1x1xf32>
    %569 = vector.broadcast %568 : vector<2x1x1xf32> to vector<2x1x128xf32>
    %570 = arith.select %554, %569, %456 : vector<2x1x128xi1>, vector<2x1x128xf32>
    %571 = arith.ori %457, %553 : vector<2x1x128xi1>
    %cst_42 = arith.constant -1.000000e+00 : f32
    %572 = vector.broadcast %cst_42 : f32 to vector<2x1x1xf32>
    %573 = arith.cmpf one, %465, %572 : vector<2x1x1xf32>
    %574 = arith.ori %460, %573 : vector<2x1x1xi1>
    %575 = vector.extract_strided_slice %12 {offsets = [0, 5, 0], sizes = [2, 1, 1], strides = [1, 1, 1]} : vector<2x8x8xf32> to vector<2x1x1xf32>
    %576 = vector.extract_strided_slice %12 {offsets = [0, 5, 1], sizes = [2, 1, 1], strides = [1, 1, 1]} : vector<2x8x8xf32> to vector<2x1x1xf32>
    %577 = vector.extract_strided_slice %12 {offsets = [0, 5, 2], sizes = [2, 1, 1], strides = [1, 1, 1]} : vector<2x8x8xf32> to vector<2x1x1xf32>
    %578 = vector.extract_strided_slice %12 {offsets = [0, 5, 3], sizes = [2, 1, 1], strides = [1, 1, 1]} : vector<2x8x8xf32> to vector<2x1x1xf32>
    %579 = vector.extract_strided_slice %12 {offsets = [0, 5, 4], sizes = [2, 1, 1], strides = [1, 1, 1]} : vector<2x8x8xf32> to vector<2x1x1xf32>
    %580 = arith.subf %577, %575 : vector<2x1x1xf32>
    %581 = arith.subf %578, %576 : vector<2x1x1xf32>
    %582 = arith.mulf %580, %581 : vector<2x1x1xf32>
    %583 = vector.broadcast %1 : vector<1x1x128xf32> to vector<2x1x128xf32>
    %584 = vector.broadcast %575 : vector<2x1x1xf32> to vector<2x1x128xf32>
    %585 = arith.subf %583, %584 : vector<2x1x128xf32>
    %586 = vector.broadcast %3 : vector<1x1x128xf32> to vector<2x1x128xf32>
    %587 = vector.broadcast %576 : vector<2x1x1xf32> to vector<2x1x128xf32>
    %588 = arith.subf %586, %587 : vector<2x1x128xf32>
    %589 = vector.broadcast %577 : vector<2x1x1xf32> to vector<2x1x128xf32>
    %590 = vector.broadcast %1 : vector<1x1x128xf32> to vector<2x1x128xf32>
    %591 = arith.subf %589, %590 : vector<2x1x128xf32>
    %592 = vector.broadcast %578 : vector<2x1x1xf32> to vector<2x1x128xf32>
    %593 = vector.broadcast %3 : vector<1x1x128xf32> to vector<2x1x128xf32>
    %594 = arith.subf %592, %593 : vector<2x1x128xf32>
    %595 = arith.minimumf %585, %591 : vector<2x1x128xf32>
    %596 = arith.minimumf %588, %594 : vector<2x1x128xf32>
    %597 = arith.minimumf %595, %596 : vector<2x1x128xf32>
    %598 = arith.maximumf %585, %591 : vector<2x1x128xf32>
    %599 = arith.maximumf %588, %594 : vector<2x1x128xf32>
    %600 = arith.maximumf %598, %599 : vector<2x1x128xf32>
    %601 = arith.addf %575, %577 : vector<2x1x1xf32>
    %cst_43 = arith.constant 5.000000e-01 : f32
    %602 = vector.broadcast %cst_43 : f32 to vector<2x1x1xf32>
    %603 = arith.mulf %601, %602 : vector<2x1x1xf32>
    %604 = arith.addf %576, %578 : vector<2x1x1xf32>
    %cst_44 = arith.constant 5.000000e-01 : f32
    %605 = vector.broadcast %cst_44 : f32 to vector<2x1x1xf32>
    %606 = arith.mulf %604, %605 : vector<2x1x1xf32>
    %607 = vector.broadcast %603 : vector<2x1x1xf32> to vector<2x1x128xf32>
    %608 = vector.broadcast %9 : vector<1x1x128xf32> to vector<2x1x128xf32>
    %609 = arith.subf %607, %608 : vector<2x1x128xf32>
    %610 = vector.broadcast %606 : vector<2x1x1xf32> to vector<2x1x128xf32>
    %611 = vector.broadcast %9 : vector<1x1x128xf32> to vector<2x1x128xf32>
    %612 = arith.subf %610, %611 : vector<2x1x128xf32>
    %613 = vector.broadcast %603 : vector<2x1x1xf32> to vector<2x1x128xf32>
    %614 = vector.broadcast %9 : vector<1x1x128xf32> to vector<2x1x128xf32>
    %615 = arith.addf %613, %614 : vector<2x1x128xf32>
    %616 = vector.broadcast %606 : vector<2x1x1xf32> to vector<2x1x128xf32>
    %617 = vector.broadcast %9 : vector<1x1x128xf32> to vector<2x1x128xf32>
    %618 = arith.addf %616, %617 : vector<2x1x128xf32>
    %619 = vector.broadcast %575 : vector<2x1x1xf32> to vector<2x1x128xf32>
    %620 = arith.cmpf ogt, %609, %619 : vector<2x1x128xf32>
    %621 = vector.shape_cast %575 : vector<2x1x1xf32> to vector<2x1x1xf32>
    %622 = vector.broadcast %621 : vector<2x1x1xf32> to vector<2x1x128xf32>
    %623 = arith.select %620, %609, %622 : vector<2x1x128xi1>, vector<2x1x128xf32>
    %624 = vector.broadcast %576 : vector<2x1x1xf32> to vector<2x1x128xf32>
    %625 = arith.cmpf ogt, %612, %624 : vector<2x1x128xf32>
    %626 = vector.shape_cast %576 : vector<2x1x1xf32> to vector<2x1x1xf32>
    %627 = vector.broadcast %626 : vector<2x1x1xf32> to vector<2x1x128xf32>
    %628 = arith.select %625, %612, %627 : vector<2x1x128xi1>, vector<2x1x128xf32>
    %629 = vector.broadcast %577 : vector<2x1x1xf32> to vector<2x1x128xf32>
    %630 = arith.cmpf ogt, %615, %629 : vector<2x1x128xf32>
    %631 = vector.shape_cast %577 : vector<2x1x1xf32> to vector<2x1x1xf32>
    %632 = vector.broadcast %631 : vector<2x1x1xf32> to vector<2x1x128xf32>
    %633 = arith.select %630, %632, %615 : vector<2x1x128xi1>, vector<2x1x128xf32>
    %634 = vector.broadcast %578 : vector<2x1x1xf32> to vector<2x1x128xf32>
    %635 = arith.cmpf ogt, %618, %634 : vector<2x1x128xf32>
    %636 = vector.shape_cast %578 : vector<2x1x1xf32> to vector<2x1x1xf32>
    %637 = vector.broadcast %636 : vector<2x1x1xf32> to vector<2x1x128xf32>
    %638 = arith.select %635, %637, %618 : vector<2x1x128xi1>, vector<2x1x128xf32>
    %639 = vector.broadcast %1 : vector<1x1x128xf32> to vector<2x1x128xf32>
    %640 = arith.subf %639, %623 : vector<2x1x128xf32>
    %641 = vector.broadcast %1 : vector<1x1x128xf32> to vector<2x1x128xf32>
    %642 = arith.subf %633, %641 : vector<2x1x128xf32>
    %643 = arith.minimumf %640, %642 : vector<2x1x128xf32>
    %644 = vector.broadcast %3 : vector<1x1x128xf32> to vector<2x1x128xf32>
    %645 = arith.subf %644, %628 : vector<2x1x128xf32>
    %646 = vector.broadcast %3 : vector<1x1x128xf32> to vector<2x1x128xf32>
    %647 = arith.subf %638, %646 : vector<2x1x128xf32>
    %648 = arith.minimumf %645, %647 : vector<2x1x128xf32>
    %649 = arith.minimumf %643, %648 : vector<2x1x128xf32>
    %cst_45 = arith.constant 0.000000e+00 : f32
    %650 = vector.broadcast %cst_45 : f32 to vector<2x1x128xf32>
    %651 = arith.cmpf ogt, %649, %650 : vector<2x1x128xf32>
    %652 = vector.broadcast %5 : vector<1x1x128xf32> to vector<2x1x128xf32>
    %653 = arith.cmpf oge, %600, %652 : vector<2x1x128xf32>
    %654 = vector.broadcast %7 : vector<1x1x128xf32> to vector<2x1x128xf32>
    %655 = arith.cmpf ole, %600, %654 : vector<2x1x128xf32>
    %656 = arith.andi %653, %655 : vector<2x1x128xi1>
    %657 = arith.andi %651, %656 : vector<2x1x128xi1>
    %cst_46 = arith.constant 1.000000e+08 : f32
    %658 = vector.shape_cast %582 : vector<2x1x1xf32> to vector<2x1x1xf32>
    %659 = vector.broadcast %658 : vector<2x1x1xf32> to vector<2x1x128xf32>
    %660 = vector.broadcast %cst_46 : f32 to vector<2x1x128xf32>
    %661 = arith.select %657, %659, %660 : vector<2x1x128xi1>, vector<2x1x128xf32>
    %cst_47 = arith.constant 0.000000e+00 : f32
    %662 = vector.broadcast %cst_47 : f32 to vector<2x1x128xf32>
    %663 = arith.cmpf ogt, %597, %662 : vector<2x1x128xf32>
    %cst_48 = arith.constant 0.000000e+00 : f32
    %664 = vector.broadcast %cst_48 : f32 to vector<2x1x1xf32>
    %665 = arith.cmpf olt, %579, %664 : vector<2x1x1xf32>
    %666 = vector.broadcast %665 : vector<2x1x1xi1> to vector<2x1x128xi1>
    %667 = arith.andi %663, %666 : vector<2x1x128xi1>
    %668 = arith.cmpf olt, %661, %555 : vector<2x1x128xf32>
    %669 = arith.select %668, %661, %555 : vector<2x1x128xi1>, vector<2x1x128xf32>
    %670 = vector.shape_cast %575 : vector<2x1x1xf32> to vector<2x1x1xf32>
    %671 = vector.broadcast %670 : vector<2x1x1xf32> to vector<2x1x128xf32>
    %672 = arith.select %668, %671, %558 : vector<2x1x128xi1>, vector<2x1x128xf32>
    %673 = vector.shape_cast %576 : vector<2x1x1xf32> to vector<2x1x1xf32>
    %674 = vector.broadcast %673 : vector<2x1x1xf32> to vector<2x1x128xf32>
    %675 = arith.select %668, %674, %561 : vector<2x1x128xi1>, vector<2x1x128xf32>
    %676 = vector.shape_cast %577 : vector<2x1x1xf32> to vector<2x1x1xf32>
    %677 = vector.broadcast %676 : vector<2x1x1xf32> to vector<2x1x128xf32>
    %678 = arith.select %668, %677, %564 : vector<2x1x128xi1>, vector<2x1x128xf32>
    %679 = vector.shape_cast %578 : vector<2x1x1xf32> to vector<2x1x1xf32>
    %680 = vector.broadcast %679 : vector<2x1x1xf32> to vector<2x1x128xf32>
    %681 = arith.select %668, %680, %567 : vector<2x1x128xi1>, vector<2x1x128xf32>
    %682 = vector.shape_cast %579 : vector<2x1x1xf32> to vector<2x1x1xf32>
    %683 = vector.broadcast %682 : vector<2x1x1xf32> to vector<2x1x128xf32>
    %684 = arith.select %668, %683, %570 : vector<2x1x128xi1>, vector<2x1x128xf32>
    %685 = arith.ori %571, %667 : vector<2x1x128xi1>
    %cst_49 = arith.constant -1.000000e+00 : f32
    %686 = vector.broadcast %cst_49 : f32 to vector<2x1x1xf32>
    %687 = arith.cmpf one, %579, %686 : vector<2x1x1xf32>
    %688 = arith.ori %574, %687 : vector<2x1x1xi1>
    %689 = vector.extract_strided_slice %12 {offsets = [0, 6, 0], sizes = [2, 1, 1], strides = [1, 1, 1]} : vector<2x8x8xf32> to vector<2x1x1xf32>
    %690 = vector.extract_strided_slice %12 {offsets = [0, 6, 1], sizes = [2, 1, 1], strides = [1, 1, 1]} : vector<2x8x8xf32> to vector<2x1x1xf32>
    %691 = vector.extract_strided_slice %12 {offsets = [0, 6, 2], sizes = [2, 1, 1], strides = [1, 1, 1]} : vector<2x8x8xf32> to vector<2x1x1xf32>
    %692 = vector.extract_strided_slice %12 {offsets = [0, 6, 3], sizes = [2, 1, 1], strides = [1, 1, 1]} : vector<2x8x8xf32> to vector<2x1x1xf32>
    %693 = vector.extract_strided_slice %12 {offsets = [0, 6, 4], sizes = [2, 1, 1], strides = [1, 1, 1]} : vector<2x8x8xf32> to vector<2x1x1xf32>
    %694 = arith.subf %691, %689 : vector<2x1x1xf32>
    %695 = arith.subf %692, %690 : vector<2x1x1xf32>
    %696 = arith.mulf %694, %695 : vector<2x1x1xf32>
    %697 = vector.broadcast %1 : vector<1x1x128xf32> to vector<2x1x128xf32>
    %698 = vector.broadcast %689 : vector<2x1x1xf32> to vector<2x1x128xf32>
    %699 = arith.subf %697, %698 : vector<2x1x128xf32>
    %700 = vector.broadcast %3 : vector<1x1x128xf32> to vector<2x1x128xf32>
    %701 = vector.broadcast %690 : vector<2x1x1xf32> to vector<2x1x128xf32>
    %702 = arith.subf %700, %701 : vector<2x1x128xf32>
    %703 = vector.broadcast %691 : vector<2x1x1xf32> to vector<2x1x128xf32>
    %704 = vector.broadcast %1 : vector<1x1x128xf32> to vector<2x1x128xf32>
    %705 = arith.subf %703, %704 : vector<2x1x128xf32>
    %706 = vector.broadcast %692 : vector<2x1x1xf32> to vector<2x1x128xf32>
    %707 = vector.broadcast %3 : vector<1x1x128xf32> to vector<2x1x128xf32>
    %708 = arith.subf %706, %707 : vector<2x1x128xf32>
    %709 = arith.minimumf %699, %705 : vector<2x1x128xf32>
    %710 = arith.minimumf %702, %708 : vector<2x1x128xf32>
    %711 = arith.minimumf %709, %710 : vector<2x1x128xf32>
    %712 = arith.maximumf %699, %705 : vector<2x1x128xf32>
    %713 = arith.maximumf %702, %708 : vector<2x1x128xf32>
    %714 = arith.maximumf %712, %713 : vector<2x1x128xf32>
    %715 = arith.addf %689, %691 : vector<2x1x1xf32>
    %cst_50 = arith.constant 5.000000e-01 : f32
    %716 = vector.broadcast %cst_50 : f32 to vector<2x1x1xf32>
    %717 = arith.mulf %715, %716 : vector<2x1x1xf32>
    %718 = arith.addf %690, %692 : vector<2x1x1xf32>
    %cst_51 = arith.constant 5.000000e-01 : f32
    %719 = vector.broadcast %cst_51 : f32 to vector<2x1x1xf32>
    %720 = arith.mulf %718, %719 : vector<2x1x1xf32>
    %721 = vector.broadcast %717 : vector<2x1x1xf32> to vector<2x1x128xf32>
    %722 = vector.broadcast %9 : vector<1x1x128xf32> to vector<2x1x128xf32>
    %723 = arith.subf %721, %722 : vector<2x1x128xf32>
    %724 = vector.broadcast %720 : vector<2x1x1xf32> to vector<2x1x128xf32>
    %725 = vector.broadcast %9 : vector<1x1x128xf32> to vector<2x1x128xf32>
    %726 = arith.subf %724, %725 : vector<2x1x128xf32>
    %727 = vector.broadcast %717 : vector<2x1x1xf32> to vector<2x1x128xf32>
    %728 = vector.broadcast %9 : vector<1x1x128xf32> to vector<2x1x128xf32>
    %729 = arith.addf %727, %728 : vector<2x1x128xf32>
    %730 = vector.broadcast %720 : vector<2x1x1xf32> to vector<2x1x128xf32>
    %731 = vector.broadcast %9 : vector<1x1x128xf32> to vector<2x1x128xf32>
    %732 = arith.addf %730, %731 : vector<2x1x128xf32>
    %733 = vector.broadcast %689 : vector<2x1x1xf32> to vector<2x1x128xf32>
    %734 = arith.cmpf ogt, %723, %733 : vector<2x1x128xf32>
    %735 = vector.shape_cast %689 : vector<2x1x1xf32> to vector<2x1x1xf32>
    %736 = vector.broadcast %735 : vector<2x1x1xf32> to vector<2x1x128xf32>
    %737 = arith.select %734, %723, %736 : vector<2x1x128xi1>, vector<2x1x128xf32>
    %738 = vector.broadcast %690 : vector<2x1x1xf32> to vector<2x1x128xf32>
    %739 = arith.cmpf ogt, %726, %738 : vector<2x1x128xf32>
    %740 = vector.shape_cast %690 : vector<2x1x1xf32> to vector<2x1x1xf32>
    %741 = vector.broadcast %740 : vector<2x1x1xf32> to vector<2x1x128xf32>
    %742 = arith.select %739, %726, %741 : vector<2x1x128xi1>, vector<2x1x128xf32>
    %743 = vector.broadcast %691 : vector<2x1x1xf32> to vector<2x1x128xf32>
    %744 = arith.cmpf ogt, %729, %743 : vector<2x1x128xf32>
    %745 = vector.shape_cast %691 : vector<2x1x1xf32> to vector<2x1x1xf32>
    %746 = vector.broadcast %745 : vector<2x1x1xf32> to vector<2x1x128xf32>
    %747 = arith.select %744, %746, %729 : vector<2x1x128xi1>, vector<2x1x128xf32>
    %748 = vector.broadcast %692 : vector<2x1x1xf32> to vector<2x1x128xf32>
    %749 = arith.cmpf ogt, %732, %748 : vector<2x1x128xf32>
    %750 = vector.shape_cast %692 : vector<2x1x1xf32> to vector<2x1x1xf32>
    %751 = vector.broadcast %750 : vector<2x1x1xf32> to vector<2x1x128xf32>
    %752 = arith.select %749, %751, %732 : vector<2x1x128xi1>, vector<2x1x128xf32>
    %753 = vector.broadcast %1 : vector<1x1x128xf32> to vector<2x1x128xf32>
    %754 = arith.subf %753, %737 : vector<2x1x128xf32>
    %755 = vector.broadcast %1 : vector<1x1x128xf32> to vector<2x1x128xf32>
    %756 = arith.subf %747, %755 : vector<2x1x128xf32>
    %757 = arith.minimumf %754, %756 : vector<2x1x128xf32>
    %758 = vector.broadcast %3 : vector<1x1x128xf32> to vector<2x1x128xf32>
    %759 = arith.subf %758, %742 : vector<2x1x128xf32>
    %760 = vector.broadcast %3 : vector<1x1x128xf32> to vector<2x1x128xf32>
    %761 = arith.subf %752, %760 : vector<2x1x128xf32>
    %762 = arith.minimumf %759, %761 : vector<2x1x128xf32>
    %763 = arith.minimumf %757, %762 : vector<2x1x128xf32>
    %cst_52 = arith.constant 0.000000e+00 : f32
    %764 = vector.broadcast %cst_52 : f32 to vector<2x1x128xf32>
    %765 = arith.cmpf ogt, %763, %764 : vector<2x1x128xf32>
    %766 = vector.broadcast %5 : vector<1x1x128xf32> to vector<2x1x128xf32>
    %767 = arith.cmpf oge, %714, %766 : vector<2x1x128xf32>
    %768 = vector.broadcast %7 : vector<1x1x128xf32> to vector<2x1x128xf32>
    %769 = arith.cmpf ole, %714, %768 : vector<2x1x128xf32>
    %770 = arith.andi %767, %769 : vector<2x1x128xi1>
    %771 = arith.andi %765, %770 : vector<2x1x128xi1>
    %cst_53 = arith.constant 1.000000e+08 : f32
    %772 = vector.shape_cast %696 : vector<2x1x1xf32> to vector<2x1x1xf32>
    %773 = vector.broadcast %772 : vector<2x1x1xf32> to vector<2x1x128xf32>
    %774 = vector.broadcast %cst_53 : f32 to vector<2x1x128xf32>
    %775 = arith.select %771, %773, %774 : vector<2x1x128xi1>, vector<2x1x128xf32>
    %cst_54 = arith.constant 0.000000e+00 : f32
    %776 = vector.broadcast %cst_54 : f32 to vector<2x1x128xf32>
    %777 = arith.cmpf ogt, %711, %776 : vector<2x1x128xf32>
    %cst_55 = arith.constant 0.000000e+00 : f32
    %778 = vector.broadcast %cst_55 : f32 to vector<2x1x1xf32>
    %779 = arith.cmpf olt, %693, %778 : vector<2x1x1xf32>
    %780 = vector.broadcast %779 : vector<2x1x1xi1> to vector<2x1x128xi1>
    %781 = arith.andi %777, %780 : vector<2x1x128xi1>
    %782 = arith.cmpf olt, %775, %669 : vector<2x1x128xf32>
    %783 = arith.select %782, %775, %669 : vector<2x1x128xi1>, vector<2x1x128xf32>
    %784 = vector.shape_cast %689 : vector<2x1x1xf32> to vector<2x1x1xf32>
    %785 = vector.broadcast %784 : vector<2x1x1xf32> to vector<2x1x128xf32>
    %786 = arith.select %782, %785, %672 : vector<2x1x128xi1>, vector<2x1x128xf32>
    %787 = vector.shape_cast %690 : vector<2x1x1xf32> to vector<2x1x1xf32>
    %788 = vector.broadcast %787 : vector<2x1x1xf32> to vector<2x1x128xf32>
    %789 = arith.select %782, %788, %675 : vector<2x1x128xi1>, vector<2x1x128xf32>
    %790 = vector.shape_cast %691 : vector<2x1x1xf32> to vector<2x1x1xf32>
    %791 = vector.broadcast %790 : vector<2x1x1xf32> to vector<2x1x128xf32>
    %792 = arith.select %782, %791, %678 : vector<2x1x128xi1>, vector<2x1x128xf32>
    %793 = vector.shape_cast %692 : vector<2x1x1xf32> to vector<2x1x1xf32>
    %794 = vector.broadcast %793 : vector<2x1x1xf32> to vector<2x1x128xf32>
    %795 = arith.select %782, %794, %681 : vector<2x1x128xi1>, vector<2x1x128xf32>
    %796 = vector.shape_cast %693 : vector<2x1x1xf32> to vector<2x1x1xf32>
    %797 = vector.broadcast %796 : vector<2x1x1xf32> to vector<2x1x128xf32>
    %798 = arith.select %782, %797, %684 : vector<2x1x128xi1>, vector<2x1x128xf32>
    %799 = arith.ori %685, %781 : vector<2x1x128xi1>
    %cst_56 = arith.constant -1.000000e+00 : f32
    %800 = vector.broadcast %cst_56 : f32 to vector<2x1x1xf32>
    %801 = arith.cmpf one, %693, %800 : vector<2x1x1xf32>
    %802 = arith.ori %688, %801 : vector<2x1x1xi1>
    %803 = vector.extract_strided_slice %12 {offsets = [0, 7, 0], sizes = [2, 1, 1], strides = [1, 1, 1]} : vector<2x8x8xf32> to vector<2x1x1xf32>
    %804 = vector.extract_strided_slice %12 {offsets = [0, 7, 1], sizes = [2, 1, 1], strides = [1, 1, 1]} : vector<2x8x8xf32> to vector<2x1x1xf32>
    %805 = vector.extract_strided_slice %12 {offsets = [0, 7, 2], sizes = [2, 1, 1], strides = [1, 1, 1]} : vector<2x8x8xf32> to vector<2x1x1xf32>
    %806 = vector.extract_strided_slice %12 {offsets = [0, 7, 3], sizes = [2, 1, 1], strides = [1, 1, 1]} : vector<2x8x8xf32> to vector<2x1x1xf32>
    %807 = vector.extract_strided_slice %12 {offsets = [0, 7, 4], sizes = [2, 1, 1], strides = [1, 1, 1]} : vector<2x8x8xf32> to vector<2x1x1xf32>
    %808 = arith.subf %805, %803 : vector<2x1x1xf32>
    %809 = arith.subf %806, %804 : vector<2x1x1xf32>
    %810 = arith.mulf %808, %809 : vector<2x1x1xf32>
    %811 = vector.broadcast %1 : vector<1x1x128xf32> to vector<2x1x128xf32>
    %812 = vector.broadcast %803 : vector<2x1x1xf32> to vector<2x1x128xf32>
    %813 = arith.subf %811, %812 : vector<2x1x128xf32>
    %814 = vector.broadcast %3 : vector<1x1x128xf32> to vector<2x1x128xf32>
    %815 = vector.broadcast %804 : vector<2x1x1xf32> to vector<2x1x128xf32>
    %816 = arith.subf %814, %815 : vector<2x1x128xf32>
    %817 = vector.broadcast %805 : vector<2x1x1xf32> to vector<2x1x128xf32>
    %818 = vector.broadcast %1 : vector<1x1x128xf32> to vector<2x1x128xf32>
    %819 = arith.subf %817, %818 : vector<2x1x128xf32>
    %820 = vector.broadcast %806 : vector<2x1x1xf32> to vector<2x1x128xf32>
    %821 = vector.broadcast %3 : vector<1x1x128xf32> to vector<2x1x128xf32>
    %822 = arith.subf %820, %821 : vector<2x1x128xf32>
    %823 = arith.minimumf %813, %819 : vector<2x1x128xf32>
    %824 = arith.minimumf %816, %822 : vector<2x1x128xf32>
    %825 = arith.minimumf %823, %824 : vector<2x1x128xf32>
    %826 = arith.maximumf %813, %819 : vector<2x1x128xf32>
    %827 = arith.maximumf %816, %822 : vector<2x1x128xf32>
    %828 = arith.maximumf %826, %827 : vector<2x1x128xf32>
    %829 = arith.addf %803, %805 : vector<2x1x1xf32>
    %cst_57 = arith.constant 5.000000e-01 : f32
    %830 = vector.broadcast %cst_57 : f32 to vector<2x1x1xf32>
    %831 = arith.mulf %829, %830 : vector<2x1x1xf32>
    %832 = arith.addf %804, %806 : vector<2x1x1xf32>
    %cst_58 = arith.constant 5.000000e-01 : f32
    %833 = vector.broadcast %cst_58 : f32 to vector<2x1x1xf32>
    %834 = arith.mulf %832, %833 : vector<2x1x1xf32>
    %835 = vector.broadcast %831 : vector<2x1x1xf32> to vector<2x1x128xf32>
    %836 = vector.broadcast %9 : vector<1x1x128xf32> to vector<2x1x128xf32>
    %837 = arith.subf %835, %836 : vector<2x1x128xf32>
    %838 = vector.broadcast %834 : vector<2x1x1xf32> to vector<2x1x128xf32>
    %839 = vector.broadcast %9 : vector<1x1x128xf32> to vector<2x1x128xf32>
    %840 = arith.subf %838, %839 : vector<2x1x128xf32>
    %841 = vector.broadcast %831 : vector<2x1x1xf32> to vector<2x1x128xf32>
    %842 = vector.broadcast %9 : vector<1x1x128xf32> to vector<2x1x128xf32>
    %843 = arith.addf %841, %842 : vector<2x1x128xf32>
    %844 = vector.broadcast %834 : vector<2x1x1xf32> to vector<2x1x128xf32>
    %845 = vector.broadcast %9 : vector<1x1x128xf32> to vector<2x1x128xf32>
    %846 = arith.addf %844, %845 : vector<2x1x128xf32>
    %847 = vector.broadcast %803 : vector<2x1x1xf32> to vector<2x1x128xf32>
    %848 = arith.cmpf ogt, %837, %847 : vector<2x1x128xf32>
    %849 = vector.shape_cast %803 : vector<2x1x1xf32> to vector<2x1x1xf32>
    %850 = vector.broadcast %849 : vector<2x1x1xf32> to vector<2x1x128xf32>
    %851 = arith.select %848, %837, %850 : vector<2x1x128xi1>, vector<2x1x128xf32>
    %852 = vector.broadcast %804 : vector<2x1x1xf32> to vector<2x1x128xf32>
    %853 = arith.cmpf ogt, %840, %852 : vector<2x1x128xf32>
    %854 = vector.shape_cast %804 : vector<2x1x1xf32> to vector<2x1x1xf32>
    %855 = vector.broadcast %854 : vector<2x1x1xf32> to vector<2x1x128xf32>
    %856 = arith.select %853, %840, %855 : vector<2x1x128xi1>, vector<2x1x128xf32>
    %857 = vector.broadcast %805 : vector<2x1x1xf32> to vector<2x1x128xf32>
    %858 = arith.cmpf ogt, %843, %857 : vector<2x1x128xf32>
    %859 = vector.shape_cast %805 : vector<2x1x1xf32> to vector<2x1x1xf32>
    %860 = vector.broadcast %859 : vector<2x1x1xf32> to vector<2x1x128xf32>
    %861 = arith.select %858, %860, %843 : vector<2x1x128xi1>, vector<2x1x128xf32>
    %862 = vector.broadcast %806 : vector<2x1x1xf32> to vector<2x1x128xf32>
    %863 = arith.cmpf ogt, %846, %862 : vector<2x1x128xf32>
    %864 = vector.shape_cast %806 : vector<2x1x1xf32> to vector<2x1x1xf32>
    %865 = vector.broadcast %864 : vector<2x1x1xf32> to vector<2x1x128xf32>
    %866 = arith.select %863, %865, %846 : vector<2x1x128xi1>, vector<2x1x128xf32>
    %867 = vector.broadcast %1 : vector<1x1x128xf32> to vector<2x1x128xf32>
    %868 = arith.subf %867, %851 : vector<2x1x128xf32>
    %869 = vector.broadcast %1 : vector<1x1x128xf32> to vector<2x1x128xf32>
    %870 = arith.subf %861, %869 : vector<2x1x128xf32>
    %871 = arith.minimumf %868, %870 : vector<2x1x128xf32>
    %872 = vector.broadcast %3 : vector<1x1x128xf32> to vector<2x1x128xf32>
    %873 = arith.subf %872, %856 : vector<2x1x128xf32>
    %874 = vector.broadcast %3 : vector<1x1x128xf32> to vector<2x1x128xf32>
    %875 = arith.subf %866, %874 : vector<2x1x128xf32>
    %876 = arith.minimumf %873, %875 : vector<2x1x128xf32>
    %877 = arith.minimumf %871, %876 : vector<2x1x128xf32>
    %cst_59 = arith.constant 0.000000e+00 : f32
    %878 = vector.broadcast %cst_59 : f32 to vector<2x1x128xf32>
    %879 = arith.cmpf ogt, %877, %878 : vector<2x1x128xf32>
    %880 = vector.broadcast %5 : vector<1x1x128xf32> to vector<2x1x128xf32>
    %881 = arith.cmpf oge, %828, %880 : vector<2x1x128xf32>
    %882 = vector.broadcast %7 : vector<1x1x128xf32> to vector<2x1x128xf32>
    %883 = arith.cmpf ole, %828, %882 : vector<2x1x128xf32>
    %884 = arith.andi %881, %883 : vector<2x1x128xi1>
    %885 = arith.andi %879, %884 : vector<2x1x128xi1>
    %cst_60 = arith.constant 1.000000e+08 : f32
    %886 = vector.shape_cast %810 : vector<2x1x1xf32> to vector<2x1x1xf32>
    %887 = vector.broadcast %886 : vector<2x1x1xf32> to vector<2x1x128xf32>
    %888 = vector.broadcast %cst_60 : f32 to vector<2x1x128xf32>
    %889 = arith.select %885, %887, %888 : vector<2x1x128xi1>, vector<2x1x128xf32>
    %cst_61 = arith.constant 0.000000e+00 : f32
    %890 = vector.broadcast %cst_61 : f32 to vector<2x1x128xf32>
    %891 = arith.cmpf ogt, %825, %890 : vector<2x1x128xf32>
    %cst_62 = arith.constant 0.000000e+00 : f32
    %892 = vector.broadcast %cst_62 : f32 to vector<2x1x1xf32>
    %893 = arith.cmpf olt, %807, %892 : vector<2x1x1xf32>
    %894 = vector.broadcast %893 : vector<2x1x1xi1> to vector<2x1x128xi1>
    %895 = arith.andi %891, %894 : vector<2x1x128xi1>
    %896 = arith.cmpf olt, %889, %783 : vector<2x1x128xf32>
    %897 = arith.select %896, %889, %783 : vector<2x1x128xi1>, vector<2x1x128xf32>
    %898 = vector.shape_cast %803 : vector<2x1x1xf32> to vector<2x1x1xf32>
    %899 = vector.broadcast %898 : vector<2x1x1xf32> to vector<2x1x128xf32>
    %900 = arith.select %896, %899, %786 : vector<2x1x128xi1>, vector<2x1x128xf32>
    %901 = vector.shape_cast %804 : vector<2x1x1xf32> to vector<2x1x1xf32>
    %902 = vector.broadcast %901 : vector<2x1x1xf32> to vector<2x1x128xf32>
    %903 = arith.select %896, %902, %789 : vector<2x1x128xi1>, vector<2x1x128xf32>
    %904 = vector.shape_cast %805 : vector<2x1x1xf32> to vector<2x1x1xf32>
    %905 = vector.broadcast %904 : vector<2x1x1xf32> to vector<2x1x128xf32>
    %906 = arith.select %896, %905, %792 : vector<2x1x128xi1>, vector<2x1x128xf32>
    %907 = vector.shape_cast %806 : vector<2x1x1xf32> to vector<2x1x1xf32>
    %908 = vector.broadcast %907 : vector<2x1x1xf32> to vector<2x1x128xf32>
    %909 = arith.select %896, %908, %795 : vector<2x1x128xi1>, vector<2x1x128xf32>
    %910 = vector.shape_cast %807 : vector<2x1x1xf32> to vector<2x1x1xf32>
    %911 = vector.broadcast %910 : vector<2x1x1xf32> to vector<2x1x128xf32>
    %912 = arith.select %896, %911, %798 : vector<2x1x128xi1>, vector<2x1x128xf32>
    %913 = arith.ori %799, %895 : vector<2x1x128xi1>
    %cst_63 = arith.constant -1.000000e+00 : f32
    %914 = vector.broadcast %cst_63 : f32 to vector<2x1x1xf32>
    %915 = arith.cmpf one, %807, %914 : vector<2x1x1xf32>
    %916 = arith.ori %802, %915 : vector<2x1x1xi1>
    %917 = vector.broadcast %1 : vector<1x1x128xf32> to vector<2x1x128xf32>
    %918 = arith.subf %917, %900 : vector<2x1x128xf32>
    %919 = vector.broadcast %3 : vector<1x1x128xf32> to vector<2x1x128xf32>
    %920 = arith.subf %919, %903 : vector<2x1x128xf32>
    %921 = vector.broadcast %1 : vector<1x1x128xf32> to vector<2x1x128xf32>
    %922 = arith.subf %906, %921 : vector<2x1x128xf32>
    %923 = vector.broadcast %3 : vector<1x1x128xf32> to vector<2x1x128xf32>
    %924 = arith.subf %909, %923 : vector<2x1x128xf32>
    %cst_64 = arith.constant 1.000000e+08 : f32
    %925 = vector.broadcast %cst_64 : f32 to vector<2x1x128xf32>
    %926 = arith.cmpf oeq, %897, %925 : vector<2x1x128xf32>
    %cst_65 = arith.constant 4.000000e+00 : f32
    %927 = vector.broadcast %cst_65 : f32 to vector<2x1x128xf32>
    %928 = arith.select %926, %927, %912 : vector<2x1x128xi1>, vector<2x1x128xf32>
    %cst_66 = arith.constant 0.000000e+00 : f32
    %cst_67 = arith.constant 1.000000e+00 : f32
    %929 = vector.broadcast %cst_66 : f32 to vector<2x1x128xf32>
    %930 = vector.broadcast %cst_67 : f32 to vector<2x1x128xf32>
    %931 = arith.select %913, %929, %930 : vector<2x1x128xi1>, vector<2x1x128xf32>
    %cst_68 = arith.constant 4.000000e+00 : f32
    %932 = vector.shape_cast %916 : vector<2x1x1xi1> to vector<2x1x1xi1>
    %933 = vector.broadcast %932 : vector<2x1x1xi1> to vector<2x1x128xi1>
    %934 = vector.broadcast %cst_68 : f32 to vector<2x1x128xf32>
    %935 = arith.select %933, %928, %934 : vector<2x1x128xi1>, vector<2x1x128xf32>
    %cst_69 = arith.constant 0.000000e+00 : f32
    %936 = vector.shape_cast %916 : vector<2x1x1xi1> to vector<2x1x1xi1>
    %937 = vector.broadcast %936 : vector<2x1x1xi1> to vector<2x1x128xi1>
    %938 = vector.broadcast %cst_69 : f32 to vector<2x1x128xf32>
    %939 = arith.select %937, %931, %938 : vector<2x1x128xi1>, vector<2x1x128xf32>
    %cst_70 = arith.constant 0.000000e+00 : f32
    %940 = vector.shape_cast %916 : vector<2x1x1xi1> to vector<2x1x1xi1>
    %941 = vector.broadcast %940 : vector<2x1x1xi1> to vector<2x1x128xi1>
    %942 = vector.broadcast %cst_70 : f32 to vector<2x1x128xf32>
    %943 = arith.select %941, %918, %942 : vector<2x1x128xi1>, vector<2x1x128xf32>
    %944 = vector.broadcast %11 : vector<1x1x128xf32> to vector<2x1x128xf32>
    %945 = arith.mulf %943, %944 : vector<2x1x128xf32>
    %cst_71 = arith.constant 0.000000e+00 : f32
    %946 = vector.shape_cast %916 : vector<2x1x1xi1> to vector<2x1x1xi1>
    %947 = vector.broadcast %946 : vector<2x1x1xi1> to vector<2x1x128xi1>
    %948 = vector.broadcast %cst_71 : f32 to vector<2x1x128xf32>
    %949 = arith.select %947, %920, %948 : vector<2x1x128xi1>, vector<2x1x128xf32>
    %950 = vector.broadcast %11 : vector<1x1x128xf32> to vector<2x1x128xf32>
    %951 = arith.mulf %949, %950 : vector<2x1x128xf32>
    %cst_72 = arith.constant 0.000000e+00 : f32
    %952 = vector.shape_cast %916 : vector<2x1x1xi1> to vector<2x1x1xi1>
    %953 = vector.broadcast %952 : vector<2x1x1xi1> to vector<2x1x128xi1>
    %954 = vector.broadcast %cst_72 : f32 to vector<2x1x128xf32>
    %955 = arith.select %953, %922, %954 : vector<2x1x128xi1>, vector<2x1x128xf32>
    %956 = vector.broadcast %11 : vector<1x1x128xf32> to vector<2x1x128xf32>
    %957 = arith.mulf %955, %956 : vector<2x1x128xf32>
    %cst_73 = arith.constant 0.000000e+00 : f32
    %958 = vector.shape_cast %916 : vector<2x1x1xi1> to vector<2x1x1xi1>
    %959 = vector.broadcast %958 : vector<2x1x1xi1> to vector<2x1x128xi1>
    %960 = vector.broadcast %cst_73 : f32 to vector<2x1x128xf32>
    %961 = arith.select %959, %924, %960 : vector<2x1x128xi1>, vector<2x1x128xf32>
    %962 = vector.broadcast %11 : vector<1x1x128xf32> to vector<2x1x128xf32>
    %963 = arith.mulf %961, %962 : vector<2x1x128xf32>
    %c0_74 = arith.constant 0 : index
    %c0_75 = arith.constant 0 : index
    %c0_76 = arith.constant 0 : index
    %964 = vector.load %arg3[%c0_74, %c0_75, %c0_76] : memref<2x6x128xf32, #tpu.memory_space<vmem>>, vector<2x1x128xf32>
    tpu.vector_store %arg3[%c0_74, %c0_75, %c0_76], %945 {strides = array<i32>} : memref<2x6x128xf32, #tpu.memory_space<vmem>>, vector<2x1x128xf32>,
    %c0_77 = arith.constant 0 : index
    %c1_78 = arith.constant 1 : index
    %c0_79 = arith.constant 0 : index
    %965 = vector.load %arg3[%c0_77, %c1_78, %c0_79] : memref<2x6x128xf32, #tpu.memory_space<vmem>>, vector<2x1x128xf32>
    tpu.vector_store %arg3[%c0_77, %c1_78, %c0_79], %951 {strides = array<i32>} : memref<2x6x128xf32, #tpu.memory_space<vmem>>, vector<2x1x128xf32>,
    %c0_80 = arith.constant 0 : index
    %c2_81 = arith.constant 2 : index
    %c0_82 = arith.constant 0 : index
    %966 = vector.load %arg3[%c0_80, %c2_81, %c0_82] : memref<2x6x128xf32, #tpu.memory_space<vmem>>, vector<2x1x128xf32>
    tpu.vector_store %arg3[%c0_80, %c2_81, %c0_82], %957 {strides = array<i32>} : memref<2x6x128xf32, #tpu.memory_space<vmem>>, vector<2x1x128xf32>,
    %c0_83 = arith.constant 0 : index
    %c3_84 = arith.constant 3 : index
    %c0_85 = arith.constant 0 : index
    %967 = vector.load %arg3[%c0_83, %c3_84, %c0_85] : memref<2x6x128xf32, #tpu.memory_space<vmem>>, vector<2x1x128xf32>
    tpu.vector_store %arg3[%c0_83, %c3_84, %c0_85], %963 {strides = array<i32>} : memref<2x6x128xf32, #tpu.memory_space<vmem>>, vector<2x1x128xf32>,
    %c0_86 = arith.constant 0 : index
    %c4_87 = arith.constant 4 : index
    %c0_88 = arith.constant 0 : index
    %968 = vector.load %arg3[%c0_86, %c4_87, %c0_88] : memref<2x6x128xf32, #tpu.memory_space<vmem>>, vector<2x1x128xf32>
    tpu.vector_store %arg3[%c0_86, %c4_87, %c0_88], %935 {strides = array<i32>} : memref<2x6x128xf32, #tpu.memory_space<vmem>>, vector<2x1x128xf32>,
    %c0_89 = arith.constant 0 : index
    %c5_90 = arith.constant 5 : index
    %c0_91 = arith.constant 0 : index
    %969 = vector.load %arg3[%c0_89, %c5_90, %c0_91] : memref<2x6x128xf32, #tpu.memory_space<vmem>>, vector<2x1x128xf32>
    tpu.vector_store %arg3[%c0_89, %c5_90, %c0_91], %939 {strides = array<i32>} : memref<2x6x128xf32, #tpu.memory_space<vmem>>, vector<2x1x128xf32>,
    return
  }
  func.func @transform_0(%arg0: i32) -> (i32, i32) {
    %c0_i32 = arith.constant 0 : i32
    %c0_i32_0 = arith.constant 0 : i32
    return %c0_i32, %arg0 : i32, i32
  }
  func.func @transform_1(%arg0: i32) -> (i32, i32, i32) {
    %c0_i32 = arith.constant 0 : i32
    %c0_i32_0 = arith.constant 0 : i32
    %c0_i32_1 = arith.constant 0 : i32
    %c0_i32_2 = arith.constant 0 : i32
    return %c0_i32, %c0_i32_0, %c0_i32_1 : i32, i32, i32
  }
  func.func @transform_2(%arg0: i32) -> (i32, i32, i32) {
    %c0_i32 = arith.constant 0 : i32
    %c0_i32_0 = arith.constant 0 : i32
    %c0_i32_1 = arith.constant 0 : i32
    return %c0_i32, %c0_i32_0, %arg0 : i32, i32, i32
  }
}

</mosaic_0001>

<llo_original>
// kernel: tpu_custom_call.1
$region0: #{tpu_custom_call.1}
  #allocation0 [shape = 'u32[]', space=smem, size = 0x4, offset = 0x4, fixed_abs, tag = 'smem constant byte address 0x4 - core index']
  #allocation1 [shape = 'u32[72,128]{1,0:T(1,128)}', space=vmem, size = 0x9000, scoped, tag = 'internal scratch']
  %s0 = inlined_call_operand.hbm [shape: f32[8,384], index: 0, kind: input, shape index: {}]
  %s1 = inlined_call_operand.hbm [shape: f32[2,8,8], index: 1, kind: input, shape index: {}]
  %s2 = inlined_call_operand.vmem [shape: f32[2,6,384], index: 2, kind: output, shape index: {}]
  %s3 = sld [smem:[#allocation0]]
  $region83: #{tpu_custom_call.1} parent=0
    _
  %s5 = ssub.s32 1, %s3
  %s6 = scalar_select 0, %s5, %s3
  $region1: #{tpu_custom_call.1} parent=0
    #allocation2 [shape = 'u8[8192]{0}', space=vmem, size = 0x2000, scoped, tag = 'input window, operand 0']
    #allocation3 [shape = 's32[2]{0}', space=sflag, size = 0x8, scoped, tag = 'scoped memory for tpu_custom_call.1']
    #allocation4 [shape = 'u8[8192]{0}', space=vmem, size = 0x2000, scoped, tag = 'input window, operand 1, single buffered']
    #allocation5 [shape = 's32[1]{0}', space=sflag, size = 0x4, scoped, tag = 'scoped memory for tpu_custom_call.1']
    #allocation6 [shape = 'u8[16384]{0}', space=vmem, size = 0x4000, scoped, tag = 'output window, operand 0']
    %7 = vsyncpa [#allocation3], 0
    %s8 = scalar_lea.sflag [#allocation3], 1
    %9 = vsyncpa %s8, 0
    %10 = vsyncpa [#allocation5], 0
    loop: start=0, step=1, limit=5
    $region2: #{tpu_custom_call.1} parent=1 // loop_pre_header
      _
    $region3: #{tpu_custom_call.1} parent=1 // loop_header
      %s12 = sphi 0, %s16
      %p13 = scmp.ge.s32.totalorder %s12, 5
      %s22 = sphi 0, %s24
      %s25 = sphi 0, %s22
      %s26 = sphi 0, %s25
      %s42 = sphi 0, %s26
      %s46 = sphi 0, %s46
      %s48 = sphi 0, %s46
      %s49 = sphi 0, %s48
      %s63 = sphi 0, %s49
      %s69 = sphi 0, %s71
      %s72 = sphi 0, %s69
      %s73 = sphi 0, %s72
      %s89 = sphi 0, %s73
    $region4: #{tpu_custom_call.1} parent=1 // loop_header_branch
      %15 = sbr.rel (%p13) target = $region8
    $region5: #{tpu_custom_call.1} parent=1 // loop_body
      %s17 = ssub.s32 %s12, 1
      %s18 = ssub.s32 %s12, 2
      %s19 = sadd.s32 %s12, 1
      %s20 = ssub.s32 %s12, %s19
      %p21 = scmp.eq.s32.totalorder %s20, 0
      %s23 = sadd.s32 %s22, 1
      %s24 = scalar_select %p21, %s22, %s23
      %p27 = pneg %p21
      %p28 = scmp.eq.s32.totalorder %s12, 2
      %p29 = por %p27, %p28
      %p30 = scmp.ne.s32.totalorder %s22, %s25
      %p31 = scmp.eq.s32.totalorder %s12, 0
      %p32 = por %p30, %p31
      %p33 = scmp.ne.s32.totalorder %s22, %s25
      %p34 = scmp.eq.s32.totalorder %s17, 2
      %p35 = por %p33, %p34
      %p36 = scmp.ne.s32.totalorder %s25, %s26
      %p37 = scmp.eq.s32.totalorder %s17, 0
      %p38 = por %p36, %p37
      %p39 = scmp.ne.s32.totalorder %s25, %s26
      %p40 = scmp.eq.s32.totalorder %s18, 2
      %p41 = por %p39, %p40
      %p43 = scmp.ne.s32.totalorder %s26, %s42
      %p44 = scmp.eq.s32.totalorder %s18, 0
      %p45 = por %p43, %p44
      %s47 = sadd.s32 %s46, 1
      %p50 = scmp.eq.s32.totalorder %s12, 2
      %p51 = scmp.ne.s32.totalorder %s46, %s48
      %p52 = scmp.eq.s32.totalorder %s12, 0
      %p53 = por %p51, %p52
      %p54 = scmp.ne.s32.totalorder %s46, %s48
      %p55 = scmp.eq.s32.totalorder %s17, 2
      %p56 = por %p54, %p55
      %p57 = scmp.ne.s32.totalorder %s48, %s49
      %p58 = scmp.eq.s32.totalorder %s17, 0
      %p59 = por %p57, %p58
      %p60 = scmp.ne.s32.totalorder %s48, %s49
      %p61 = scmp.eq.s32.totalorder %s18, 2
      %p62 = por %p60, %p61
      %p64 = scmp.ne.s32.totalorder %s49, %s63
      %p65 = scmp.eq.s32.totalorder %s18, 0
      %p66 = por %p64, %p65
      %s67 = ssub.s32 %s12, %s19
      %p68 = scmp.eq.s32.totalorder %s67, 0
      %s70 = sadd.s32 %s69, 1
      %s71 = scalar_select %p68, %s69, %s70
      %p74 = pneg %p68
      %p75 = scmp.eq.s32.totalorder %s12, 2
      %p76 = por %p74, %p75
      %p77 = scmp.ne.s32.totalorder %s69, %s72
      %p78 = scmp.eq.s32.totalorder %s12, 0
      %p79 = por %p77, %p78
      %p80 = scmp.ne.s32.totalorder %s69, %s72
      %p81 = scmp.eq.s32.totalorder %s17, 2
      %p82 = por %p80, %p81
      %p83 = scmp.ne.s32.totalorder %s72, %s73
      %p84 = scmp.eq.s32.totalorder %s17, 0
      %p85 = por %p83, %p84
      %p86 = scmp.ne.s32.totalorder %s72, %s73
      %p87 = scmp.eq.s32.totalorder %s18, 2
      %p88 = por %p86, %p87
      %p90 = scmp.ne.s32.totalorder %s73, %s89
      %p91 = scmp.eq.s32.totalorder %s18, 0
      %p92 = por %p90, %p91
      %p93 = scmp.le.s32.totalorder 1, %s12
      %p94 = scmp.lt.s32.totalorder %s12, 4
      %p95 = pnand %p93, %p94
      %p96 = pneg %p95
      // Predicated region
      $region9: #{tpu_custom_call.1} parent=5 // pred_check
        _
      $region10: #{tpu_custom_call.1} parent=5 // pred_check_branch
        %98 = sbr.rel (%p95) target = $region12
      $region11: #{tpu_custom_call.1} parent=5 // pred_region
        %s99 = ssub.s32 %s12, 1
        // Predicated region
        $region13: #{tpu_custom_call.1} parent=11 // pred_check
          %p100 = pneg %p59
        $region14: #{tpu_custom_call.1} parent=11 // pred_check_branch
          %102 = sbr.rel (%p100) target = $region16
        $region15: #{tpu_custom_call.1} parent=11 // pred_region
          %104 = vsyncadd [#allocation5], 0
          %s105 = sshll.u32 %s1, 4
          %s106 = int_to_ptr.hbm [resolvable:$true] %s105
          %s107 = sshll.u32 [#allocation4], 4
          %s108 = int_to_ptr.vmem [resolvable:$true] %s107
          %113 = dma.hbm_to_vmem [thread:$0]  %s106, 256, %s108, [#allocation5], 128, 128, 8
        $region16: #{tpu_custom_call.1} parent=11 // pred_fallthru
          _
      $region12: #{tpu_custom_call.1} parent=5 // pred_fallthru
        _
      %p114 = scmp.lt.s32.totalorder %s12, 3
      // Predicated region
      $region17: #{tpu_custom_call.1} parent=5 // pred_check
        %p115 = pneg %p114
      $region18: #{tpu_custom_call.1} parent=5 // pred_check_branch
        %117 = sbr.rel (%p115) target = $region20
      $region19: #{tpu_custom_call.1} parent=5 // pred_region
        // Predicated region
        $region21: #{tpu_custom_call.1} parent=19 // pred_check
          %p118 = pneg %p32
        $region22: #{tpu_custom_call.1} parent=19 // pred_check_branch
          %120 = sbr.rel (%p118) target = $region24
        $region23: #{tpu_custom_call.1} parent=19 // pred_region
          %s121 = sand.u32 %s22, 1
          %s122 = scalar_lea.sflag [#allocation3], %s121
          %s123 = sand.u32 %s22, 1
          %s124 = smul.addr %s123, 8
          %s125 = scalar_lea.vmem [#allocation2], %s124
          %127 = vsyncadd %s122, 0
          %s128 = smul.addr %s12, 8
          %s129 = scalar_lea.hbm %s0, %s128
          %s131 = sshll.u32 %s129, 4
          %s132 = int_to_ptr.hbm [resolvable:$true] %s131
          %s133 = sshll.u32 %s125, 4
          %s134 = int_to_ptr.vmem [resolvable:$true] %s133
          %136 = dma.hbm_to_vmem [thread:$0]  %s132, 128, %s134, %s122
        $region24: #{tpu_custom_call.1} parent=19 // pred_fallthru
          _
      $region20: #{tpu_custom_call.1} parent=5 // pred_fallthru
        _
      %p137 = scmp.le.s32.totalorder 1, %s12
      %p138 = scmp.lt.s32.totalorder %s12, 4
      %p139 = pnand %p137, %p138
      %p140 = pneg %p139
      // Predicated region
      $region25: #{tpu_custom_call.1} parent=5 // pred_check
        _
      $region26: #{tpu_custom_call.1} parent=5 // pred_check_branch
        %142 = sbr.rel (%p139) target = $region28
      $region27: #{tpu_custom_call.1} parent=5 // pred_region
        %s143 = ssub.s32 %s12, 1
        %s144 = sand.u32 %s25, 1
        %s145 = scalar_lea.sflag [#allocation3], %s144
        %s146 = sand.u32 %s25, 1
        %s147 = smul.addr %s146, 8
        %s148 = scalar_lea.vmem [#allocation2], %s147
        // Predicated region
        $region29: #{tpu_custom_call.1} parent=27 // pred_check
          %p149 = pneg %p38
        $region30: #{tpu_custom_call.1} parent=27 // pred_check_branch
          %151 = sbr.rel (%p149) target = $region32
        $region31: #{tpu_custom_call.1} parent=27 // pred_region
          %153 = dma.done %s145, 128
        $region32: #{tpu_custom_call.1} parent=27 // pred_fallthru
          _
        // Predicated region
        $region33: #{tpu_custom_call.1} parent=27 // pred_check
          %p154 = pneg %p59
        $region34: #{tpu_custom_call.1} parent=27 // pred_check_branch
          %156 = sbr.rel (%p154) target = $region36
        $region35: #{tpu_custom_call.1} parent=27 // pred_region
          %158 = dma.done [#allocation5], 256
        $region36: #{tpu_custom_call.1} parent=27 // pred_fallthru
          _
        %s159 = sand.u32 %s25, 1
        %s160 = scalar_lea.sflag [#allocation3], %s159
        %s161 = sand.u32 %s25, 1
        %s162 = smul.addr %s161, 8
        %s163 = scalar_lea.vmem [#allocation2], %s162
        %p164 = pneg %p38
        %p165 = pneg %p35
        %p166 = pneg %p59
        %p167 = pneg %p56
        %p168 = pneg %p85
        %p169 = pneg %p82
        %s170 = sand.u32 %s72, 1
        %s171 = sand.u32 %s72, 1
        %s172 = smul.addr %s171, 16
        %s173 = scalar_lea.vmem [#allocation6], %s172
        %v174 = vld [vmem:[%s148] sm:$0x1]
        %v175 = vld [vmem:[%s148 + $0x1] sm:$0x1]
        %v176 = vld [vmem:[%s148 + $0x2] sm:$0x1]
        %v177 = vld [vmem:[%s148 + $0x3] sm:$0x1]
        %v178 = vld [vmem:[%s148 + $0x4] sm:$0x1]
        %v179 = vld [vmem:[%s148 + $0x5] sm:$0x1]
        %v180 = vld [vmem:[#allocation4] sm:$0xff]
        %v181 = vld [vmem:[#allocation4 + $0x8] sm:$0xff]
        %184 = vrot.lane.b32.xlu0 %v180, 2
        %v185 = vpop.permute.xlu0 %184
        %186 = vrot.lane.b32.xlu0 %v181, 2
        %v187 = vpop.permute.xlu0 %186
        %v190 = vsub.f32 %v180, %v185
        %v191 = vsub.f32 %v181, %v187
        %194 = vrot.lane.b32.xlu0 %v190, 127
        %v195 = vpop.permute.xlu0 %194
        %196 = vrot.lane.b32.xlu0 %v191, 127
        %v197 = vpop.permute.xlu0 %196
        %v200 = vmul.f32 %v190, %v195
        %v201 = vmul.f32 %v191, %v197
        %202 = vset.pattern.permute.xlu0 0
        %203 = vperm.xlu0 %202, %v180
        %v204 = vpop.permute.xlu0 %203
        %206 = vset.pattern.permute.xlu0 0
        %207 = vperm.xlu0 %206, %v181
        %v208 = vpop.permute.xlu0 %207
        %v210 = vsub.f32 %v174, %v204
        %v211 = vsub.f32 %v174, %v208
        %212 = vset.pattern.permute.xlu0 1
        %213 = vperm.xlu0 %212, %v180
        %v214 = vpop.permute.xlu0 %213
        %216 = vset.pattern.permute.xlu0 1
        %217 = vperm.xlu0 %216, %v181
        %v218 = vpop.permute.xlu0 %217
        %v220 = vsub.f32 %v175, %v214
        %v221 = vsub.f32 %v175, %v218
        %222 = vset.pattern.permute.xlu0 2
        %223 = vperm.xlu0 %222, %v180
        %v224 = vpop.permute.xlu0 %223
        %226 = vset.pattern.permute.xlu0 2
        %227 = vperm.xlu0 %226, %v181
        %v228 = vpop.permute.xlu0 %227
        %v230 = vsub.f32 %v224, %v174
        %v231 = vsub.f32 %v228, %v174
        %232 = vset.pattern.permute.xlu0 3
        %233 = vperm.xlu0 %232, %v180
        %v234 = vpop.permute.xlu0 %233
        %236 = vset.pattern.permute.xlu0 3
        %237 = vperm.xlu0 %236, %v181
        %v238 = vpop.permute.xlu0 %237
        %v240 = vsub.f32 %v234, %v175
        %v241 = vsub.f32 %v238, %v175
        %v242 = vmin.f32 %v210, %v230
        %v243 = vmin.f32 %v211, %v231
        %v244 = vmin.f32 %v220, %v240
        %v245 = vmin.f32 %v221, %v241
        %v246 = vmin.f32 %v242, %v244
        %v247 = vmin.f32 %v243, %v245
        %v248 = vmax.f32 %v210, %v230
        %v249 = vmax.f32 %v211, %v231
        %v250 = vmax.f32 %v220, %v240
        %v251 = vmax.f32 %v221, %v241
        %v252 = vmax.f32 %v248, %v250
        %v253 = vmax.f32 %v249, %v251
        %254 = vrot.lane.b32.xlu0 %v180, 126
        %v255 = vpop.permute.xlu0 %254
        %256 = vrot.lane.b32.xlu0 %v181, 126
        %v257 = vpop.permute.xlu0 %256
        %v260 = vadd.f32 %v180, %v255
        %v261 = vadd.f32 %v181, %v257
        %v262 = vmul.f32 %v260, 0.5
        %v263 = vmul.f32 %v261, 0.5
        %265 = vset.pattern.permute.xlu0 0
        %266 = vperm.xlu0 %265, %v262
        %v267 = vpop.permute.xlu0 %266
        %270 = vset.pattern.permute.xlu0 0
        %271 = vperm.xlu0 %270, %v263
        %v272 = vpop.permute.xlu0 %271
        %v274 = vsub.f32 %v267, %v178
        %v275 = vsub.f32 %v272, %v178
        %276 = vset.pattern.permute.xlu0 1
        %277 = vperm.xlu0 %276, %v262
        %v278 = vpop.permute.xlu0 %277
        %280 = vset.pattern.permute.xlu0 1
        %281 = vperm.xlu0 %280, %v263
        %v282 = vpop.permute.xlu0 %281
        %v284 = vsub.f32 %v278, %v178
        %v285 = vsub.f32 %v282, %v178
        %v286 = vadd.f32 %v267, %v178
        %v287 = vadd.f32 %v272, %v178
        %v288 = vadd.f32 %v278, %v178
        %v289 = vadd.f32 %v282, %v178
        %vm290 = vcmp.gt.f32.partialorder %v274, %v204
        %vm291 = vcmp.gt.f32.partialorder %v275, %v208
        %v292 = vsel %vm290, %v274, %v204
        %v293 = vsel %vm291, %v275, %v208
        %vm294 = vcmp.gt.f32.partialorder %v284, %v214
        %vm295 = vcmp.gt.f32.partialorder %v285, %v218
        %v296 = vsel %vm294, %v284, %v214
        %v297 = vsel %vm295, %v285, %v218
        %vm298 = vcmp.gt.f32.partialorder %v286, %v224
        %vm299 = vcmp.gt.f32.partialorder %v287, %v228
        %v300 = vsel %vm298, %v224, %v286
        %v301 = vsel %vm299, %v228, %v287
        %vm302 = vcmp.gt.f32.partialorder %v288, %v234
        %vm303 = vcmp.gt.f32.partialorder %v289, %v238
        %v304 = vsel %vm302, %v234, %v288
        %v305 = vsel %vm303, %v238, %v289
        %v306 = vsub.f32 %v174, %v292
        %v307 = vsub.f32 %v174, %v293
        %v308 = vsub.f32 %v300, %v174
        %v309 = vsub.f32 %v301, %v174
        %v310 = vmin.f32 %v306, %v308
        %v311 = vmin.f32 %v307, %v309
        %v312 = vsub.f32 %v175, %v296
        %v313 = vsub.f32 %v175, %v297
        %v314 = vsub.f32 %v304, %v175
        %v315 = vsub.f32 %v305, %v175
        %v316 = vmin.f32 %v312, %v314
        %v317 = vmin.f32 %v313, %v315
        %v318 = vmin.f32 %v310, %v316
        %v319 = vmin.f32 %v311, %v317
        %vm320 = vcmp.gt.f32.partialorder %v318, 0.0
        %vm321 = vcmp.gt.f32.partialorder %v319, 0.0
        %vm322 = vcmp.ge.f32.partialorder %v252, %v176
        %vm323 = vcmp.ge.f32.partialorder %v253, %v176
        %vm324 = vcmp.le.f32.partialorder %v252, %v177
        %vm325 = vcmp.le.f32.partialorder %v253, %v177
        %vm326 = vmand %vm322, %vm324
        %vm327 = vmand %vm323, %vm325
        %vm328 = vmand %vm320, %vm326
        %vm329 = vmand %vm321, %vm327
        %331 = vset.pattern.permute.xlu0 2
        %332 = vperm.xlu0 %331, %v200
        %v333 = vpop.permute.xlu0 %332
        %336 = vset.pattern.permute.xlu0 2
        %337 = vperm.xlu0 %336, %v201
        %v338 = vpop.permute.xlu0 %337
        %v340 = vsel %vm328, %v333, 1e+08
        %v341 = vsel %vm329, %v338, 1e+08
        %vm342 = vcmp.gt.f32.partialorder %v246, 0.0
        %vm343 = vcmp.gt.f32.partialorder %v247, 0.0
        %vm344 = vcmp.lt.f32.partialorder %v180, 0.0
        %vm345 = vcmp.lt.f32.partialorder %v181, 0.0
        %v346 = vsel %vm344, 1, 0
        %v347 = vsel %vm345, 1, 0
        %348 = vset.pattern.permute.xlu0 4
        %349 = vperm.xlu0 %348, %v346
        %v350 = vpop.permute.xlu0 %349
        %351 = vset.pattern.permute.xlu0 4
        %352 = vperm.xlu0 %351, %v347
        %v353 = vpop.permute.xlu0 %352
        %vm354 = vcmp.eq.s32.totalorder %v350, 1
        %vm355 = vcmp.eq.s32.totalorder %v353, 1
        %vm356 = vmand %vm342, %vm354
        %vm357 = vmand %vm343, %vm355
        %vm358 = vcmp.ne.f32.partialorder %v180, -1.0
        %vm359 = vcmp.ne.f32.partialorder %v181, -1.0
        %v360 = vrot.slane %v204, 1
        %v361 = vrot.slane %v208, 1
        %v364 = vsub.f32 %v174, %v360
        %v365 = vsub.f32 %v174, %v361
        %v366 = vrot.slane %v214, 1
        %v367 = vrot.slane %v218, 1
        %v370 = vsub.f32 %v175, %v366
        %v371 = vsub.f32 %v175, %v367
        %v373 = vrot.slane %v174, 7
        %v375 = vsub.f32 %v224, %v373
        %v376 = vsub.f32 %v228, %v373
        %v378 = vrot.slane %v175, 7
        %v380 = vsub.f32 %v234, %v378
        %v381 = vsub.f32 %v238, %v378
        %v384 = vrot.slane %v375, 1
        %v385 = vrot.slane %v376, 1
        %v388 = vmin.f32 %v364, %v384
        %v389 = vmin.f32 %v365, %v385
        %v392 = vrot.slane %v380, 1
        %v393 = vrot.slane %v381, 1
        %v396 = vmin.f32 %v370, %v392
        %v397 = vmin.f32 %v371, %v393
        %v398 = vmin.f32 %v388, %v396
        %v399 = vmin.f32 %v389, %v397
        %v400 = vmax.f32 %v364, %v384
        %v401 = vmax.f32 %v365, %v385
        %v402 = vmax.f32 %v370, %v392
        %v403 = vmax.f32 %v371, %v393
        %v404 = vmax.f32 %v400, %v402
        %v405 = vmax.f32 %v401, %v403
        %v407 = vrot.slane %v178, 7
        %v409 = vsub.f32 %v267, %v407
        %v410 = vsub.f32 %v272, %v407
        %v411 = vsub.f32 %v278, %v407
        %v412 = vsub.f32 %v282, %v407
        %v413 = vadd.f32 %v267, %v407
        %v414 = vadd.f32 %v272, %v407
        %v415 = vadd.f32 %v278, %v407
        %v416 = vadd.f32 %v282, %v407
        %vm417 = vcmp.gt.f32.partialorder %v409, %v204
        %vm418 = vcmp.gt.f32.partialorder %v410, %v208
        %v419 = vsel %vm417, %v409, %v204
        %v420 = vsel %vm418, %v410, %v208
        %vm421 = vcmp.gt.f32.partialorder %v411, %v214
        %vm422 = vcmp.gt.f32.partialorder %v412, %v218
        %v423 = vsel %vm421, %v411, %v214
        %v424 = vsel %vm422, %v412, %v218
        %vm425 = vcmp.gt.f32.partialorder %v413, %v224
        %vm426 = vcmp.gt.f32.partialorder %v414, %v228
        %v427 = vsel %vm425, %v224, %v413
        %v428 = vsel %vm426, %v228, %v414
        %vm429 = vcmp.gt.f32.partialorder %v415, %v234
        %vm430 = vcmp.gt.f32.partialorder %v416, %v238
        %v431 = vsel %vm429, %v234, %v415
        %v432 = vsel %vm430, %v238, %v416
        %v435 = vrot.slane %v419, 1
        %v436 = vrot.slane %v420, 1
        %v439 = vsub.f32 %v174, %v435
        %v440 = vsub.f32 %v174, %v436
        %v441 = vsub.f32 %v427, %v373
        %v442 = vsub.f32 %v428, %v373
        %v445 = vrot.slane %v441, 1
        %v446 = vrot.slane %v442, 1
        %v449 = vmin.f32 %v439, %v445
        %v450 = vmin.f32 %v440, %v446
        %v453 = vrot.slane %v423, 1
        %v454 = vrot.slane %v424, 1
        %v457 = vsub.f32 %v175, %v453
        %v458 = vsub.f32 %v175, %v454
        %v459 = vsub.f32 %v431, %v378
        %v460 = vsub.f32 %v432, %v378
        %v463 = vrot.slane %v459, 1
        %v464 = vrot.slane %v460, 1
        %v467 = vmin.f32 %v457, %v463
        %v468 = vmin.f32 %v458, %v464
        %v469 = vmin.f32 %v449, %v467
        %v470 = vmin.f32 %v450, %v468
        %vm471 = vcmp.gt.f32.partialorder %v469, 0.0
        %vm472 = vcmp.gt.f32.partialorder %v470, 0.0
        %vm473 = vcmp.ge.f32.partialorder %v404, %v176
        %vm474 = vcmp.ge.f32.partialorder %v405, %v176
        %vm475 = vcmp.le.f32.partialorder %v404, %v177
        %vm476 = vcmp.le.f32.partialorder %v405, %v177
        %vm477 = vmand %vm473, %vm475
        %vm478 = vmand %vm474, %vm476
        %vm479 = vmand %vm471, %vm477
        %vm480 = vmand %vm472, %vm478
        %v481 = vrot.slane %v333, 1
        %v482 = vrot.slane %v338, 1
        %v485 = vsel %vm479, %v481, 1e+08
        %v486 = vsel %vm480, %v482, 1e+08
        %vm487 = vcmp.gt.f32.partialorder %v398, 0.0
        %vm488 = vcmp.gt.f32.partialorder %v399, 0.0
        %v489 = vsel %vm354, 1, 0
        %v490 = vsel %vm355, 1, 0
        %v491 = vrot.slane %v489, 1
        %v492 = vrot.slane %v490, 1
        %vm493 = vcmp.ne.s32.totalorder %v491, 0
        %vm494 = vcmp.ne.s32.totalorder %v492, 0
        %vm495 = vmand %vm487, %vm493
        %vm496 = vmand %vm488, %vm494
        %vm497 = vcmp.lt.f32.partialorder %v485, %v340
        %vm498 = vcmp.lt.f32.partialorder %v486, %v341
        %v499 = vsel %vm497, %v485, %v340
        %v500 = vsel %vm498, %v486, %v341
        %v501 = vsel %vm497, %v360, %v204
        %v502 = vsel %vm498, %v361, %v208
        %v503 = vsel %vm497, %v366, %v214
        %v504 = vsel %vm498, %v367, %v218
        %v505 = vrot.slane %v224, 1
        %v506 = vrot.slane %v228, 1
        %v509 = vsel %vm497, %v505, %v224
        %v510 = vsel %vm498, %v506, %v228
        %v511 = vrot.slane %v234, 1
        %v512 = vrot.slane %v238, 1
        %v515 = vsel %vm497, %v511, %v234
        %v516 = vsel %vm498, %v512, %v238
        %517 = vset.pattern.permute.xlu0 4
        %518 = vperm.xlu0 %517, %v180
        %v519 = vpop.permute.xlu0 %518
        %520 = vset.pattern.permute.xlu0 4
        %521 = vperm.xlu0 %520, %v181
        %v522 = vpop.permute.xlu0 %521
        %v525 = vrot.slane %v519, 1
        %v526 = vrot.slane %v522, 1
        %v529 = vsel %vm497, %v525, %v519
        %v530 = vsel %vm498, %v526, %v522
        %vm531 = vmor %vm356, %vm495
        %vm532 = vmor %vm357, %vm496
        %v533 = vsel %vm358, 1, 0
        %v534 = vsel %vm359, 1, 0
        %v535 = vrot.slane %v533, 1
        %v536 = vrot.slane %v534, 1
        %vm537 = vcmp.ne.s32.totalorder %v535, 0
        %vm538 = vcmp.ne.s32.totalorder %v536, 0
        %vm539 = vmor %vm358, %vm537
        %vm540 = vmor %vm359, %vm538
        %v541 = vrot.slane %v204, 2
        %v542 = vrot.slane %v208, 2
        %v545 = vsub.f32 %v174, %v541
        %v546 = vsub.f32 %v174, %v542
        %v547 = vrot.slane %v214, 2
        %v548 = vrot.slane %v218, 2
        %v551 = vsub.f32 %v175, %v547
        %v552 = vsub.f32 %v175, %v548
        %v553 = vrot.slane %v174, 6
        %v555 = vsub.f32 %v224, %v553
        %v556 = vsub.f32 %v228, %v553
        %v557 = vrot.slane %v175, 6
        %v559 = vsub.f32 %v234, %v557
        %v560 = vsub.f32 %v238, %v557
        %v563 = vrot.slane %v555, 2
        %v564 = vrot.slane %v556, 2
        %v567 = vmin.f32 %v545, %v563
        %v568 = vmin.f32 %v546, %v564
        %v571 = vrot.slane %v559, 2
        %v572 = vrot.slane %v560, 2
        %v575 = vmin.f32 %v551, %v571
        %v576 = vmin.f32 %v552, %v572
        %v577 = vmin.f32 %v567, %v575
        %v578 = vmin.f32 %v568, %v576
        %v579 = vmax.f32 %v545, %v563
        %v580 = vmax.f32 %v546, %v564
        %v581 = vmax.f32 %v551, %v571
        %v582 = vmax.f32 %v552, %v572
        %v583 = vmax.f32 %v579, %v581
        %v584 = vmax.f32 %v580, %v582
        %v585 = vrot.slane %v178, 6
        %v587 = vsub.f32 %v267, %v585
        %v588 = vsub.f32 %v272, %v585
        %v589 = vsub.f32 %v278, %v585
        %v590 = vsub.f32 %v282, %v585
        %v591 = vadd.f32 %v267, %v585
        %v592 = vadd.f32 %v272, %v585
        %v593 = vadd.f32 %v278, %v585
        %v594 = vadd.f32 %v282, %v585
        %vm595 = vcmp.gt.f32.partialorder %v587, %v204
        %vm596 = vcmp.gt.f32.partialorder %v588, %v208
        %v597 = vsel %vm595, %v587, %v204
        %v598 = vsel %vm596, %v588, %v208
        %vm599 = vcmp.gt.f32.partialorder %v589, %v214
        %vm600 = vcmp.gt.f32.partialorder %v590, %v218
        %v601 = vsel %vm599, %v589, %v214
        %v602 = vsel %vm600, %v590, %v218
        %vm603 = vcmp.gt.f32.partialorder %v591, %v224
        %vm604 = vcmp.gt.f32.partialorder %v592, %v228
        %v605 = vsel %vm603, %v224, %v591
        %v606 = vsel %vm604, %v228, %v592
        %vm607 = vcmp.gt.f32.partialorder %v593, %v234
        %vm608 = vcmp.gt.f32.partialorder %v594, %v238
        %v609 = vsel %vm607, %v234, %v593
        %v610 = vsel %vm608, %v238, %v594
        %v613 = vrot.slane %v597, 2
        %v614 = vrot.slane %v598, 2
        %v617 = vsub.f32 %v174, %v613
        %v618 = vsub.f32 %v174, %v614
        %v619 = vsub.f32 %v605, %v553
        %v620 = vsub.f32 %v606, %v553
        %v623 = vrot.slane %v619, 2
        %v624 = vrot.slane %v620, 2
        %v627 = vmin.f32 %v617, %v623
        %v628 = vmin.f32 %v618, %v624
        %v631 = vrot.slane %v601, 2
        %v632 = vrot.slane %v602, 2
        %v635 = vsub.f32 %v175, %v631
        %v636 = vsub.f32 %v175, %v632
        %v637 = vsub.f32 %v609, %v557
        %v638 = vsub.f32 %v610, %v557
        %v641 = vrot.slane %v637, 2
        %v642 = vrot.slane %v638, 2
        %v645 = vmin.f32 %v635, %v641
        %v646 = vmin.f32 %v636, %v642
        %v647 = vmin.f32 %v627, %v645
        %v648 = vmin.f32 %v628, %v646
        %vm649 = vcmp.gt.f32.partialorder %v647, 0.0
        %vm650 = vcmp.gt.f32.partialorder %v648, 0.0
        %vm651 = vcmp.ge.f32.partialorder %v583, %v176
        %vm652 = vcmp.ge.f32.partialorder %v584, %v176
        %vm653 = vcmp.le.f32.partialorder %v583, %v177
        %vm654 = vcmp.le.f32.partialorder %v584, %v177
        %vm655 = vmand %vm651, %vm653
        %vm656 = vmand %vm652, %vm654
        %vm657 = vmand %vm649, %vm655
        %vm658 = vmand %vm650, %vm656
        %v659 = vrot.slane %v333, 2
        %v660 = vrot.slane %v338, 2
        %v663 = vsel %vm657, %v659, 1e+08
        %v664 = vsel %vm658, %v660, 1e+08
        %vm665 = vcmp.gt.f32.partialorder %v577, 0.0
        %vm666 = vcmp.gt.f32.partialorder %v578, 0.0
        %v667 = vrot.slane %v489, 2
        %v668 = vrot.slane %v490, 2
        %vm669 = vcmp.ne.s32.totalorder %v667, 0
        %vm670 = vcmp.ne.s32.totalorder %v668, 0
        %vm671 = vmand %vm665, %vm669
        %vm672 = vmand %vm666, %vm670
        %vm673 = vcmp.lt.f32.partialorder %v663, %v499
        %vm674 = vcmp.lt.f32.partialorder %v664, %v500
        %v675 = vsel %vm673, %v663, %v499
        %v676 = vsel %vm674, %v664, %v500
        %v677 = vsel %vm673, %v541, %v501
        %v678 = vsel %vm674, %v542, %v502
        %v679 = vsel %vm673, %v547, %v503
        %v680 = vsel %vm674, %v548, %v504
        %v681 = vrot.slane %v224, 2
        %v682 = vrot.slane %v228, 2
        %v685 = vsel %vm673, %v681, %v509
        %v686 = vsel %vm674, %v682, %v510
        %v687 = vrot.slane %v234, 2
        %v688 = vrot.slane %v238, 2
        %v691 = vsel %vm673, %v687, %v515
        %v692 = vsel %vm674, %v688, %v516
        %v693 = vrot.slane %v519, 2
        %v694 = vrot.slane %v522, 2
        %v697 = vsel %vm673, %v693, %v529
        %v698 = vsel %vm674, %v694, %v530
        %vm699 = vmor %vm531, %vm671
        %vm700 = vmor %vm532, %vm672
        %v701 = vrot.slane %v533, 2
        %v702 = vrot.slane %v534, 2
        %vm703 = vcmp.ne.s32.totalorder %v701, 0
        %vm704 = vcmp.ne.s32.totalorder %v702, 0
        %vm705 = vmor %vm539, %vm703
        %vm706 = vmor %vm540, %vm704
        %v707 = vrot.slane %v204, 3
        %v708 = vrot.slane %v208, 3
        %v711 = vsub.f32 %v174, %v707
        %v712 = vsub.f32 %v174, %v708
        %v713 = vrot.slane %v214, 3
        %v714 = vrot.slane %v218, 3
        %v717 = vsub.f32 %v175, %v713
        %v718 = vsub.f32 %v175, %v714
        %v719 = vrot.slane %v174, 5
        %v721 = vsub.f32 %v224, %v719
        %v722 = vsub.f32 %v228, %v719
        %v723 = vrot.slane %v175, 5
        %v725 = vsub.f32 %v234, %v723
        %v726 = vsub.f32 %v238, %v723
        %v729 = vrot.slane %v721, 3
        %v730 = vrot.slane %v722, 3
        %v733 = vmin.f32 %v711, %v729
        %v734 = vmin.f32 %v712, %v730
        %v737 = vrot.slane %v725, 3
        %v738 = vrot.slane %v726, 3
        %v741 = vmin.f32 %v717, %v737
        %v742 = vmin.f32 %v718, %v738
        %v743 = vmin.f32 %v733, %v741
        %v744 = vmin.f32 %v734, %v742
        %v745 = vmax.f32 %v711, %v729
        %v746 = vmax.f32 %v712, %v730
        %v747 = vmax.f32 %v717, %v737
        %v748 = vmax.f32 %v718, %v738
        %v749 = vmax.f32 %v745, %v747
        %v750 = vmax.f32 %v746, %v748
        %v751 = vrot.slane %v178, 5
        %v753 = vsub.f32 %v267, %v751
        %v754 = vsub.f32 %v272, %v751
        %v755 = vsub.f32 %v278, %v751
        %v756 = vsub.f32 %v282, %v751
        %v757 = vadd.f32 %v267, %v751
        %v758 = vadd.f32 %v272, %v751
        %v759 = vadd.f32 %v278, %v751
        %v760 = vadd.f32 %v282, %v751
        %vm761 = vcmp.gt.f32.partialorder %v753, %v204
        %vm762 = vcmp.gt.f32.partialorder %v754, %v208
        %v763 = vsel %vm761, %v753, %v204
        %v764 = vsel %vm762, %v754, %v208
        %vm765 = vcmp.gt.f32.partialorder %v755, %v214
        %vm766 = vcmp.gt.f32.partialorder %v756, %v218
        %v767 = vsel %vm765, %v755, %v214
        %v768 = vsel %vm766, %v756, %v218
        %vm769 = vcmp.gt.f32.partialorder %v757, %v224
        %vm770 = vcmp.gt.f32.partialorder %v758, %v228
        %v771 = vsel %vm769, %v224, %v757
        %v772 = vsel %vm770, %v228, %v758
        %vm773 = vcmp.gt.f32.partialorder %v759, %v234
        %vm774 = vcmp.gt.f32.partialorder %v760, %v238
        %v775 = vsel %vm773, %v234, %v759
        %v776 = vsel %vm774, %v238, %v760
        %v779 = vrot.slane %v763, 3
        %v780 = vrot.slane %v764, 3
        %v783 = vsub.f32 %v174, %v779
        %v784 = vsub.f32 %v174, %v780
        %v785 = vsub.f32 %v771, %v719
        %v786 = vsub.f32 %v772, %v719
        %v789 = vrot.slane %v785, 3
        %v790 = vrot.slane %v786, 3
        %v793 = vmin.f32 %v783, %v789
        %v794 = vmin.f32 %v784, %v790
        %v797 = vrot.slane %v767, 3
        %v798 = vrot.slane %v768, 3
        %v801 = vsub.f32 %v175, %v797
        %v802 = vsub.f32 %v175, %v798
        %v803 = vsub.f32 %v775, %v723
        %v804 = vsub.f32 %v776, %v723
        %v807 = vrot.slane %v803, 3
        %v808 = vrot.slane %v804, 3
        %v811 = vmin.f32 %v801, %v807
        %v812 = vmin.f32 %v802, %v808
        %v813 = vmin.f32 %v793, %v811
        %v814 = vmin.f32 %v794, %v812
        %vm815 = vcmp.gt.f32.partialorder %v813, 0.0
        %vm816 = vcmp.gt.f32.partialorder %v814, 0.0
        %vm817 = vcmp.ge.f32.partialorder %v749, %v176
        %vm818 = vcmp.ge.f32.partialorder %v750, %v176
        %vm819 = vcmp.le.f32.partialorder %v749, %v177
        %vm820 = vcmp.le.f32.partialorder %v750, %v177
        %vm821 = vmand %vm817, %vm819
        %vm822 = vmand %vm818, %vm820
        %vm823 = vmand %vm815, %vm821
        %vm824 = vmand %vm816, %vm822
        %v825 = vrot.slane %v333, 3
        %v826 = vrot.slane %v338, 3
        %v829 = vsel %vm823, %v825, 1e+08
        %v830 = vsel %vm824, %v826, 1e+08
        %vm831 = vcmp.gt.f32.partialorder %v743, 0.0
        %vm832 = vcmp.gt.f32.partialorder %v744, 0.0
        %v833 = vrot.slane %v489, 3
        %v834 = vrot.slane %v490, 3
        %vm835 = vcmp.ne.s32.totalorder %v833, 0
        %vm836 = vcmp.ne.s32.totalorder %v834, 0
        %vm837 = vmand %vm831, %vm835
        %vm838 = vmand %vm832, %vm836
        %vm839 = vcmp.lt.f32.partialorder %v829, %v675
        %vm840 = vcmp.lt.f32.partialorder %v830, %v676
        %v841 = vsel %vm839, %v829, %v675
        %v842 = vsel %vm840, %v830, %v676
        %v843 = vsel %vm839, %v707, %v677
        %v844 = vsel %vm840, %v708, %v678
        %v845 = vsel %vm839, %v713, %v679
        %v846 = vsel %vm840, %v714, %v680
        %v847 = vrot.slane %v224, 3
        %v848 = vrot.slane %v228, 3
        %v851 = vsel %vm839, %v847, %v685
        %v852 = vsel %vm840, %v848, %v686
        %v853 = vrot.slane %v234, 3
        %v854 = vrot.slane %v238, 3
        %v857 = vsel %vm839, %v853, %v691
        %v858 = vsel %vm840, %v854, %v692
        %v859 = vrot.slane %v519, 3
        %v860 = vrot.slane %v522, 3
        %v863 = vsel %vm839, %v859, %v697
        %v864 = vsel %vm840, %v860, %v698
        %vm865 = vmor %vm699, %vm837
        %vm866 = vmor %vm700, %vm838
        %v867 = vrot.slane %v533, 3
        %v868 = vrot.slane %v534, 3
        %vm869 = vcmp.ne.s32.totalorder %v867, 0
        %vm870 = vcmp.ne.s32.totalorder %v868, 0
        %vm871 = vmor %vm705, %vm869
        %vm872 = vmor %vm706, %vm870
        %v873 = vrot.slane %v204, 4
        %v874 = vrot.slane %v208, 4
        %v877 = vsub.f32 %v174, %v873
        %v878 = vsub.f32 %v174, %v874
        %v879 = vrot.slane %v214, 4
        %v880 = vrot.slane %v218, 4
        %v883 = vsub.f32 %v175, %v879
        %v884 = vsub.f32 %v175, %v880
        %v885 = vrot.slane %v174, 4
        %v887 = vsub.f32 %v224, %v885
        %v888 = vsub.f32 %v228, %v885
        %v889 = vrot.slane %v175, 4
        %v891 = vsub.f32 %v234, %v889
        %v892 = vsub.f32 %v238, %v889
        %v895 = vrot.slane %v887, 4
        %v896 = vrot.slane %v888, 4
        %v899 = vmin.f32 %v877, %v895
        %v900 = vmin.f32 %v878, %v896
        %v903 = vrot.slane %v891, 4
        %v904 = vrot.slane %v892, 4
        %v907 = vmin.f32 %v883, %v903
        %v908 = vmin.f32 %v884, %v904
        %v909 = vmin.f32 %v899, %v907
        %v910 = vmin.f32 %v900, %v908
        %v911 = vmax.f32 %v877, %v895
        %v912 = vmax.f32 %v878, %v896
        %v913 = vmax.f32 %v883, %v903
        %v914 = vmax.f32 %v884, %v904
        %v915 = vmax.f32 %v911, %v913
        %v916 = vmax.f32 %v912, %v914
        %v917 = vrot.slane %v178, 4
        %v919 = vsub.f32 %v267, %v917
        %v920 = vsub.f32 %v272, %v917
        %v921 = vsub.f32 %v278, %v917
        %v922 = vsub.f32 %v282, %v917
        %v923 = vadd.f32 %v267, %v917
        %v924 = vadd.f32 %v272, %v917
        %v925 = vadd.f32 %v278, %v917
        %v926 = vadd.f32 %v282, %v917
        %vm927 = vcmp.gt.f32.partialorder %v919, %v204
        %vm928 = vcmp.gt.f32.partialorder %v920, %v208
        %v929 = vsel %vm927, %v919, %v204
        %v930 = vsel %vm928, %v920, %v208
        %vm931 = vcmp.gt.f32.partialorder %v921, %v214
        %vm932 = vcmp.gt.f32.partialorder %v922, %v218
        %v933 = vsel %vm931, %v921, %v214
        %v934 = vsel %vm932, %v922, %v218
        %vm935 = vcmp.gt.f32.partialorder %v923, %v224
        %vm936 = vcmp.gt.f32.partialorder %v924, %v228
        %v937 = vsel %vm935, %v224, %v923
        %v938 = vsel %vm936, %v228, %v924
        %vm939 = vcmp.gt.f32.partialorder %v925, %v234
        %vm940 = vcmp.gt.f32.partialorder %v926, %v238
        %v941 = vsel %vm939, %v234, %v925
        %v942 = vsel %vm940, %v238, %v926
        %v945 = vrot.slane %v929, 4
        %v946 = vrot.slane %v930, 4
        %v949 = vsub.f32 %v174, %v945
        %v950 = vsub.f32 %v174, %v946
        %v951 = vsub.f32 %v937, %v885
        %v952 = vsub.f32 %v938, %v885
        %v955 = vrot.slane %v951, 4
        %v956 = vrot.slane %v952, 4
        %v959 = vmin.f32 %v949, %v955
        %v960 = vmin.f32 %v950, %v956
        %v963 = vrot.slane %v933, 4
        %v964 = vrot.slane %v934, 4
        %v967 = vsub.f32 %v175, %v963
        %v968 = vsub.f32 %v175, %v964
        %v969 = vsub.f32 %v941, %v889
        %v970 = vsub.f32 %v942, %v889
        %v973 = vrot.slane %v969, 4
        %v974 = vrot.slane %v970, 4
        %v977 = vmin.f32 %v967, %v973
        %v978 = vmin.f32 %v968, %v974
        %v979 = vmin.f32 %v959, %v977
        %v980 = vmin.f32 %v960, %v978
        %vm981 = vcmp.gt.f32.partialorder %v979, 0.0
        %vm982 = vcmp.gt.f32.partialorder %v980, 0.0
        %vm983 = vcmp.ge.f32.partialorder %v915, %v176
        %vm984 = vcmp.ge.f32.partialorder %v916, %v176
        %vm985 = vcmp.le.f32.partialorder %v915, %v177
        %vm986 = vcmp.le.f32.partialorder %v916, %v177
        %vm987 = vmand %vm983, %vm985
        %vm988 = vmand %vm984, %vm986
        %vm989 = vmand %vm981, %vm987
        %vm990 = vmand %vm982, %vm988
        %v991 = vrot.slane %v333, 4
        %v992 = vrot.slane %v338, 4
        %v995 = vsel %vm989, %v991, 1e+08
        %v996 = vsel %vm990, %v992, 1e+08
        %vm997 = vcmp.gt.f32.partialorder %v909, 0.0
        %vm998 = vcmp.gt.f32.partialorder %v910, 0.0
        %v999 = vrot.slane %v489, 4
        %v1000 = vrot.slane %v490, 4
        %vm1001 = vcmp.ne.s32.totalorder %v999, 0
        %vm1002 = vcmp.ne.s32.totalorder %v1000, 0
        %vm1003 = vmand %vm997, %vm1001
        %vm1004 = vmand %vm998, %vm1002
        %vm1005 = vcmp.lt.f32.partialorder %v995, %v841
        %vm1006 = vcmp.lt.f32.partialorder %v996, %v842
        %v1007 = vsel %vm1005, %v995, %v841
        %v1008 = vsel %vm1006, %v996, %v842
        %v1009 = vsel %vm1005, %v873, %v843
        %v1010 = vsel %vm1006, %v874, %v844
        %v1011 = vsel %vm1005, %v879, %v845
        %v1012 = vsel %vm1006, %v880, %v846
        %v1013 = vrot.slane %v224, 4
        %v1014 = vrot.slane %v228, 4
        %v1017 = vsel %vm1005, %v1013, %v851
        %v1018 = vsel %vm1006, %v1014, %v852
        %v1019 = vrot.slane %v234, 4
        %v1020 = vrot.slane %v238, 4
        %v1023 = vsel %vm1005, %v1019, %v857
        %v1024 = vsel %vm1006, %v1020, %v858
        %v1025 = vrot.slane %v519, 4
        %v1026 = vrot.slane %v522, 4
        %v1029 = vsel %vm1005, %v1025, %v863
        %v1030 = vsel %vm1006, %v1026, %v864
        %vm1031 = vmor %vm865, %vm1003
        %vm1032 = vmor %vm866, %vm1004
        %v1033 = vrot.slane %v533, 4
        %v1034 = vrot.slane %v534, 4
        %vm1035 = vcmp.ne.s32.totalorder %v1033, 0
        %vm1036 = vcmp.ne.s32.totalorder %v1034, 0
        %vm1037 = vmor %vm871, %vm1035
        %vm1038 = vmor %vm872, %vm1036
        %v1039 = vrot.slane %v204, 5
        %v1040 = vrot.slane %v208, 5
        %v1043 = vsub.f32 %v174, %v1039
        %v1044 = vsub.f32 %v174, %v1040
        %v1045 = vrot.slane %v214, 5
        %v1046 = vrot.slane %v218, 5
        %v1049 = vsub.f32 %v175, %v1045
        %v1050 = vsub.f32 %v175, %v1046
        %v1051 = vrot.slane %v174, 3
        %v1053 = vsub.f32 %v224, %v1051
        %v1054 = vsub.f32 %v228, %v1051
        %v1055 = vrot.slane %v175, 3
        %v1057 = vsub.f32 %v234, %v1055
        %v1058 = vsub.f32 %v238, %v1055
        %v1061 = vrot.slane %v1053, 5
        %v1062 = vrot.slane %v1054, 5
        %v1065 = vmin.f32 %v1043, %v1061
        %v1066 = vmin.f32 %v1044, %v1062
        %v1069 = vrot.slane %v1057, 5
        %v1070 = vrot.slane %v1058, 5
        %v1073 = vmin.f32 %v1049, %v1069
        %v1074 = vmin.f32 %v1050, %v1070
        %v1075 = vmin.f32 %v1065, %v1073
        %v1076 = vmin.f32 %v1066, %v1074
        %v1077 = vmax.f32 %v1043, %v1061
        %v1078 = vmax.f32 %v1044, %v1062
        %v1079 = vmax.f32 %v1049, %v1069
        %v1080 = vmax.f32 %v1050, %v1070
        %v1081 = vmax.f32 %v1077, %v1079
        %v1082 = vmax.f32 %v1078, %v1080
        %v1083 = vrot.slane %v178, 3
        %v1085 = vsub.f32 %v267, %v1083
        %v1086 = vsub.f32 %v272, %v1083
        %v1087 = vsub.f32 %v278, %v1083
        %v1088 = vsub.f32 %v282, %v1083
        %v1089 = vadd.f32 %v267, %v1083
        %v1090 = vadd.f32 %v272, %v1083
        %v1091 = vadd.f32 %v278, %v1083
        %v1092 = vadd.f32 %v282, %v1083
        %vm1093 = vcmp.gt.f32.partialorder %v1085, %v204
        %vm1094 = vcmp.gt.f32.partialorder %v1086, %v208
        %v1095 = vsel %vm1093, %v1085, %v204
        %v1096 = vsel %vm1094, %v1086, %v208
        %vm1097 = vcmp.gt.f32.partialorder %v1087, %v214
        %vm1098 = vcmp.gt.f32.partialorder %v1088, %v218
        %v1099 = vsel %vm1097, %v1087, %v214
        %v1100 = vsel %vm1098, %v1088, %v218
        %vm1101 = vcmp.gt.f32.partialorder %v1089, %v224
        %vm1102 = vcmp.gt.f32.partialorder %v1090, %v228
        %v1103 = vsel %vm1101, %v224, %v1089
        %v1104 = vsel %vm1102, %v228, %v1090
        %vm1105 = vcmp.gt.f32.partialorder %v1091, %v234
        %vm1106 = vcmp.gt.f32.partialorder %v1092, %v238
        %v1107 = vsel %vm1105, %v234, %v1091
        %v1108 = vsel %vm1106, %v238, %v1092
        %v1111 = vrot.slane %v1095, 5
        %v1112 = vrot.slane %v1096, 5
        %v1115 = vsub.f32 %v174, %v1111
        %v1116 = vsub.f32 %v174, %v1112
        %v1117 = vsub.f32 %v1103, %v1051
        %v1118 = vsub.f32 %v1104, %v1051
        %v1121 = vrot.slane %v1117, 5
        %v1122 = vrot.slane %v1118, 5
        %v1125 = vmin.f32 %v1115, %v1121
        %v1126 = vmin.f32 %v1116, %v1122
        %v1129 = vrot.slane %v1099, 5
        %v1130 = vrot.slane %v1100, 5
        %v1133 = vsub.f32 %v175, %v1129
        %v1134 = vsub.f32 %v175, %v1130
        %v1135 = vsub.f32 %v1107, %v1055
        %v1136 = vsub.f32 %v1108, %v1055
        %v1139 = vrot.slane %v1135, 5
        %v1140 = vrot.slane %v1136, 5
        %v1143 = vmin.f32 %v1133, %v1139
        %v1144 = vmin.f32 %v1134, %v1140
        %v1145 = vmin.f32 %v1125, %v1143
        %v1146 = vmin.f32 %v1126, %v1144
        %vm1147 = vcmp.gt.f32.partialorder %v1145, 0.0
        %vm1148 = vcmp.gt.f32.partialorder %v1146, 0.0
        %vm1149 = vcmp.ge.f32.partialorder %v1081, %v176
        %vm1150 = vcmp.ge.f32.partialorder %v1082, %v176
        %vm1151 = vcmp.le.f32.partialorder %v1081, %v177
        %vm1152 = vcmp.le.f32.partialorder %v1082, %v177
        %vm1153 = vmand %vm1149, %vm1151
        %vm1154 = vmand %vm1150, %vm1152
        %vm1155 = vmand %vm1147, %vm1153
        %vm1156 = vmand %vm1148, %vm1154
        %v1157 = vrot.slane %v333, 5
        %v1158 = vrot.slane %v338, 5
        %v1161 = vsel %vm1155, %v1157, 1e+08
        %v1162 = vsel %vm1156, %v1158, 1e+08
        %vm1163 = vcmp.gt.f32.partialorder %v1075, 0.0
        %vm1164 = vcmp.gt.f32.partialorder %v1076, 0.0
        %v1165 = vrot.slane %v489, 5
        %v1166 = vrot.slane %v490, 5
        %vm1167 = vcmp.ne.s32.totalorder %v1165, 0
        %vm1168 = vcmp.ne.s32.totalorder %v1166, 0
        %vm1169 = vmand %vm1163, %vm1167
        %vm1170 = vmand %vm1164, %vm1168
        %vm1171 = vcmp.lt.f32.partialorder %v1161, %v1007
        %vm1172 = vcmp.lt.f32.partialorder %v1162, %v1008
        %v1173 = vsel %vm1171, %v1161, %v1007
        %v1174 = vsel %vm1172, %v1162, %v1008
        %v1175 = vsel %vm1171, %v1039, %v1009
        %v1176 = vsel %vm1172, %v1040, %v1010
        %v1177 = vsel %vm1171, %v1045, %v1011
        %v1178 = vsel %vm1172, %v1046, %v1012
        %v1179 = vrot.slane %v224, 5
        %v1180 = vrot.slane %v228, 5
        %v1183 = vsel %vm1171, %v1179, %v1017
        %v1184 = vsel %vm1172, %v1180, %v1018
        %v1185 = vrot.slane %v234, 5
        %v1186 = vrot.slane %v238, 5
        %v1189 = vsel %vm1171, %v1185, %v1023
        %v1190 = vsel %vm1172, %v1186, %v1024
        %v1191 = vrot.slane %v519, 5
        %v1192 = vrot.slane %v522, 5
        %v1195 = vsel %vm1171, %v1191, %v1029
        %v1196 = vsel %vm1172, %v1192, %v1030
        %vm1197 = vmor %vm1031, %vm1169
        %vm1198 = vmor %vm1032, %vm1170
        %v1199 = vrot.slane %v533, 5
        %v1200 = vrot.slane %v534, 5
        %vm1201 = vcmp.ne.s32.totalorder %v1199, 0
        %vm1202 = vcmp.ne.s32.totalorder %v1200, 0
        %vm1203 = vmor %vm1037, %vm1201
        %vm1204 = vmor %vm1038, %vm1202
        %v1205 = vrot.slane %v204, 6
        %v1206 = vrot.slane %v208, 6
        %v1209 = vsub.f32 %v174, %v1205
        %v1210 = vsub.f32 %v174, %v1206
        %v1211 = vrot.slane %v214, 6
        %v1212 = vrot.slane %v218, 6
        %v1215 = vsub.f32 %v175, %v1211
        %v1216 = vsub.f32 %v175, %v1212
        %v1217 = vrot.slane %v174, 2
        %v1219 = vsub.f32 %v224, %v1217
        %v1220 = vsub.f32 %v228, %v1217
        %v1221 = vrot.slane %v175, 2
        %v1223 = vsub.f32 %v234, %v1221
        %v1224 = vsub.f32 %v238, %v1221
        %v1227 = vrot.slane %v1219, 6
        %v1228 = vrot.slane %v1220, 6
        %v1231 = vmin.f32 %v1209, %v1227
        %v1232 = vmin.f32 %v1210, %v1228
        %v1235 = vrot.slane %v1223, 6
        %v1236 = vrot.slane %v1224, 6
        %v1239 = vmin.f32 %v1215, %v1235
        %v1240 = vmin.f32 %v1216, %v1236
        %v1241 = vmin.f32 %v1231, %v1239
        %v1242 = vmin.f32 %v1232, %v1240
        %v1243 = vmax.f32 %v1209, %v1227
        %v1244 = vmax.f32 %v1210, %v1228
        %v1245 = vmax.f32 %v1215, %v1235
        %v1246 = vmax.f32 %v1216, %v1236
        %v1247 = vmax.f32 %v1243, %v1245
        %v1248 = vmax.f32 %v1244, %v1246
        %v1249 = vrot.slane %v178, 2
        %v1251 = vsub.f32 %v267, %v1249
        %v1252 = vsub.f32 %v272, %v1249
        %v1253 = vsub.f32 %v278, %v1249
        %v1254 = vsub.f32 %v282, %v1249
        %v1255 = vadd.f32 %v267, %v1249
        %v1256 = vadd.f32 %v272, %v1249
        %v1257 = vadd.f32 %v278, %v1249
        %v1258 = vadd.f32 %v282, %v1249
        %vm1259 = vcmp.gt.f32.partialorder %v1251, %v204
        %vm1260 = vcmp.gt.f32.partialorder %v1252, %v208
        %v1261 = vsel %vm1259, %v1251, %v204
        %v1262 = vsel %vm1260, %v1252, %v208
        %vm1263 = vcmp.gt.f32.partialorder %v1253, %v214
        %vm1264 = vcmp.gt.f32.partialorder %v1254, %v218
        %v1265 = vsel %vm1263, %v1253, %v214
        %v1266 = vsel %vm1264, %v1254, %v218
        %vm1267 = vcmp.gt.f32.partialorder %v1255, %v224
        %vm1268 = vcmp.gt.f32.partialorder %v1256, %v228
        %v1269 = vsel %vm1267, %v224, %v1255
        %v1270 = vsel %vm1268, %v228, %v1256
        %vm1271 = vcmp.gt.f32.partialorder %v1257, %v234
        %vm1272 = vcmp.gt.f32.partialorder %v1258, %v238
        %v1273 = vsel %vm1271, %v234, %v1257
        %v1274 = vsel %vm1272, %v238, %v1258
        %v1277 = vrot.slane %v1261, 6
        %v1278 = vrot.slane %v1262, 6
        %v1281 = vsub.f32 %v174, %v1277
        %v1282 = vsub.f32 %v174, %v1278
        %v1283 = vsub.f32 %v1269, %v1217
        %v1284 = vsub.f32 %v1270, %v1217
        %v1287 = vrot.slane %v1283, 6
        %v1288 = vrot.slane %v1284, 6
        %v1291 = vmin.f32 %v1281, %v1287
        %v1292 = vmin.f32 %v1282, %v1288
        %v1295 = vrot.slane %v1265, 6
        %v1296 = vrot.slane %v1266, 6
        %v1299 = vsub.f32 %v175, %v1295
        %v1300 = vsub.f32 %v175, %v1296
        %v1301 = vsub.f32 %v1273, %v1221
        %v1302 = vsub.f32 %v1274, %v1221
        %v1305 = vrot.slane %v1301, 6
        %v1306 = vrot.slane %v1302, 6
        %v1309 = vmin.f32 %v1299, %v1305
        %v1310 = vmin.f32 %v1300, %v1306
        %v1311 = vmin.f32 %v1291, %v1309
        %v1312 = vmin.f32 %v1292, %v1310
        %vm1313 = vcmp.gt.f32.partialorder %v1311, 0.0
        %vm1314 = vcmp.gt.f32.partialorder %v1312, 0.0
        %vm1315 = vcmp.ge.f32.partialorder %v1247, %v176
        %vm1316 = vcmp.ge.f32.partialorder %v1248, %v176
        %vm1317 = vcmp.le.f32.partialorder %v1247, %v177
        %vm1318 = vcmp.le.f32.partialorder %v1248, %v177
        %vm1319 = vmand %vm1315, %vm1317
        %vm1320 = vmand %vm1316, %vm1318
        %vm1321 = vmand %vm1313, %vm1319
        %vm1322 = vmand %vm1314, %vm1320
        %v1323 = vrot.slane %v333, 6
        %v1324 = vrot.slane %v338, 6
        %v1327 = vsel %vm1321, %v1323, 1e+08
        %v1328 = vsel %vm1322, %v1324, 1e+08
        %vm1329 = vcmp.gt.f32.partialorder %v1241, 0.0
        %vm1330 = vcmp.gt.f32.partialorder %v1242, 0.0
        %v1331 = vrot.slane %v489, 6
        %v1332 = vrot.slane %v490, 6
        %vm1333 = vcmp.ne.s32.totalorder %v1331, 0
        %vm1334 = vcmp.ne.s32.totalorder %v1332, 0
        %vm1335 = vmand %vm1329, %vm1333
        %vm1336 = vmand %vm1330, %vm1334
        %vm1337 = vcmp.lt.f32.partialorder %v1327, %v1173
        %vm1338 = vcmp.lt.f32.partialorder %v1328, %v1174
        %v1339 = vsel %vm1337, %v1327, %v1173
        %v1340 = vsel %vm1338, %v1328, %v1174
        %v1341 = vsel %vm1337, %v1205, %v1175
        %v1342 = vsel %vm1338, %v1206, %v1176
        %v1343 = vsel %vm1337, %v1211, %v1177
        %v1344 = vsel %vm1338, %v1212, %v1178
        %v1345 = vrot.slane %v224, 6
        %v1346 = vrot.slane %v228, 6
        %v1349 = vsel %vm1337, %v1345, %v1183
        %v1350 = vsel %vm1338, %v1346, %v1184
        %v1351 = vrot.slane %v234, 6
        %v1352 = vrot.slane %v238, 6
        %v1355 = vsel %vm1337, %v1351, %v1189
        %v1356 = vsel %vm1338, %v1352, %v1190
        %v1357 = vrot.slane %v519, 6
        %v1358 = vrot.slane %v522, 6
        %v1361 = vsel %vm1337, %v1357, %v1195
        %v1362 = vsel %vm1338, %v1358, %v1196
        %vm1363 = vmor %vm1197, %vm1335
        %vm1364 = vmor %vm1198, %vm1336
        %v1365 = vrot.slane %v533, 6
        %v1366 = vrot.slane %v534, 6
        %vm1367 = vcmp.ne.s32.totalorder %v1365, 0
        %vm1368 = vcmp.ne.s32.totalorder %v1366, 0
        %vm1369 = vmor %vm1203, %vm1367
        %vm1370 = vmor %vm1204, %vm1368
        %v1371 = vrot.slane %v204, 7
        %v1372 = vrot.slane %v208, 7
        %v1375 = vsub.f32 %v174, %v1371
        %v1376 = vsub.f32 %v174, %v1372
        %v1377 = vrot.slane %v214, 7
        %v1378 = vrot.slane %v218, 7
        %v1381 = vsub.f32 %v175, %v1377
        %v1382 = vsub.f32 %v175, %v1378
        %v1383 = vrot.slane %v174, 1
        %v1385 = vsub.f32 %v224, %v1383
        %v1386 = vsub.f32 %v228, %v1383
        %v1387 = vrot.slane %v175, 1
        %v1389 = vsub.f32 %v234, %v1387
        %v1390 = vsub.f32 %v238, %v1387
        %v1393 = vrot.slane %v1385, 7
        %v1394 = vrot.slane %v1386, 7
        %v1397 = vmin.f32 %v1375, %v1393
        %v1398 = vmin.f32 %v1376, %v1394
        %v1401 = vrot.slane %v1389, 7
        %v1402 = vrot.slane %v1390, 7
        %v1405 = vmin.f32 %v1381, %v1401
        %v1406 = vmin.f32 %v1382, %v1402
        %v1407 = vmin.f32 %v1397, %v1405
        %v1408 = vmin.f32 %v1398, %v1406
        %v1409 = vmax.f32 %v1375, %v1393
        %v1410 = vmax.f32 %v1376, %v1394
        %v1411 = vmax.f32 %v1381, %v1401
        %v1412 = vmax.f32 %v1382, %v1402
        %v1413 = vmax.f32 %v1409, %v1411
        %v1414 = vmax.f32 %v1410, %v1412
        %v1415 = vrot.slane %v178, 1
        %v1417 = vsub.f32 %v267, %v1415
        %v1418 = vsub.f32 %v272, %v1415
        %v1419 = vsub.f32 %v278, %v1415
        %v1420 = vsub.f32 %v282, %v1415
        %v1421 = vadd.f32 %v267, %v1415
        %v1422 = vadd.f32 %v272, %v1415
        %v1423 = vadd.f32 %v278, %v1415
        %v1424 = vadd.f32 %v282, %v1415
        %vm1425 = vcmp.gt.f32.partialorder %v1417, %v204
        %vm1426 = vcmp.gt.f32.partialorder %v1418, %v208
        %v1427 = vsel %vm1425, %v1417, %v204
        %v1428 = vsel %vm1426, %v1418, %v208
        %vm1429 = vcmp.gt.f32.partialorder %v1419, %v214
        %vm1430 = vcmp.gt.f32.partialorder %v1420, %v218
        %v1431 = vsel %vm1429, %v1419, %v214
        %v1432 = vsel %vm1430, %v1420, %v218
        %vm1433 = vcmp.gt.f32.partialorder %v1421, %v224
        %vm1434 = vcmp.gt.f32.partialorder %v1422, %v228
        %v1435 = vsel %vm1433, %v224, %v1421
        %v1436 = vsel %vm1434, %v228, %v1422
        %vm1437 = vcmp.gt.f32.partialorder %v1423, %v234
        %vm1438 = vcmp.gt.f32.partialorder %v1424, %v238
        %v1439 = vsel %vm1437, %v234, %v1423
        %v1440 = vsel %vm1438, %v238, %v1424
        %v1443 = vrot.slane %v1427, 7
        %v1444 = vrot.slane %v1428, 7
        %v1447 = vsub.f32 %v174, %v1443
        %v1448 = vsub.f32 %v174, %v1444
        %v1449 = vsub.f32 %v1435, %v1383
        %v1450 = vsub.f32 %v1436, %v1383
        %v1453 = vrot.slane %v1449, 7
        %v1454 = vrot.slane %v1450, 7
        %v1457 = vmin.f32 %v1447, %v1453
        %v1458 = vmin.f32 %v1448, %v1454
        %v1461 = vrot.slane %v1431, 7
        %v1462 = vrot.slane %v1432, 7
        %v1465 = vsub.f32 %v175, %v1461
        %v1466 = vsub.f32 %v175, %v1462
        %v1467 = vsub.f32 %v1439, %v1387
        %v1468 = vsub.f32 %v1440, %v1387
        %v1471 = vrot.slane %v1467, 7
        %v1472 = vrot.slane %v1468, 7
        %v1475 = vmin.f32 %v1465, %v1471
        %v1476 = vmin.f32 %v1466, %v1472
        %v1477 = vmin.f32 %v1457, %v1475
        %v1478 = vmin.f32 %v1458, %v1476
        %vm1479 = vcmp.gt.f32.partialorder %v1477, 0.0
        %vm1480 = vcmp.gt.f32.partialorder %v1478, 0.0
        %vm1481 = vcmp.ge.f32.partialorder %v1413, %v176
        %vm1482 = vcmp.ge.f32.partialorder %v1414, %v176
        %vm1483 = vcmp.le.f32.partialorder %v1413, %v177
        %vm1484 = vcmp.le.f32.partialorder %v1414, %v177
        %vm1485 = vmand %vm1481, %vm1483
        %vm1486 = vmand %vm1482, %vm1484
        %vm1487 = vmand %vm1479, %vm1485
        %vm1488 = vmand %vm1480, %vm1486
        %v1489 = vrot.slane %v333, 7
        %v1490 = vrot.slane %v338, 7
        %v1493 = vsel %vm1487, %v1489, 1e+08
        %v1494 = vsel %vm1488, %v1490, 1e+08
        %vm1495 = vcmp.gt.f32.partialorder %v1407, 0.0
        %vm1496 = vcmp.gt.f32.partialorder %v1408, 0.0
        %v1497 = vrot.slane %v489, 7
        %v1498 = vrot.slane %v490, 7
        %vm1499 = vcmp.ne.s32.totalorder %v1497, 0
        %vm1500 = vcmp.ne.s32.totalorder %v1498, 0
        %vm1501 = vmand %vm1495, %vm1499
        %vm1502 = vmand %vm1496, %vm1500
        %vm1503 = vcmp.lt.f32.partialorder %v1493, %v1339
        %vm1504 = vcmp.lt.f32.partialorder %v1494, %v1340
        %v1505 = vsel %vm1503, %v1493, %v1339
        %v1506 = vsel %vm1504, %v1494, %v1340
        %v1507 = vsel %vm1503, %v1371, %v1341
        %v1508 = vsel %vm1504, %v1372, %v1342
        %v1509 = vsel %vm1503, %v1377, %v1343
        %v1510 = vsel %vm1504, %v1378, %v1344
        %v1511 = vrot.slane %v224, 7
        %v1512 = vrot.slane %v228, 7
        %v1515 = vsel %vm1503, %v1511, %v1349
        %v1516 = vsel %vm1504, %v1512, %v1350
        %v1517 = vrot.slane %v234, 7
        %v1518 = vrot.slane %v238, 7
        %v1521 = vsel %vm1503, %v1517, %v1355
        %v1522 = vsel %vm1504, %v1518, %v1356
        %v1523 = vrot.slane %v519, 7
        %v1524 = vrot.slane %v522, 7
        %v1527 = vsel %vm1503, %v1523, %v1361
        %v1528 = vsel %vm1504, %v1524, %v1362
        %vm1529 = vmor %vm1363, %vm1501
        %vm1530 = vmor %vm1364, %vm1502
        %v1531 = vrot.slane %v533, 7
        %v1532 = vrot.slane %v534, 7
        %vm1533 = vcmp.ne.s32.totalorder %v1531, 0
        %vm1534 = vcmp.ne.s32.totalorder %v1532, 0
        %vm1535 = vmor %vm1369, %vm1533
        %vm1536 = vmor %vm1370, %vm1534
        %v1537 = vsub.f32 %v174, %v1507
        %v1538 = vsub.f32 %v174, %v1508
        %v1539 = vsub.f32 %v175, %v1509
        %v1540 = vsub.f32 %v175, %v1510
        %v1541 = vsub.f32 %v1515, %v174
        %v1542 = vsub.f32 %v1516, %v174
        %v1543 = vsub.f32 %v1521, %v175
        %v1544 = vsub.f32 %v1522, %v175
        %vm1545 = vcmp.eq.f32.partialorder %v1505, 1e+08
        %vm1546 = vcmp.eq.f32.partialorder %v1506, 1e+08
        %v1547 = vsel %vm1545, 4.0, %v1527
        %v1548 = vsel %vm1546, 4.0, %v1528
        %v1549 = vsel %vm1529, 0.0, 1.0
        %v1550 = vsel %vm1530, 0.0, 1.0
        %v1551 = vsel %vm1535, 1, 0
        %v1552 = vsel %vm1536, 1, 0
        %1553 = vset.pattern.permute.xlu0 4
        %1554 = vperm.xlu0 %1553, %v1551
        %v1555 = vpop.permute.xlu0 %1554
        %1556 = vset.pattern.permute.xlu0 4
        %1557 = vperm.xlu0 %1556, %v1552
        %v1558 = vpop.permute.xlu0 %1557
        %vm1559 = vcmp.eq.s32.totalorder %v1555, 1
        %vm1560 = vcmp.eq.s32.totalorder %v1558, 1
        %v1561 = vsel %vm1559, %v1547, 4.0
        %v1562 = vsel %vm1560, %v1548, 4.0
        %v1563 = vsel %vm1559, %v1549, 0.0
        %v1564 = vsel %vm1560, %v1550, 0.0
        %v1565 = vsel %vm1559, %v1537, 0.0
        %v1566 = vsel %vm1560, %v1538, 0.0
        %v1567 = vmul.f32 %v1565, %v179
        %v1568 = vmul.f32 %v1566, %v179
        %v1569 = vsel %vm1559, %v1539, 0.0
        %v1570 = vsel %vm1560, %v1540, 0.0
        %v1571 = vmul.f32 %v1569, %v179
        %v1572 = vmul.f32 %v1570, %v179
        %v1573 = vsel %vm1559, %v1541, 0.0
        %v1574 = vsel %vm1560, %v1542, 0.0
        %v1575 = vmul.f32 %v1573, %v179
        %v1576 = vmul.f32 %v1574, %v179
        %v1577 = vsel %vm1559, %v1543, 0.0
        %v1578 = vsel %vm1560, %v1544, 0.0
        %v1579 = vmul.f32 %v1577, %v179
        %v1580 = vmul.f32 %v1578, %v179
        %1581 = vst [vmem:[%s173] sm:$0x1] %v1567
        %1582 = vst [vmem:[%s173 + $0x8] sm:$0x1] %v1568
        %1583 = vst [vmem:[%s173 + $0x1] sm:$0x1] %v1571
        %1584 = vst [vmem:[%s173 + $0x9] sm:$0x1] %v1572
        %1585 = vst [vmem:[%s173 + $0x2] sm:$0x1] %v1575
        %1586 = vst [vmem:[%s173 + $0xa] sm:$0x1] %v1576
        %1587 = vst [vmem:[%s173 + $0x3] sm:$0x1] %v1579
        %1588 = vst [vmem:[%s173 + $0xb] sm:$0x1] %v1580
        %1589 = vst [vmem:[%s173 + $0x4] sm:$0x1] %v1561
        %1590 = vst [vmem:[%s173 + $0xc] sm:$0x1] %v1562
        %1591 = vst [vmem:[%s173 + $0x5] sm:$0x1] %v1563
        %1592 = vst [vmem:[%s173 + $0xd] sm:$0x1] %v1564
        %s1593 = sand.u32 %s72, 1
        %s1594 = sand.u32 %s72, 1
        %s1595 = smul.addr %s1594, 16
        %s1596 = scalar_lea.vmem [#allocation6], %s1595
        // Predicated region
        $region37: #{tpu_custom_call.1} parent=27 // pred_check
          %p1597 = pneg %p82
        $region38: #{tpu_custom_call.1} parent=27 // pred_check_branch
          %1599 = sbr.rel (%p1597) target = $region40
        $region39: #{tpu_custom_call.1} parent=27 // pred_region
          %s1600 = smul.addr %s17, 8
          %s1601 = scalar_lea.vmem %s2, %s1600
          // Predicated region
          $region41: #{tpu_custom_call.1} parent=39 // pred_check
            _
          $region42: #{tpu_custom_call.1} parent=39 // pred_check_branch
            %1603 = sbr.rel (0) target = $region44
          $region43: #{tpu_custom_call.1} parent=39 // pred_region
            // Predicated region
            $region45: #{tpu_custom_call.1} parent=43 // pred_check
              _
            $region46: #{tpu_custom_call.1} parent=43 // pred_check_branch
              %1605 = sbr.rel (0) target = $region48
            $region47: #{tpu_custom_call.1} parent=43 // pred_region
              // Predicated region
              $region60: #{tpu_custom_call.1} parent=47 // pred_check
                _
              $region61: #{tpu_custom_call.1} parent=47 // pred_check_branch
                %1623 = sbr.rel (0) target = $region63
              $region62: #{tpu_custom_call.1} parent=47 // pred_region
                loop: start=0, step=1, limit=1
                $region64: #{tpu_custom_call.1} parent=62 // loop_pre_header
                  _
                $region65: #{tpu_custom_call.1} parent=62 // loop_header
                  %s1625 = sphi 0, %s1629
                  %p1626 = scmp.ge.s32.totalorder %s1625, 1
                  %s1630 = sphi %s1596, %s1596
                  %s1631 = sphi %s1601, %s1601
                $region66: #{tpu_custom_call.1} parent=62 // loop_header_branch
                  %1628 = sbr.rel (%p1626) target = $region70
                $region67: #{tpu_custom_call.1} parent=62 // loop_body
                  %v1632 = vld [vmem:[%s1630] sm:$0xff]
                  %1633 = vst [vmem:[%s1631] sm:$0xff] %v1632
                  %v1634 = vld [vmem:[%s1630 + $0x8] sm:$0xff]
                  %1635 = vst [vmem:[%s1631 + $0x18] sm:$0xff] %v1634
                $region68: #{tpu_custom_call.1} parent=62 // loop_footer
                  %s1629 = sadd.s32 1, %s1625
                $region69: #{tpu_custom_call.1} parent=62 // loop_footer_branch
                  %1624 = sbr.rel target = $region65
                $region70: #{tpu_custom_call.1} parent=62 // loop_exit
                  _
              $region63: #{tpu_custom_call.1} parent=47 // pred_fallthru
                _
              // Predicated region
              $region71: #{tpu_custom_call.1} parent=47 // pred_check
                _
              $region72: #{tpu_custom_call.1} parent=47 // pred_check_branch
                %1637 = sbr.rel target = $region74
              $region73: #{tpu_custom_call.1} parent=47 // pred_region
                _
              $region74: #{tpu_custom_call.1} parent=47 // pred_fallthru
                _
            $region48: #{tpu_custom_call.1} parent=43 // pred_fallthru
              _
            // Predicated region
            $region49: #{tpu_custom_call.1} parent=43 // pred_check
              _
            $region50: #{tpu_custom_call.1} parent=43 // pred_check_branch
              %1607 = sbr.rel target = $region52
            $region51: #{tpu_custom_call.1} parent=43 // pred_region
              %s1609 = ssub.s32 256, 1
              loop: start=0, step=1, limit=1
              $region53: #{tpu_custom_call.1} parent=51 // loop_pre_header
                _
              $region54: #{tpu_custom_call.1} parent=51 // loop_header
                %s1611 = sphi 0, %s1615
                %p1612 = scmp.ge.s32.totalorder %s1611, 1
                %s1616 = sphi %s1596, %s1596
                %s1617 = sphi %s1601, %s1601
              $region55: #{tpu_custom_call.1} parent=51 // loop_header_branch
                %1614 = sbr.rel (%p1612) target = $region59
              $region56: #{tpu_custom_call.1} parent=51 // loop_body
                %v1618 = vld [vmem:[%s1616] sm:%s1609]
                %1619 = vst [vmem:[%s1617] sm:%s1609] %v1618
                %v1620 = vld [vmem:[%s1616 + $0x8] sm:%s1609]
                %1621 = vst [vmem:[%s1617 + $0x18] sm:%s1609] %v1620
              $region57: #{tpu_custom_call.1} parent=51 // loop_footer
                %s1615 = sadd.s32 1, %s1611
              $region58: #{tpu_custom_call.1} parent=51 // loop_footer_branch
                %1610 = sbr.rel target = $region54
              $region59: #{tpu_custom_call.1} parent=51 // loop_exit
                _
            $region52: #{tpu_custom_call.1} parent=43 // pred_fallthru
              _
          $region44: #{tpu_custom_call.1} parent=39 // pred_fallthru
            _
          %1638 = vnop
        $region40: #{tpu_custom_call.1} parent=27 // pred_fallthru
          _
      $region28: #{tpu_custom_call.1} parent=5 // pred_fallthru
        _
      %p1639 = scmp.le.s32.totalorder 2, %s12
      // Predicated region
      $region75: #{tpu_custom_call.1} parent=5 // pred_check
        %p1640 = pneg %p1639
      $region76: #{tpu_custom_call.1} parent=5 // pred_check_branch
        %1642 = sbr.rel (%p1640) target = $region78
      $region77: #{tpu_custom_call.1} parent=5 // pred_region
        %s1643 = ssub.s32 %s12, 2
        // Predicated region
        $region79: #{tpu_custom_call.1} parent=77 // pred_check
          %p1644 = pneg %p88
        $region80: #{tpu_custom_call.1} parent=77 // pred_check_branch
          %1646 = sbr.rel (%p1644) target = $region82
        $region81: #{tpu_custom_call.1} parent=77 // pred_region
          %s1647 = sand.u32 %s73, 1
          %s1648 = sand.u32 %s73, 1
          %s1649 = smul.addr %s1648, 16
          %s1650 = scalar_lea.vmem [#allocation6], %s1649
        $region82: #{tpu_custom_call.1} parent=77 // pred_fallthru
          _
      $region78: #{tpu_custom_call.1} parent=5 // pred_fallthru
        _
    $region6: #{tpu_custom_call.1} parent=1 // loop_footer
      %s16 = sadd.s32 1, %s12
    $region7: #{tpu_custom_call.1} parent=1 // loop_footer_branch
      %11 = sbr.rel target = $region3
    $region8: #{tpu_custom_call.1} parent=1 // loop_exit
      _
    %1651 = vsyncpa [#allocation3], 1
    %s1652 = scalar_lea.sflag [#allocation3], 1
    %1653 = vsyncpa %s1652, 1
    %1654 = vsyncpa [#allocation5], 1

</llo_original>
